<compile_context>
chip_gen: v7x
topology: tpu7x:2x2x1
jax: 0.10.0
libtpu: 0.0.40
codegen_flags: <defaults>
</compile_context>

<pallas_src>
import functools

import jax
import jax.numpy as jnp
from jax import lax
from jax.experimental import pallas as pl
from jax.experimental.pallas import tpu as pltpu

_LN_EPS = 1e-5      # nn.LayerNorm default
_GN_EPS = 1e-5      # nn.GroupNorm default
_NORM_EPS = 1e-7    # Wav2Vec2FeatureExtractor zero-mean-unit-var eps
_NEG_INF = -1e30    # cross-batch attention mask value


def _gelu(x):
    # TODO(synk): PyTorch nn.GELU uses the exact erf formulation; the tanh
    # approximation is used here for Mosaic-safe lowering.
    return jax.nn.gelu(x, approximate=True)


def _layernorm(x, g, b, eps=_LN_EPS):
    mean = jnp.mean(x, axis=-1, keepdims=True)
    var = jnp.mean((x - mean) ** 2, axis=-1, keepdims=True)
    return (x - mean) * lax.rsqrt(var + eps) * g + b


def _mm(a, b):
    # bf16 MXU operands, f32 accumulation (2x MXU throughput on v6e/v7x).
    return jnp.dot(a.astype(jnp.bfloat16), b.astype(jnp.bfloat16),
                   preferred_element_type=jnp.float32)


# ---------------- Kernel A: normalize + conv0 + GroupNorm + GELU ----------------
def _conv0_kernel(x_ref, slab_ref, w_ref, gn_g_ref, gn_b_ref, o_ref, *, batch):
    x = x_ref[...].astype(jnp.float32)          # (B, S) raw waveform (for stats)
    gn_g = gn_g_ref[...]
    gn_b = gn_b_ref[...]
    for b in range(batch):                      # static B loop (norm / GN are per-sample)
        xb = x[b:b + 1, :]
        mean = jnp.mean(xb, axis=-1, keepdims=True)
        var = jnp.mean((xb - mean) ** 2, axis=-1, keepdims=True)
        rstd = lax.rsqrt(var + _NORM_EPS)
        # per-utterance normalisation is elementwise affine -> commutes with im2col
        col = (slab_ref[b].astype(jnp.float32) - mean) * rstd      # (t1, K0)
        y = _mm(col, w_ref[...])                                   # (t1, C0), conv_bias=False
        # GroupNorm(num_groups=C, num_channels=C): per-channel stats over time
        cm = jnp.mean(y, axis=0, keepdims=True)
        cv = jnp.mean((y - cm) ** 2, axis=0, keepdims=True)
        y = (y - cm) * lax.rsqrt(cv + _GN_EPS) * gn_g + gn_b
        o_ref[b] = _gelu(y).astype(o_ref.dtype)


def front_conv0(raw, slab, w, gn_g, gn_b):
    b, t1, _ = slab.shape
    c0 = w.shape[1]
    kernel = functools.partial(_conv0_kernel, batch=b)
    return pl.pallas_call(
        kernel,
        out_shape=jax.ShapeDtypeStruct((b, t1, c0), raw.dtype),
    )(raw, slab, w, gn_g, gn_b)


# ---------------- Kernel B: conv1 + GELU + FP LayerNorm + FP Linear --------------
def _conv1_fp_kernel(slab_ref, w_ref, ln_g_ref, ln_b_ref, fpw_ref, fpb_ref, o_ref):
    y = _gelu(_mm(slab_ref[...], w_ref[...]))                 # conv (no bias) + GELU
    y = _layernorm(y, ln_g_ref[...], ln_b_ref[...])           # feature-projection LN
    z = _mm(y, fpw_ref[...]) + fpb_ref[...]                   # projection linear
    o_ref[...] = z.astype(o_ref.dtype)


def conv1_fp(slab, w, ln_g, ln_b, fp_w, fp_b):
    n = slab.shape[0]
    d = fp_w.shape[1]
    return pl.pallas_call(
        _conv1_fp_kernel,
        out_shape=jax.ShapeDtypeStruct((n, d), slab.dtype),
    )(slab, w, ln_g, ln_b, fp_w, fp_b)


# -------- Kernel C: grouped positional conv + GELU + residual + encoder LN -------
def _pos_conv_kernel(h_ref, slab_ref, wg_ref, b_ref, ln_g_ref, ln_b_ref, o_ref, *,
                     groups):
    h = h_ref[...].astype(jnp.float32)                        # (B*T, D)
    parts = [_mm(slab_ref[gi], wg_ref[gi]) for gi in range(groups)]
    pos = jnp.concatenate(parts, axis=-1) + b_ref[...]        # grouped conv + bias
    pos = _gelu(pos)
    o_ref[...] = _layernorm(h + pos, ln_g_ref[...], ln_b_ref[...]).astype(o_ref.dtype)


def pos_conv_ln(h, slabs, wg, pos_b, ln_g, ln_b):
    kernel = functools.partial(_pos_conv_kernel, groups=slabs.shape[0])
    return pl.pallas_call(
        kernel,
        out_shape=jax.ShapeDtypeStruct(h.shape, h.dtype),
    )(h, slabs, wg, pos_b, ln_g, ln_b)


# -------- Kernel D: full transformer encoder + get_output_rep (grid over layers) --
def _encoder_kernel(h0_ref, bias_ref,
                    wq_ref, bq_ref, wk_ref, bk_ref, wv_ref, bv_ref, wo_ref, bo_ref,
                    ln1g_ref, ln1b_ref, w1_ref, b1_ref, w2_ref, b2_ref,
                    ln2g_ref, ln2b_ref,
                    o_ref, h_st, sum_st, *, num_heads, num_layers):
    layer = pl.program_id(0)

    @pl.when(layer == 0)
    def _():
        h0 = h0_ref[...].astype(jnp.float32)
        h_st[...] = h0
        sum_st[...] = h0                      # hidden_states[0] (post encoder LN)

    x = h_st[...]                             # (B*T, D) carried state
    d = x.shape[-1]
    hd = d // num_heads
    scale = float(hd) ** -0.5
    bias = bias_ref[...]                      # (B*T, B*T) batch-block mask

    # --- multi-head self-attention (heads = static lane slices) ---
    q = (_mm(x, wq_ref[0]) + bq_ref[0]) * scale
    k = _mm(x, wk_ref[0]) + bk_ref[0]
    v = _mm(x, wv_ref[0]) + bv_ref[0]
    ctx_parts = []
    for h in range(num_heads):
        sl = slice(h * hd, (h + 1) * hd)
        s = lax.dot_general(q[:, sl].astype(jnp.bfloat16),
                            k[:, sl].astype(jnp.bfloat16),
                            (((1,), (1,)), ((), ())),
                            preferred_element_type=jnp.float32) + bias
        s = s - jnp.max(s, axis=-1, keepdims=True)             # f32 softmax
        p = jnp.exp(s)
        p = p * pl.reciprocal(jnp.sum(p, axis=-1, keepdims=True), approx=True)
        ctx_parts.append(_mm(p, v[:, sl]))
    ctx = jnp.concatenate(ctx_parts, axis=-1)                  # (B*T, D)
    attn = _mm(ctx, wo_ref[0]) + bo_ref[0]

    h1 = _layernorm(x + attn, ln1g_ref[0], ln1b_ref[0])        # post-attn LN (+res)
    ff = _gelu(_mm(h1, w1_ref[0]) + b1_ref[0])                 # FF intermediate
    h2 = _layernorm(h1 + _mm(ff, w2_ref[0]) + b2_ref[0],       # FF out + residual
                    ln2g_ref[0], ln2b_ref[0])

    h_st[...] = h2
    sum_st[...] = sum_st[...] + h2

    # get_output_rep: (1/nb_layers) * sum(hidden_states), nb_layers = L + 1.
    # Only materialise on the final layer (output block is grid-resident).
    @pl.when(layer == num_layers - 1)
    def _():
        o_ref[...] = (sum_st[...] * (1.0 / (num_layers + 1))).astype(o_ref.dtype)


def encoder_forward(h0, attn_bias, params, *, num_heads, num_layers):
    bt, d = h0.shape
    f = params['w1'].shape[-1]

    def wspec(*shape):              # per-layer weight block (leading layer axis)
        nd = len(shape)
        return pl.BlockSpec((1,) + shape, lambda l, nd=nd: (l,) + (0,) * nd)

    def fixed(*shape):              # constant block (fetched once, stays resident)
        nd = len(shape)
        return pl.BlockSpec(shape, lambda l, nd=nd: (0,) * nd)

    in_specs = [
        fixed(bt, d),               # h0
        fixed(bt, bt),              # attention batch-mask bias
        wspec(d, d), wspec(1, d),   # wq, bq
        wspec(d, d), wspec(1, d),   # wk, bk
        wspec(d, d), wspec(1, d),   # wv, bv
        wspec(d, d), wspec(1, d),   # wo, bo
        wspec(1, d), wspec(1, d),   # ln1 g, b
        wspec(d, f), wspec(1, f),   # w1, b1
        wspec(f, d), wspec(1, d),   # w2, b2
        wspec(1, d), wspec(1, d),   # ln2 g, b
    ]
    kernel = functools.partial(_encoder_kernel, num_heads=num_heads,
                               num_layers=num_layers)
    return pl.pallas_call(
        kernel,
        grid=(num_layers,),
        in_specs=in_specs,
        out_specs=pl.BlockSpec((bt, d), lambda l: (0, 0)),
        out_shape=jax.ShapeDtypeStruct((bt, d), h0.dtype),
        scratch_shapes=[pltpu.VMEM((bt, d), jnp.float32),   # carried hidden state
                        pltpu.VMEM((bt, d), jnp.float32)],  # running hidden-state sum
        compiler_params=pltpu.CompilerParams(dimension_semantics=("arbitrary",)),
    )(h0, attn_bias,
      params['wq'], params['bq'], params['wk'], params['bk'],
      params['wv'], params['bv'], params['wo'], params['bo'],
      params['ln1_g'], params['ln1_b'], params['w1'], params['b1'],
      params['w2'], params['b2'], params['ln2_g'], params['ln2_b'])


# ------------------------- small synthetic Wav2Vec2 config / params -------------
CFG = dict(
    batch=2,
    samples=320,
    conv_dim=(32, 32),
    conv_kernel=(10, 3),
    conv_stride=(5, 2),
    hidden=32,
    heads=4,
    intermediate=64,
    layers=2,
    pos_conv_kernel=4,
    pos_conv_groups=2,
)


def init_params(key, cfg):
    keys = iter(jax.random.split(key, 64))

    def nrm(shape, scale=0.05):
        return scale * jax.random.normal(next(keys), shape, jnp.float32)

    d = cfg['hidden']
    f = cfg['intermediate']
    nl = cfg['layers']
    c0, c1 = cfg['conv_dim']
    k0, k1 = cfg['conv_kernel']
    kp, g = cfg['pos_conv_kernel'], cfg['pos_conv_groups']
    dg = d // g

    p = {}
    # feature encoder (conv_bias=False; GroupNorm only on layer 0), im2col layout
    p['conv0_w'] = nrm((k0 * 1, c0), scale=0.2)        # c_in = 1
    p['gn_g'] = jnp.ones((1, c0), jnp.float32)
    p['gn_b'] = jnp.zeros((1, c0), jnp.float32)
    p['conv1_w'] = nrm((k1 * c0, c1), scale=0.2)
    # feature projection
    p['fp_ln_g'] = jnp.ones((1, c1), jnp.float32)
    p['fp_ln_b'] = jnp.zeros((1, c1), jnp.float32)
    p['fp_w'] = nrm((c1, d))
    p['fp_b'] = nrm((1, d))
    # positional conv embedding: grouped weights kept grouped (no dense expansion)
    p['pos_w'] = nrm((g, kp * dg, dg), scale=0.1)
    p['pos_b'] = nrm((1, d))
    p['enc_ln_g'] = jnp.ones((1, d), jnp.float32)
    p['enc_ln_b'] = jnp.zeros((1, d), jnp.float32)

    # transformer layers, stacked along a leading layer axis
    def stk(shape, scale=0.05):
        return jnp.stack([nrm(shape, scale) for _ in range(nl)], axis=0)

    p['wq'], p['bq'] = stk((d, d)), stk((1, d))
    p['wk'], p['bk'] = stk((d, d)), stk((1, d))
    p['wv'], p['bv'] = stk((d, d)), stk((1, d))
    p['wo'], p['bo'] = stk((d, d)), stk((1, d))
    p['ln1_g'] = jnp.ones((nl, 1, d), jnp.float32)
    p['ln1_b'] = jnp.zeros((nl, 1, d), jnp.float32)
    p['w1'], p['b1'] = stk((d, f)), stk((1, f))
    p['w2'], p['b2'] = stk((f, d)), stk((1, d))
    p['ln2_g'] = jnp.ones((nl, 1, d), jnp.float32)
    p['ln2_b'] = jnp.zeros((nl, 1, d), jnp.float32)
    return p


# ------------------------- full forward (CustomWav2Vec2Model.forward) -----------
def custom_wav2vec2_forward(params, raw, *, cfg):
    B, S = raw.shape
    k0, k1 = cfg['conv_kernel']       # static Python ints (never traced)
    s0, s1 = cfg['conv_stride']
    c0, c1 = cfg['conv_dim']
    d = cfg['hidden']
    t1 = (S - k0) // s0 + 1
    t2 = (t1 - k1) // s1 + 1

    # im2col for conv layer 0 (c_in=1): (B, t1, K0), taps on the lane axis
    slab0 = jnp.stack(
        [lax.slice(raw, (0, k), (B, k + s0 * (t1 - 1) + 1), (1, s0))
         for k in range(k0)], axis=-1)
    # Kernel A: processor normalisation fused with conv0 + GroupNorm + GELU
    h1 = front_conv0(raw, slab0, params['conv0_w'], params['gn_g'], params['gn_b'])

    # im2col for conv layer 1: (B*t2, K1*C0)
    slab1 = jnp.concatenate(
        [lax.slice(h1, (0, k, 0), (B, k + s1 * (t2 - 1) + 1, c0), (1, s1, 1))
         for k in range(k1)], axis=-1).reshape(B * t2, k1 * c0)
    # Kernel B: conv1 + GELU + feature-projection LayerNorm + Linear
    h = conv1_fp(slab1, params['conv1_w'], params['fp_ln_g'], params['fp_ln_b'],
                 params['fp_w'], params['fp_b'])                    # (B*t2, D)
    # TODO(synk): SpecAugment time-masking / dropout are training-only stochastic
    # ops; inference semantics are implemented here.

    # grouped positional-conv im2col (only the t2 frames kept by SamePadLayer)
    kp, g = cfg['pos_conv_kernel'], cfg['pos_conv_groups']
    dg = d // g
    pad = kp // 2
    hp = jnp.pad(h.reshape(B, t2, d), ((0, 0), (pad, pad), (0, 0)))
    slabs = []
    for gi in range(g):
        hg = lax.slice(hp, (0, 0, gi * dg), (B, t2 + 2 * pad, (gi + 1) * dg))
        cols = jnp.concatenate(
            [lax.slice(hg, (0, k, 0), (B, k + t2, dg)) for k in range(kp)], axis=-1)
        slabs.append(cols.reshape(B * t2, kp * dg))
    slabs = jnp.stack(slabs, axis=0)                                # (g, B*t2, kp*dg)
    # Kernel C: grouped pos-conv + GELU + residual + encoder LayerNorm
    h0 = pos_conv_ln(h, slabs, params['pos_w'], params['pos_b'],
                     params['enc_ln_g'], params['enc_ln_b'])        # (B*t2, D)

    # batch-block attention bias: batch is folded into sublanes, so mask
    # cross-batch score entries before softmax.
    row = jnp.arange(B * t2) // t2
    attn_bias = jnp.where(row[:, None] == row[None, :], 0.0, _NEG_INF
                          ).astype(jnp.float32)

    # Kernel D: all transformer layers + hidden-state averaging (get_output_rep)
    out = encoder_forward(h0, attn_bias, params,
                          num_heads=cfg['heads'], num_layers=cfg['layers'])
    return out.reshape(B, t2, d)


if __name__ == "__main__":
    cfg = CFG
    key = jax.random.PRNGKey(0)
    pkey, xkey = jax.random.split(key)
    params = init_params(pkey, cfg)
    raw = jax.random.normal(xkey, (cfg['batch'], cfg['samples']), jnp.float32)

    fwd = jax.jit(functools.partial(custom_wav2vec2_forward, cfg=cfg))
    out = fwd(params, raw)
    jax.block_until_ready(out)

    # expected frame count from the conv stack
    t = cfg['samples']
    for k, s in zip(cfg['conv_kernel'], cfg['conv_stride']):
        t = (t - k) // s + 1
    assert out.shape == (cfg['batch'], t, cfg['hidden']), out.shape
    assert bool(jnp.all(jnp.isfinite(out)))
    print("KERNEL_OK")
</pallas_src>

<mosaic_0001>
module attributes {stable_mosaic.version = 11 : i64} {
  func.func @_conv0_kernel(%arg0: memref<2x320xf32, #tpu.memory_space<vmem>>, %arg1: memref<2x63x10xf32, #tpu.memory_space<vmem>>, %arg2: memref<10x32xf32, #tpu.memory_space<vmem>>, %arg3: memref<1x32xf32, #tpu.memory_space<vmem>>, %arg4: memref<1x32xf32, #tpu.memory_space<vmem>>, %arg5: memref<2x63x32xf32, #tpu.memory_space<vmem>>) attributes {dimension_semantics = [], scalar_prefetch = 0 : i64, scratch_operands = 0 : i64, tpu.core_type = #tpu.core_type<tc>} {
    %c0 = arith.constant 0 : index
    %c0_0 = arith.constant 0 : index
    %0 = vector.load %arg0[%c0, %c0_0] : memref<2x320xf32, #tpu.memory_space<vmem>>, vector<2x320xf32>
    %c0_1 = arith.constant 0 : index
    %c0_2 = arith.constant 0 : index
    %1 = vector.load %arg3[%c0_1, %c0_2] : memref<1x32xf32, #tpu.memory_space<vmem>>, vector<1x32xf32>
    %c0_3 = arith.constant 0 : index
    %c0_4 = arith.constant 0 : index
    %2 = vector.load %arg4[%c0_3, %c0_4] : memref<1x32xf32, #tpu.memory_space<vmem>>, vector<1x32xf32>
    %3 = vector.extract_strided_slice %0 {offsets = [0, 0], sizes = [1, 320], strides = [1, 1]} : vector<2x320xf32> to vector<1x320xf32>
    %cst = arith.constant dense<0.000000e+00> : vector<1xf32>
    %4 = vector.multi_reduction <add>, %3, %cst [1] : vector<1x320xf32> to vector<1xf32>
    %5 = vector.shape_cast %4 : vector<1xf32> to vector<1x1xf32>
    %cst_5 = arith.constant 3.200000e+02 : f32
    %6 = vector.broadcast %cst_5 : f32 to vector<1x1xf32>
    %7 = arith.divf %5, %6 : vector<1x1xf32>
    %8 = vector.broadcast %7 : vector<1x1xf32> to vector<1x320xf32>
    %9 = arith.subf %3, %8 : vector<1x320xf32>
    %10 = arith.mulf %9, %9 : vector<1x320xf32>
    %cst_6 = arith.constant dense<0.000000e+00> : vector<1xf32>
    %11 = vector.multi_reduction <add>, %10, %cst_6 [1] : vector<1x320xf32> to vector<1xf32>
    %12 = vector.shape_cast %11 : vector<1xf32> to vector<1x1xf32>
    %cst_7 = arith.constant 3.200000e+02 : f32
    %13 = vector.broadcast %cst_7 : f32 to vector<1x1xf32>
    %14 = arith.divf %12, %13 : vector<1x1xf32>
    %cst_8 = arith.constant 1.000000e-07 : f32
    %15 = vector.broadcast %cst_8 : f32 to vector<1x1xf32>
    %16 = arith.addf %14, %15 : vector<1x1xf32>
    %17 = math.rsqrt %16 : vector<1x1xf32>
    %c0_9 = arith.constant 0 : index
    %c0_10 = arith.constant 0 : index
    %c0_11 = arith.constant 0 : index
    %18 = vector.load %arg1[%c0_9, %c0_10, %c0_11] : memref<2x63x10xf32, #tpu.memory_space<vmem>>, vector<1x63x10xf32>
    %19 = vector.shape_cast %18 : vector<1x63x10xf32> to vector<63x10xf32>
    %20 = vector.broadcast %7 : vector<1x1xf32> to vector<63x10xf32>
    %21 = arith.subf %19, %20 : vector<63x10xf32>
    %22 = vector.broadcast %17 : vector<1x1xf32> to vector<63x10xf32>
    %23 = arith.mulf %21, %22 : vector<63x10xf32>
    %c0_12 = arith.constant 0 : index
    %c0_13 = arith.constant 0 : index
    %24 = vector.load %arg2[%c0_12, %c0_13] : memref<10x32xf32, #tpu.memory_space<vmem>>, vector<10x32xf32>
    %25 = arith.truncf %23 : vector<63x10xf32> to vector<63x10xbf16>
    %26 = arith.truncf %24 : vector<10x32xf32> to vector<10x32xbf16>
    %cst_14 = arith.constant dense<0.000000e+00> : vector<63x32xf32>
    %27 = tpu.matmul %25, %26, %cst_14 {dimension_numbers = #tpu.dot_dimension_numbers<[1], [0], [0], [1], [0, 0, 1, 1], [], []>} : vector<63x10xbf16>, vector<10x32xbf16>, vector<63x32xf32> -> vector<63x32xf32>
    %cst_15 = arith.constant dense<0.000000e+00> : vector<32xf32>
    %28 = vector.multi_reduction <add>, %27, %cst_15 [0] : vector<63x32xf32> to vector<32xf32>
    %29 = vector.shape_cast %28 : vector<32xf32> to vector<1x32xf32>
    %cst_16 = arith.constant 6.300000e+01 : f32
    %30 = vector.broadcast %cst_16 : f32 to vector<1x32xf32>
    %31 = arith.divf %29, %30 : vector<1x32xf32>
    %32 = vector.broadcast %31 : vector<1x32xf32> to vector<63x32xf32>
    %33 = arith.subf %27, %32 : vector<63x32xf32>
    %34 = arith.mulf %33, %33 : vector<63x32xf32>
    %cst_17 = arith.constant dense<0.000000e+00> : vector<32xf32>
    %35 = vector.multi_reduction <add>, %34, %cst_17 [0] : vector<63x32xf32> to vector<32xf32>
    %36 = vector.shape_cast %35 : vector<32xf32> to vector<1x32xf32>
    %cst_18 = arith.constant 6.300000e+01 : f32
    %37 = vector.broadcast %cst_18 : f32 to vector<1x32xf32>
    %38 = arith.divf %36, %37 : vector<1x32xf32>
    %39 = vector.broadcast %31 : vector<1x32xf32> to vector<63x32xf32>
    %40 = arith.subf %27, %39 : vector<63x32xf32>
    %cst_19 = arith.constant 9.99999974E-6 : f32
    %41 = vector.broadcast %cst_19 : f32 to vector<1x32xf32>
    %42 = arith.addf %38, %41 : vector<1x32xf32>
    %43 = math.rsqrt %42 : vector<1x32xf32>
    %44 = vector.broadcast %43 : vector<1x32xf32> to vector<63x32xf32>
    %45 = arith.mulf %40, %44 : vector<63x32xf32>
    %46 = vector.broadcast %1 : vector<1x32xf32> to vector<63x32xf32>
    %47 = arith.mulf %45, %46 : vector<63x32xf32>
    %48 = vector.broadcast %2 : vector<1x32xf32> to vector<63x32xf32>
    %49 = arith.addf %47, %48 : vector<63x32xf32>
    %50 = arith.mulf %49, %49 : vector<63x32xf32>
    %51 = arith.mulf %49, %50 : vector<63x32xf32>
    %cst_20 = arith.constant 4.471500e-02 : f32
    %52 = vector.broadcast %cst_20 : f32 to vector<63x32xf32>
    %53 = arith.mulf %52, %51 : vector<63x32xf32>
    %54 = arith.addf %49, %53 : vector<63x32xf32>
    %cst_21 = arith.constant 0.797884583 : f32
    %55 = vector.broadcast %cst_21 : f32 to vector<63x32xf32>
    %56 = arith.mulf %55, %54 : vector<63x32xf32>
    %57 = math.tanh %56 : vector<63x32xf32>
    %cst_22 = arith.constant 1.000000e+00 : f32
    %58 = vector.broadcast %cst_22 : f32 to vector<63x32xf32>
    %59 = arith.addf %58, %57 : vector<63x32xf32>
    %cst_23 = arith.constant 5.000000e-01 : f32
    %60 = vector.broadcast %cst_23 : f32 to vector<63x32xf32>
    %61 = arith.mulf %60, %59 : vector<63x32xf32>
    %62 = arith.mulf %49, %61 : vector<63x32xf32>
    %c0_24 = arith.constant 0 : index
    %c0_25 = arith.constant 0 : index
    %c0_26 = arith.constant 0 : index
    %63 = vector.load %arg5[%c0_24, %c0_25, %c0_26] : memref<2x63x32xf32, #tpu.memory_space<vmem>>, vector<1x63x32xf32>
    %64 = vector.shape_cast %63 : vector<1x63x32xf32> to vector<63x32xf32>
    %65 = vector.shape_cast %62 : vector<63x32xf32> to vector<1x63x32xf32>
    tpu.vector_store %arg5[%c0_24, %c0_25, %c0_26], %65 {strides = array<i32>} : memref<2x63x32xf32, #tpu.memory_space<vmem>>, vector<1x63x32xf32>,
    %66 = vector.extract_strided_slice %0 {offsets = [1, 0], sizes = [1, 320], strides = [1, 1]} : vector<2x320xf32> to vector<1x320xf32>
    %cst_27 = arith.constant dense<0.000000e+00> : vector<1xf32>
    %67 = vector.multi_reduction <add>, %66, %cst_27 [1] : vector<1x320xf32> to vector<1xf32>
    %68 = vector.shape_cast %67 : vector<1xf32> to vector<1x1xf32>
    %cst_28 = arith.constant 3.200000e+02 : f32
    %69 = vector.broadcast %cst_28 : f32 to vector<1x1xf32>
    %70 = arith.divf %68, %69 : vector<1x1xf32>
    %71 = vector.broadcast %70 : vector<1x1xf32> to vector<1x320xf32>
    %72 = arith.subf %66, %71 : vector<1x320xf32>
    %73 = arith.mulf %72, %72 : vector<1x320xf32>
    %cst_29 = arith.constant dense<0.000000e+00> : vector<1xf32>
    %74 = vector.multi_reduction <add>, %73, %cst_29 [1] : vector<1x320xf32> to vector<1xf32>
    %75 = vector.shape_cast %74 : vector<1xf32> to vector<1x1xf32>
    %cst_30 = arith.constant 3.200000e+02 : f32
    %76 = vector.broadcast %cst_30 : f32 to vector<1x1xf32>
    %77 = arith.divf %75, %76 : vector<1x1xf32>
    %cst_31 = arith.constant 1.000000e-07 : f32
    %78 = vector.broadcast %cst_31 : f32 to vector<1x1xf32>
    %79 = arith.addf %77, %78 : vector<1x1xf32>
    %80 = math.rsqrt %79 : vector<1x1xf32>
    %c1 = arith.constant 1 : index
    %c0_32 = arith.constant 0 : index
    %c0_33 = arith.constant 0 : index
    %81 = vector.load %arg1[%c1, %c0_32, %c0_33] : memref<2x63x10xf32, #tpu.memory_space<vmem>>, vector<1x63x10xf32>
    %82 = vector.shape_cast %81 : vector<1x63x10xf32> to vector<63x10xf32>
    %83 = vector.broadcast %70 : vector<1x1xf32> to vector<63x10xf32>
    %84 = arith.subf %82, %83 : vector<63x10xf32>
    %85 = vector.broadcast %80 : vector<1x1xf32> to vector<63x10xf32>
    %86 = arith.mulf %84, %85 : vector<63x10xf32>
    %c0_34 = arith.constant 0 : index
    %c0_35 = arith.constant 0 : index
    %87 = vector.load %arg2[%c0_34, %c0_35] : memref<10x32xf32, #tpu.memory_space<vmem>>, vector<10x32xf32>
    %88 = arith.truncf %86 : vector<63x10xf32> to vector<63x10xbf16>
    %89 = arith.truncf %87 : vector<10x32xf32> to vector<10x32xbf16>
    %cst_36 = arith.constant dense<0.000000e+00> : vector<63x32xf32>
    %90 = tpu.matmul %88, %89, %cst_36 {dimension_numbers = #tpu.dot_dimension_numbers<[1], [0], [0], [1], [0, 0, 1, 1], [], []>} : vector<63x10xbf16>, vector<10x32xbf16>, vector<63x32xf32> -> vector<63x32xf32>
    %cst_37 = arith.constant dense<0.000000e+00> : vector<32xf32>
    %91 = vector.multi_reduction <add>, %90, %cst_37 [0] : vector<63x32xf32> to vector<32xf32>
    %92 = vector.shape_cast %91 : vector<32xf32> to vector<1x32xf32>
    %cst_38 = arith.constant 6.300000e+01 : f32
    %93 = vector.broadcast %cst_38 : f32 to vector<1x32xf32>
    %94 = arith.divf %92, %93 : vector<1x32xf32>
    %95 = vector.broadcast %94 : vector<1x32xf32> to vector<63x32xf32>
    %96 = arith.subf %90, %95 : vector<63x32xf32>
    %97 = arith.mulf %96, %96 : vector<63x32xf32>
    %cst_39 = arith.constant dense<0.000000e+00> : vector<32xf32>
    %98 = vector.multi_reduction <add>, %97, %cst_39 [0] : vector<63x32xf32> to vector<32xf32>
    %99 = vector.shape_cast %98 : vector<32xf32> to vector<1x32xf32>
    %cst_40 = arith.constant 6.300000e+01 : f32
    %100 = vector.broadcast %cst_40 : f32 to vector<1x32xf32>
    %101 = arith.divf %99, %100 : vector<1x32xf32>
    %102 = vector.broadcast %94 : vector<1x32xf32> to vector<63x32xf32>
    %103 = arith.subf %90, %102 : vector<63x32xf32>
    %cst_41 = arith.constant 9.99999974E-6 : f32
    %104 = vector.broadcast %cst_41 : f32 to vector<1x32xf32>
    %105 = arith.addf %101, %104 : vector<1x32xf32>
    %106 = math.rsqrt %105 : vector<1x32xf32>
    %107 = vector.broadcast %106 : vector<1x32xf32> to vector<63x32xf32>
    %108 = arith.mulf %103, %107 : vector<63x32xf32>
    %109 = vector.broadcast %1 : vector<1x32xf32> to vector<63x32xf32>
    %110 = arith.mulf %108, %109 : vector<63x32xf32>
    %111 = vector.broadcast %2 : vector<1x32xf32> to vector<63x32xf32>
    %112 = arith.addf %110, %111 : vector<63x32xf32>
    %113 = arith.mulf %112, %112 : vector<63x32xf32>
    %114 = arith.mulf %112, %113 : vector<63x32xf32>
    %cst_42 = arith.constant 4.471500e-02 : f32
    %115 = vector.broadcast %cst_42 : f32 to vector<63x32xf32>
    %116 = arith.mulf %115, %114 : vector<63x32xf32>
    %117 = arith.addf %112, %116 : vector<63x32xf32>
    %cst_43 = arith.constant 0.797884583 : f32
    %118 = vector.broadcast %cst_43 : f32 to vector<63x32xf32>
    %119 = arith.mulf %118, %117 : vector<63x32xf32>
    %120 = math.tanh %119 : vector<63x32xf32>
    %cst_44 = arith.constant 1.000000e+00 : f32
    %121 = vector.broadcast %cst_44 : f32 to vector<63x32xf32>
    %122 = arith.addf %121, %120 : vector<63x32xf32>
    %cst_45 = arith.constant 5.000000e-01 : f32
    %123 = vector.broadcast %cst_45 : f32 to vector<63x32xf32>
    %124 = arith.mulf %123, %122 : vector<63x32xf32>
    %125 = arith.mulf %112, %124 : vector<63x32xf32>
    %c1_46 = arith.constant 1 : index
    %c0_47 = arith.constant 0 : index
    %c0_48 = arith.constant 0 : index
    %126 = vector.load %arg5[%c1_46, %c0_47, %c0_48] : memref<2x63x32xf32, #tpu.memory_space<vmem>>, vector<1x63x32xf32>
    %127 = vector.shape_cast %126 : vector<1x63x32xf32> to vector<63x32xf32>
    %128 = vector.shape_cast %125 : vector<63x32xf32> to vector<1x63x32xf32>
    tpu.vector_store %arg5[%c1_46, %c0_47, %c0_48], %128 {strides = array<i32>} : memref<2x63x32xf32, #tpu.memory_space<vmem>>, vector<1x63x32xf32>,
    return
  }
}

module attributes {stable_mosaic.version = 11 : i64} {
  func.func @_conv1_fp_kernel(%arg0: memref<62x96xf32, #tpu.memory_space<vmem>>, %arg1: memref<96x32xf32, #tpu.memory_space<vmem>>, %arg2: memref<1x32xf32, #tpu.memory_space<vmem>>, %arg3: memref<1x32xf32, #tpu.memory_space<vmem>>, %arg4: memref<32x32xf32, #tpu.memory_space<vmem>>, %arg5: memref<1x32xf32, #tpu.memory_space<vmem>>, %arg6: memref<62x32xf32, #tpu.memory_space<vmem>>) attributes {dimension_semantics = [], scalar_prefetch = 0 : i64, scratch_operands = 0 : i64, tpu.core_type = #tpu.core_type<tc>} {
    %c0 = arith.constant 0 : index
    %c0_0 = arith.constant 0 : index
    %0 = vector.load %arg0[%c0, %c0_0] : memref<62x96xf32, #tpu.memory_space<vmem>>, vector<62x96xf32>
    %c0_1 = arith.constant 0 : index
    %c0_2 = arith.constant 0 : index
    %1 = vector.load %arg1[%c0_1, %c0_2] : memref<96x32xf32, #tpu.memory_space<vmem>>, vector<96x32xf32>
    %2 = arith.truncf %0 : vector<62x96xf32> to vector<62x96xbf16>
    %3 = arith.truncf %1 : vector<96x32xf32> to vector<96x32xbf16>
    %cst = arith.constant dense<0.000000e+00> : vector<62x32xf32>
    %4 = tpu.matmul %2, %3, %cst {dimension_numbers = #tpu.dot_dimension_numbers<[1], [0], [0], [1], [0, 0, 1, 1], [], []>} : vector<62x96xbf16>, vector<96x32xbf16>, vector<62x32xf32> -> vector<62x32xf32>
    %5 = arith.mulf %4, %4 : vector<62x32xf32>
    %6 = arith.mulf %4, %5 : vector<62x32xf32>
    %cst_3 = arith.constant 4.471500e-02 : f32
    %7 = vector.broadcast %cst_3 : f32 to vector<62x32xf32>
    %8 = arith.mulf %7, %6 : vector<62x32xf32>
    %9 = arith.addf %4, %8 : vector<62x32xf32>
    %cst_4 = arith.constant 0.797884583 : f32
    %10 = vector.broadcast %cst_4 : f32 to vector<62x32xf32>
    %11 = arith.mulf %10, %9 : vector<62x32xf32>
    %12 = math.tanh %11 : vector<62x32xf32>
    %cst_5 = arith.constant 1.000000e+00 : f32
    %13 = vector.broadcast %cst_5 : f32 to vector<62x32xf32>
    %14 = arith.addf %13, %12 : vector<62x32xf32>
    %cst_6 = arith.constant 5.000000e-01 : f32
    %15 = vector.broadcast %cst_6 : f32 to vector<62x32xf32>
    %16 = arith.mulf %15, %14 : vector<62x32xf32>
    %17 = arith.mulf %4, %16 : vector<62x32xf32>
    %c0_7 = arith.constant 0 : index
    %c0_8 = arith.constant 0 : index
    %18 = vector.load %arg2[%c0_7, %c0_8] : memref<1x32xf32, #tpu.memory_space<vmem>>, vector<1x32xf32>
    %c0_9 = arith.constant 0 : index
    %c0_10 = arith.constant 0 : index
    %19 = vector.load %arg3[%c0_9, %c0_10] : memref<1x32xf32, #tpu.memory_space<vmem>>, vector<1x32xf32>
    %cst_11 = arith.constant dense<0.000000e+00> : vector<62xf32>
    %20 = vector.multi_reduction <add>, %17, %cst_11 [1] : vector<62x32xf32> to vector<62xf32>
    %21 = vector.shape_cast %20 : vector<62xf32> to vector<62x1xf32>
    %cst_12 = arith.constant 3.200000e+01 : f32
    %22 = vector.broadcast %cst_12 : f32 to vector<62x1xf32>
    %23 = arith.divf %21, %22 : vector<62x1xf32>
    %24 = vector.broadcast %23 : vector<62x1xf32> to vector<62x32xf32>
    %25 = arith.subf %17, %24 : vector<62x32xf32>
    %26 = arith.mulf %25, %25 : vector<62x32xf32>
    %cst_13 = arith.constant dense<0.000000e+00> : vector<62xf32>
    %27 = vector.multi_reduction <add>, %26, %cst_13 [1] : vector<62x32xf32> to vector<62xf32>
    %28 = vector.shape_cast %27 : vector<62xf32> to vector<62x1xf32>
    %cst_14 = arith.constant 3.200000e+01 : f32
    %29 = vector.broadcast %cst_14 : f32 to vector<62x1xf32>
    %30 = arith.divf %28, %29 : vector<62x1xf32>
    %31 = vector.broadcast %23 : vector<62x1xf32> to vector<62x32xf32>
    %32 = arith.subf %17, %31 : vector<62x32xf32>
    %cst_15 = arith.constant 9.99999974E-6 : f32
    %33 = vector.broadcast %cst_15 : f32 to vector<62x1xf32>
    %34 = arith.addf %30, %33 : vector<62x1xf32>
    %35 = math.rsqrt %34 : vector<62x1xf32>
    %36 = vector.broadcast %35 : vector<62x1xf32> to vector<62x32xf32>
    %37 = arith.mulf %32, %36 : vector<62x32xf32>
    %38 = vector.broadcast %18 : vector<1x32xf32> to vector<62x32xf32>
    %39 = arith.mulf %37, %38 : vector<62x32xf32>
    %40 = vector.broadcast %19 : vector<1x32xf32> to vector<62x32xf32>
    %41 = arith.addf %39, %40 : vector<62x32xf32>
    %c0_16 = arith.constant 0 : index
    %c0_17 = arith.constant 0 : index
    %42 = vector.load %arg4[%c0_16, %c0_17] : memref<32x32xf32, #tpu.memory_space<vmem>>, vector<32x32xf32>
    %43 = arith.truncf %41 : vector<62x32xf32> to vector<62x32xbf16>
    %44 = arith.truncf %42 : vector<32x32xf32> to vector<32x32xbf16>
    %cst_18 = arith.constant dense<0.000000e+00> : vector<62x32xf32>
    %45 = tpu.matmul %43, %44, %cst_18 {dimension_numbers = #tpu.dot_dimension_numbers<[1], [0], [0], [1], [0, 0, 1, 1], [], []>} : vector<62x32xbf16>, vector<32x32xbf16>, vector<62x32xf32> -> vector<62x32xf32>
    %c0_19 = arith.constant 0 : index
    %c0_20 = arith.constant 0 : index
    %46 = vector.load %arg5[%c0_19, %c0_20] : memref<1x32xf32, #tpu.memory_space<vmem>>, vector<1x32xf32>
    %47 = vector.broadcast %46 : vector<1x32xf32> to vector<62x32xf32>
    %48 = arith.addf %45, %47 : vector<62x32xf32>
    %c0_21 = arith.constant 0 : index
    %c0_22 = arith.constant 0 : index
    %49 = vector.load %arg6[%c0_21, %c0_22] : memref<62x32xf32, #tpu.memory_space<vmem>>, vector<62x32xf32>
    tpu.vector_store %arg6[%c0_21, %c0_22], %48 {strides = array<i32>} : memref<62x32xf32, #tpu.memory_space<vmem>>, vector<62x32xf32>,
    return
  }
}

module attributes {stable_mosaic.version = 11 : i64} {
  func.func @_pos_conv_kernel(%arg0: memref<62x32xf32, #tpu.memory_space<vmem>>, %arg1: memref<2x62x64xf32, #tpu.memory_space<vmem>>, %arg2: memref<2x64x16xf32, #tpu.memory_space<vmem>>, %arg3: memref<1x32xf32, #tpu.memory_space<vmem>>, %arg4: memref<1x32xf32, #tpu.memory_space<vmem>>, %arg5: memref<1x32xf32, #tpu.memory_space<vmem>>, %arg6: memref<62x32xf32, #tpu.memory_space<vmem>>) attributes {dimension_semantics = [], scalar_prefetch = 0 : i64, scratch_operands = 0 : i64, tpu.core_type = #tpu.core_type<tc>} {
    %c0 = arith.constant 0 : index
    %c0_0 = arith.constant 0 : index
    %0 = vector.load %arg0[%c0, %c0_0] : memref<62x32xf32, #tpu.memory_space<vmem>>, vector<62x32xf32>
    %c0_1 = arith.constant 0 : index
    %c0_2 = arith.constant 0 : index
    %c0_3 = arith.constant 0 : index
    %1 = vector.load %arg1[%c0_1, %c0_2, %c0_3] : memref<2x62x64xf32, #tpu.memory_space<vmem>>, vector<1x62x64xf32>
    %2 = vector.shape_cast %1 : vector<1x62x64xf32> to vector<62x64xf32>
    %c0_4 = arith.constant 0 : index
    %c0_5 = arith.constant 0 : index
    %c0_6 = arith.constant 0 : index
    %3 = vector.load %arg2[%c0_4, %c0_5, %c0_6] : memref<2x64x16xf32, #tpu.memory_space<vmem>>, vector<1x64x16xf32>
    %4 = vector.shape_cast %3 : vector<1x64x16xf32> to vector<64x16xf32>
    %5 = arith.truncf %2 : vector<62x64xf32> to vector<62x64xbf16>
    %6 = arith.truncf %4 : vector<64x16xf32> to vector<64x16xbf16>
    %cst = arith.constant dense<0.000000e+00> : vector<62x16xf32>
    %7 = tpu.matmul %5, %6, %cst {dimension_numbers = #tpu.dot_dimension_numbers<[1], [0], [0], [1], [0, 0, 1, 1], [], []>} : vector<62x64xbf16>, vector<64x16xbf16>, vector<62x16xf32> -> vector<62x16xf32>
    %c1 = arith.constant 1 : index
    %c0_7 = arith.constant 0 : index
    %c0_8 = arith.constant 0 : index
    %8 = vector.load %arg1[%c1, %c0_7, %c0_8] : memref<2x62x64xf32, #tpu.memory_space<vmem>>, vector<1x62x64xf32>
    %9 = vector.shape_cast %8 : vector<1x62x64xf32> to vector<62x64xf32>
    %c1_9 = arith.constant 1 : index
    %c0_10 = arith.constant 0 : index
    %c0_11 = arith.constant 0 : index
    %10 = vector.load %arg2[%c1_9, %c0_10, %c0_11] : memref<2x64x16xf32, #tpu.memory_space<vmem>>, vector<1x64x16xf32>
    %11 = vector.shape_cast %10 : vector<1x64x16xf32> to vector<64x16xf32>
    %12 = arith.truncf %9 : vector<62x64xf32> to vector<62x64xbf16>
    %13 = arith.truncf %11 : vector<64x16xf32> to vector<64x16xbf16>
    %cst_12 = arith.constant dense<0.000000e+00> : vector<62x16xf32>
    %14 = tpu.matmul %12, %13, %cst_12 {dimension_numbers = #tpu.dot_dimension_numbers<[1], [0], [0], [1], [0, 0, 1, 1], [], []>} : vector<62x64xbf16>, vector<64x16xbf16>, vector<62x16xf32> -> vector<62x16xf32>
    %15 = tpu.concatenate %7, %14 in 1 : vector<62x16xf32>, vector<62x16xf32> -> vector<62x32xf32>
    %c0_13 = arith.constant 0 : index
    %c0_14 = arith.constant 0 : index
    %16 = vector.load %arg3[%c0_13, %c0_14] : memref<1x32xf32, #tpu.memory_space<vmem>>, vector<1x32xf32>
    %17 = vector.broadcast %16 : vector<1x32xf32> to vector<62x32xf32>
    %18 = arith.addf %15, %17 : vector<62x32xf32>
    %19 = arith.mulf %18, %18 : vector<62x32xf32>
    %20 = arith.mulf %18, %19 : vector<62x32xf32>
    %cst_15 = arith.constant 4.471500e-02 : f32
    %21 = vector.broadcast %cst_15 : f32 to vector<62x32xf32>
    %22 = arith.mulf %21, %20 : vector<62x32xf32>
    %23 = arith.addf %18, %22 : vector<62x32xf32>
    %cst_16 = arith.constant 0.797884583 : f32
    %24 = vector.broadcast %cst_16 : f32 to vector<62x32xf32>
    %25 = arith.mulf %24, %23 : vector<62x32xf32>
    %26 = math.tanh %25 : vector<62x32xf32>
    %cst_17 = arith.constant 1.000000e+00 : f32
    %27 = vector.broadcast %cst_17 : f32 to vector<62x32xf32>
    %28 = arith.addf %27, %26 : vector<62x32xf32>
    %cst_18 = arith.constant 5.000000e-01 : f32
    %29 = vector.broadcast %cst_18 : f32 to vector<62x32xf32>
    %30 = arith.mulf %29, %28 : vector<62x32xf32>
    %31 = arith.mulf %18, %30 : vector<62x32xf32>
    %32 = arith.addf %0, %31 : vector<62x32xf32>
    %c0_19 = arith.constant 0 : index
    %c0_20 = arith.constant 0 : index
    %33 = vector.load %arg4[%c0_19, %c0_20] : memref<1x32xf32, #tpu.memory_space<vmem>>, vector<1x32xf32>
    %c0_21 = arith.constant 0 : index
    %c0_22 = arith.constant 0 : index
    %34 = vector.load %arg5[%c0_21, %c0_22] : memref<1x32xf32, #tpu.memory_space<vmem>>, vector<1x32xf32>
    %cst_23 = arith.constant dense<0.000000e+00> : vector<62xf32>
    %35 = vector.multi_reduction <add>, %32, %cst_23 [1] : vector<62x32xf32> to vector<62xf32>
    %36 = vector.shape_cast %35 : vector<62xf32> to vector<62x1xf32>
    %cst_24 = arith.constant 3.200000e+01 : f32
    %37 = vector.broadcast %cst_24 : f32 to vector<62x1xf32>
    %38 = arith.divf %36, %37 : vector<62x1xf32>
    %39 = vector.broadcast %38 : vector<62x1xf32> to vector<62x32xf32>
    %40 = arith.subf %32, %39 : vector<62x32xf32>
    %41 = arith.mulf %40, %40 : vector<62x32xf32>
    %cst_25 = arith.constant dense<0.000000e+00> : vector<62xf32>
    %42 = vector.multi_reduction <add>, %41, %cst_25 [1] : vector<62x32xf32> to vector<62xf32>
    %43 = vector.shape_cast %42 : vector<62xf32> to vector<62x1xf32>
    %cst_26 = arith.constant 3.200000e+01 : f32
    %44 = vector.broadcast %cst_26 : f32 to vector<62x1xf32>
    %45 = arith.divf %43, %44 : vector<62x1xf32>
    %46 = vector.broadcast %38 : vector<62x1xf32> to vector<62x32xf32>
    %47 = arith.subf %32, %46 : vector<62x32xf32>
    %cst_27 = arith.constant 9.99999974E-6 : f32
    %48 = vector.broadcast %cst_27 : f32 to vector<62x1xf32>
    %49 = arith.addf %45, %48 : vector<62x1xf32>
    %50 = math.rsqrt %49 : vector<62x1xf32>
    %51 = vector.broadcast %50 : vector<62x1xf32> to vector<62x32xf32>
    %52 = arith.mulf %47, %51 : vector<62x32xf32>
    %53 = vector.broadcast %33 : vector<1x32xf32> to vector<62x32xf32>
    %54 = arith.mulf %52, %53 : vector<62x32xf32>
    %55 = vector.broadcast %34 : vector<1x32xf32> to vector<62x32xf32>
    %56 = arith.addf %54, %55 : vector<62x32xf32>
    %c0_28 = arith.constant 0 : index
    %c0_29 = arith.constant 0 : index
    %57 = vector.load %arg6[%c0_28, %c0_29] : memref<62x32xf32, #tpu.memory_space<vmem>>, vector<62x32xf32>
    tpu.vector_store %arg6[%c0_28, %c0_29], %56 {strides = array<i32>} : memref<62x32xf32, #tpu.memory_space<vmem>>, vector<62x32xf32>,
    return
  }
}

module attributes {stable_mosaic.version = 11 : i64} {
  func.func @_encoder_kernel(%arg0: i32, %arg1: memref<62x32xf32, #tpu.memory_space<vmem>>, %arg2: memref<62x62xf32, #tpu.memory_space<vmem>>, %arg3: memref<1x32x32xf32, #tpu.memory_space<vmem>>, %arg4: memref<1x1x32xf32, #tpu.memory_space<vmem>>, %arg5: memref<1x32x32xf32, #tpu.memory_space<vmem>>, %arg6: memref<1x1x32xf32, #tpu.memory_space<vmem>>, %arg7: memref<1x32x32xf32, #tpu.memory_space<vmem>>, %arg8: memref<1x1x32xf32, #tpu.memory_space<vmem>>, %arg9: memref<1x32x32xf32, #tpu.memory_space<vmem>>, %arg10: memref<1x1x32xf32, #tpu.memory_space<vmem>>, %arg11: memref<1x1x32xf32, #tpu.memory_space<vmem>>, %arg12: memref<1x1x32xf32, #tpu.memory_space<vmem>>, %arg13: memref<1x32x64xf32, #tpu.memory_space<vmem>>, %arg14: memref<1x1x64xf32, #tpu.memory_space<vmem>>, %arg15: memref<1x64x32xf32, #tpu.memory_space<vmem>>, %arg16: memref<1x1x32xf32, #tpu.memory_space<vmem>>, %arg17: memref<1x1x32xf32, #tpu.memory_space<vmem>>, %arg18: memref<1x1x32xf32, #tpu.memory_space<vmem>>, %arg19: memref<62x32xf32, #tpu.memory_space<vmem>>, %arg20: memref<62x32xf32, #tpu.memory_space<vmem>>, %arg21: memref<62x32xf32, #tpu.memory_space<vmem>>) attributes {dimension_semantics = [#tpu.dimension_semantics<arbitrary>], iteration_bounds = array<i64: 2>, scalar_prefetch = 0 : i64, scratch_operands = 2 : i64, tpu.core_type = #tpu.core_type<tc>, window_params = [{pipeline_mode = #tpu.pipeline_mode<synchronous>, transform_indices = @transform_0, window_bounds = array<i64: 62, 32>}, {pipeline_mode = #tpu.pipeline_mode<synchronous>, transform_indices = @transform_1, window_bounds = array<i64: 62, 62>}, {transform_indices = @transform_2, window_bounds = array<i64: 1, 32, 32>}, {transform_indices = @transform_3, window_bounds = array<i64: 1, 1, 32>}, {transform_indices = @transform_4, window_bounds = array<i64: 1, 32, 32>}, {transform_indices = @transform_5, window_bounds = array<i64: 1, 1, 32>}, {transform_indices = @transform_6, window_bounds = array<i64: 1, 32, 32>}, {transform_indices = @transform_7, window_bounds = array<i64: 1, 1, 32>}, {transform_indices = @transform_8, window_bounds = array<i64: 1, 32, 32>}, {transform_indices = @transform_9, window_bounds = array<i64: 1, 1, 32>}, {transform_indices = @transform_10, window_bounds = array<i64: 1, 1, 32>}, {transform_indices = @transform_11, window_bounds = array<i64: 1, 1, 32>}, {transform_indices = @transform_12, window_bounds = array<i64: 1, 32, 64>}, {transform_indices = @transform_13, window_bounds = array<i64: 1, 1, 64>}, {transform_indices = @transform_14, window_bounds = array<i64: 1, 64, 32>}, {transform_indices = @transform_15, window_bounds = array<i64: 1, 1, 32>}, {transform_indices = @transform_16, window_bounds = array<i64: 1, 1, 32>}, {transform_indices = @transform_17, window_bounds = array<i64: 1, 1, 32>}, {pipeline_mode = #tpu.pipeline_mode<synchronous>, transform_indices = @transform_18, window_bounds = array<i64: 62, 32>}]} {
    %c0_i32 = arith.constant 0 : i32
    %0 = arith.cmpi eq, %arg0, %c0_i32 : i32
    %1 = arith.extui %0 : i1 to i32
    %c0_i32_0 = arith.constant 0 : i32
    %2 = arith.cmpi ne, %1, %c0_i32_0 : i32
    scf.if %2 {
      %c0_95 = arith.constant 0 : index
      %c0_96 = arith.constant 0 : index
      %216 = vector.load %arg1[%c0_95, %c0_96] : memref<62x32xf32, #tpu.memory_space<vmem>>, vector<62x32xf32>
      %c0_97 = arith.constant 0 : index
      %c0_98 = arith.constant 0 : index
      %217 = vector.load %arg20[%c0_97, %c0_98] : memref<62x32xf32, #tpu.memory_space<vmem>>, vector<62x32xf32>
      tpu.vector_store %arg20[%c0_97, %c0_98], %216 {strides = array<i32>} : memref<62x32xf32, #tpu.memory_space<vmem>>, vector<62x32xf32>,
      %c0_99 = arith.constant 0 : index
      %c0_100 = arith.constant 0 : index
      %218 = vector.load %arg21[%c0_99, %c0_100] : memref<62x32xf32, #tpu.memory_space<vmem>>, vector<62x32xf32>
      tpu.vector_store %arg21[%c0_99, %c0_100], %216 {strides = array<i32>} : memref<62x32xf32, #tpu.memory_space<vmem>>, vector<62x32xf32>,
    } else {
    }
    %c0 = arith.constant 0 : index
    %c0_1 = arith.constant 0 : index
    %3 = vector.load %arg20[%c0, %c0_1] : memref<62x32xf32, #tpu.memory_space<vmem>>, vector<62x32xf32>
    %c0_2 = arith.constant 0 : index
    %c0_3 = arith.constant 0 : index
    %4 = vector.load %arg2[%c0_2, %c0_3] : memref<62x62xf32, #tpu.memory_space<vmem>>, vector<62x62xf32>
    %c0_4 = arith.constant 0 : index
    %c0_5 = arith.constant 0 : index
    %c0_6 = arith.constant 0 : index
    %5 = vector.load %arg3[%c0_4, %c0_5, %c0_6] : memref<1x32x32xf32, #tpu.memory_space<vmem>>, vector<1x32x32xf32>
    %6 = vector.shape_cast %5 : vector<1x32x32xf32> to vector<32x32xf32>
    %7 = arith.truncf %3 : vector<62x32xf32> to vector<62x32xbf16>
    %8 = arith.truncf %6 : vector<32x32xf32> to vector<32x32xbf16>
    %cst = arith.constant dense<0.000000e+00> : vector<62x32xf32>
    %9 = tpu.matmul %7, %8, %cst {dimension_numbers = #tpu.dot_dimension_numbers<[1], [0], [0], [1], [0, 0, 1, 1], [], []>} : vector<62x32xbf16>, vector<32x32xbf16>, vector<62x32xf32> -> vector<62x32xf32>
    %c0_7 = arith.constant 0 : index
    %c0_8 = arith.constant 0 : index
    %c0_9 = arith.constant 0 : index
    %10 = vector.load %arg4[%c0_7, %c0_8, %c0_9] : memref<1x1x32xf32, #tpu.memory_space<vmem>>, vector<1x1x32xf32>
    %11 = vector.shape_cast %10 : vector<1x1x32xf32> to vector<1x32xf32>
    %12 = vector.broadcast %11 : vector<1x32xf32> to vector<62x32xf32>
    %13 = arith.addf %9, %12 : vector<62x32xf32>
    %cst_10 = arith.constant 0.353553385 : f32
    %14 = vector.broadcast %cst_10 : f32 to vector<62x32xf32>
    %15 = arith.mulf %13, %14 : vector<62x32xf32>
    %c0_11 = arith.constant 0 : index
    %c0_12 = arith.constant 0 : index
    %c0_13 = arith.constant 0 : index
    %16 = vector.load %arg5[%c0_11, %c0_12, %c0_13] : memref<1x32x32xf32, #tpu.memory_space<vmem>>, vector<1x32x32xf32>
    %17 = vector.shape_cast %16 : vector<1x32x32xf32> to vector<32x32xf32>
    %18 = arith.truncf %3 : vector<62x32xf32> to vector<62x32xbf16>
    %19 = arith.truncf %17 : vector<32x32xf32> to vector<32x32xbf16>
    %cst_14 = arith.constant dense<0.000000e+00> : vector<62x32xf32>
    %20 = tpu.matmul %18, %19, %cst_14 {dimension_numbers = #tpu.dot_dimension_numbers<[1], [0], [0], [1], [0, 0, 1, 1], [], []>} : vector<62x32xbf16>, vector<32x32xbf16>, vector<62x32xf32> -> vector<62x32xf32>
    %c0_15 = arith.constant 0 : index
    %c0_16 = arith.constant 0 : index
    %c0_17 = arith.constant 0 : index
    %21 = vector.load %arg6[%c0_15, %c0_16, %c0_17] : memref<1x1x32xf32, #tpu.memory_space<vmem>>, vector<1x1x32xf32>
    %22 = vector.shape_cast %21 : vector<1x1x32xf32> to vector<1x32xf32>
    %23 = vector.broadcast %22 : vector<1x32xf32> to vector<62x32xf32>
    %24 = arith.addf %20, %23 : vector<62x32xf32>
    %c0_18 = arith.constant 0 : index
    %c0_19 = arith.constant 0 : index
    %c0_20 = arith.constant 0 : index
    %25 = vector.load %arg7[%c0_18, %c0_19, %c0_20] : memref<1x32x32xf32, #tpu.memory_space<vmem>>, vector<1x32x32xf32>
    %26 = vector.shape_cast %25 : vector<1x32x32xf32> to vector<32x32xf32>
    %27 = arith.truncf %3 : vector<62x32xf32> to vector<62x32xbf16>
    %28 = arith.truncf %26 : vector<32x32xf32> to vector<32x32xbf16>
    %cst_21 = arith.constant dense<0.000000e+00> : vector<62x32xf32>
    %29 = tpu.matmul %27, %28, %cst_21 {dimension_numbers = #tpu.dot_dimension_numbers<[1], [0], [0], [1], [0, 0, 1, 1], [], []>} : vector<62x32xbf16>, vector<32x32xbf16>, vector<62x32xf32> -> vector<62x32xf32>
    %c0_22 = arith.constant 0 : index
    %c0_23 = arith.constant 0 : index
    %c0_24 = arith.constant 0 : index
    %30 = vector.load %arg8[%c0_22, %c0_23, %c0_24] : memref<1x1x32xf32, #tpu.memory_space<vmem>>, vector<1x1x32xf32>
    %31 = vector.shape_cast %30 : vector<1x1x32xf32> to vector<1x32xf32>
    %32 = vector.broadcast %31 : vector<1x32xf32> to vector<62x32xf32>
    %33 = arith.addf %29, %32 : vector<62x32xf32>
    %34 = vector.extract_strided_slice %15 {offsets = [0, 0], sizes = [62, 8], strides = [1, 1]} : vector<62x32xf32> to vector<62x8xf32>
    %35 = arith.truncf %34 : vector<62x8xf32> to vector<62x8xbf16>
    %36 = vector.extract_strided_slice %24 {offsets = [0, 0], sizes = [62, 8], strides = [1, 1]} : vector<62x32xf32> to vector<62x8xf32>
    %37 = arith.truncf %36 : vector<62x8xf32> to vector<62x8xbf16>
    %cst_25 = arith.constant dense<0.000000e+00> : vector<62x62xf32>
    %38 = tpu.matmul %35, %37, %cst_25 {dimension_numbers = #tpu.dot_dimension_numbers<[1], [1], [0], [0], [0, 0, 1, 0], [], []>} : vector<62x8xbf16>, vector<62x8xbf16>, vector<62x62xf32> -> vector<62x62xf32>
    %39 = arith.addf %38, %4 : vector<62x62xf32>
    %cst_26 = arith.constant dense<0xFF800000> : vector<62xf32>
    %40 = vector.multi_reduction <maximumf>, %39, %cst_26 [1] : vector<62x62xf32> to vector<62xf32>
    %41 = vector.shape_cast %40 : vector<62xf32> to vector<62x1xf32>
    %42 = vector.broadcast %41 : vector<62x1xf32> to vector<62x62xf32>
    %43 = arith.subf %39, %42 : vector<62x62xf32>
    %44 = math.exp %43 : vector<62x62xf32>
    %cst_27 = arith.constant dense<0.000000e+00> : vector<62xf32>
    %45 = vector.multi_reduction <add>, %44, %cst_27 [1] : vector<62x62xf32> to vector<62xf32>
    %46 = vector.shape_cast %45 : vector<62xf32> to vector<62x1xf32>
    %47 = tpu.reciprocal %46 {approx = true} : vector<62x1xf32> -> vector<62x1xf32>
    %48 = vector.broadcast %47 : vector<62x1xf32> to vector<62x62xf32>
    %49 = arith.mulf %44, %48 : vector<62x62xf32>
    %50 = vector.extract_strided_slice %33 {offsets = [0, 0], sizes = [62, 8], strides = [1, 1]} : vector<62x32xf32> to vector<62x8xf32>
    %51 = arith.truncf %49 : vector<62x62xf32> to vector<62x62xbf16>
    %52 = arith.truncf %50 : vector<62x8xf32> to vector<62x8xbf16>
    %cst_28 = arith.constant dense<0.000000e+00> : vector<62x8xf32>
    %53 = tpu.matmul %51, %52, %cst_28 {dimension_numbers = #tpu.dot_dimension_numbers<[1], [0], [0], [1], [0, 0, 1, 1], [], []>} : vector<62x62xbf16>, vector<62x8xbf16>, vector<62x8xf32> -> vector<62x8xf32>
    %54 = vector.extract_strided_slice %15 {offsets = [0, 8], sizes = [62, 8], strides = [1, 1]} : vector<62x32xf32> to vector<62x8xf32>
    %55 = arith.truncf %54 : vector<62x8xf32> to vector<62x8xbf16>
    %56 = vector.extract_strided_slice %24 {offsets = [0, 8], sizes = [62, 8], strides = [1, 1]} : vector<62x32xf32> to vector<62x8xf32>
    %57 = arith.truncf %56 : vector<62x8xf32> to vector<62x8xbf16>
    %cst_29 = arith.constant dense<0.000000e+00> : vector<62x62xf32>
    %58 = tpu.matmul %55, %57, %cst_29 {dimension_numbers = #tpu.dot_dimension_numbers<[1], [1], [0], [0], [0, 0, 1, 0], [], []>} : vector<62x8xbf16>, vector<62x8xbf16>, vector<62x62xf32> -> vector<62x62xf32>
    %59 = arith.addf %58, %4 : vector<62x62xf32>
    %cst_30 = arith.constant dense<0xFF800000> : vector<62xf32>
    %60 = vector.multi_reduction <maximumf>, %59, %cst_30 [1] : vector<62x62xf32> to vector<62xf32>
    %61 = vector.shape_cast %60 : vector<62xf32> to vector<62x1xf32>
    %62 = vector.broadcast %61 : vector<62x1xf32> to vector<62x62xf32>
    %63 = arith.subf %59, %62 : vector<62x62xf32>
    %64 = math.exp %63 : vector<62x62xf32>
    %cst_31 = arith.constant dense<0.000000e+00> : vector<62xf32>
    %65 = vector.multi_reduction <add>, %64, %cst_31 [1] : vector<62x62xf32> to vector<62xf32>
    %66 = vector.shape_cast %65 : vector<62xf32> to vector<62x1xf32>
    %67 = tpu.reciprocal %66 {approx = true} : vector<62x1xf32> -> vector<62x1xf32>
    %68 = vector.broadcast %67 : vector<62x1xf32> to vector<62x62xf32>
    %69 = arith.mulf %64, %68 : vector<62x62xf32>
    %70 = vector.extract_strided_slice %33 {offsets = [0, 8], sizes = [62, 8], strides = [1, 1]} : vector<62x32xf32> to vector<62x8xf32>
    %71 = arith.truncf %69 : vector<62x62xf32> to vector<62x62xbf16>
    %72 = arith.truncf %70 : vector<62x8xf32> to vector<62x8xbf16>
    %cst_32 = arith.constant dense<0.000000e+00> : vector<62x8xf32>
    %73 = tpu.matmul %71, %72, %cst_32 {dimension_numbers = #tpu.dot_dimension_numbers<[1], [0], [0], [1], [0, 0, 1, 1], [], []>} : vector<62x62xbf16>, vector<62x8xbf16>, vector<62x8xf32> -> vector<62x8xf32>
    %74 = vector.extract_strided_slice %15 {offsets = [0, 16], sizes = [62, 8], strides = [1, 1]} : vector<62x32xf32> to vector<62x8xf32>
    %75 = arith.truncf %74 : vector<62x8xf32> to vector<62x8xbf16>
    %76 = vector.extract_strided_slice %24 {offsets = [0, 16], sizes = [62, 8], strides = [1, 1]} : vector<62x32xf32> to vector<62x8xf32>
    %77 = arith.truncf %76 : vector<62x8xf32> to vector<62x8xbf16>
    %cst_33 = arith.constant dense<0.000000e+00> : vector<62x62xf32>
    %78 = tpu.matmul %75, %77, %cst_33 {dimension_numbers = #tpu.dot_dimension_numbers<[1], [1], [0], [0], [0, 0, 1, 0], [], []>} : vector<62x8xbf16>, vector<62x8xbf16>, vector<62x62xf32> -> vector<62x62xf32>
    %79 = arith.addf %78, %4 : vector<62x62xf32>
    %cst_34 = arith.constant dense<0xFF800000> : vector<62xf32>
    %80 = vector.multi_reduction <maximumf>, %79, %cst_34 [1] : vector<62x62xf32> to vector<62xf32>
    %81 = vector.shape_cast %80 : vector<62xf32> to vector<62x1xf32>
    %82 = vector.broadcast %81 : vector<62x1xf32> to vector<62x62xf32>
    %83 = arith.subf %79, %82 : vector<62x62xf32>
    %84 = math.exp %83 : vector<62x62xf32>
    %cst_35 = arith.constant dense<0.000000e+00> : vector<62xf32>
    %85 = vector.multi_reduction <add>, %84, %cst_35 [1] : vector<62x62xf32> to vector<62xf32>
    %86 = vector.shape_cast %85 : vector<62xf32> to vector<62x1xf32>
    %87 = tpu.reciprocal %86 {approx = true} : vector<62x1xf32> -> vector<62x1xf32>
    %88 = vector.broadcast %87 : vector<62x1xf32> to vector<62x62xf32>
    %89 = arith.mulf %84, %88 : vector<62x62xf32>
    %90 = vector.extract_strided_slice %33 {offsets = [0, 16], sizes = [62, 8], strides = [1, 1]} : vector<62x32xf32> to vector<62x8xf32>
    %91 = arith.truncf %89 : vector<62x62xf32> to vector<62x62xbf16>
    %92 = arith.truncf %90 : vector<62x8xf32> to vector<62x8xbf16>
    %cst_36 = arith.constant dense<0.000000e+00> : vector<62x8xf32>
    %93 = tpu.matmul %91, %92, %cst_36 {dimension_numbers = #tpu.dot_dimension_numbers<[1], [0], [0], [1], [0, 0, 1, 1], [], []>} : vector<62x62xbf16>, vector<62x8xbf16>, vector<62x8xf32> -> vector<62x8xf32>
    %94 = vector.extract_strided_slice %15 {offsets = [0, 24], sizes = [62, 8], strides = [1, 1]} : vector<62x32xf32> to vector<62x8xf32>
    %95 = arith.truncf %94 : vector<62x8xf32> to vector<62x8xbf16>
    %96 = vector.extract_strided_slice %24 {offsets = [0, 24], sizes = [62, 8], strides = [1, 1]} : vector<62x32xf32> to vector<62x8xf32>
    %97 = arith.truncf %96 : vector<62x8xf32> to vector<62x8xbf16>
    %cst_37 = arith.constant dense<0.000000e+00> : vector<62x62xf32>
    %98 = tpu.matmul %95, %97, %cst_37 {dimension_numbers = #tpu.dot_dimension_numbers<[1], [1], [0], [0], [0, 0, 1, 0], [], []>} : vector<62x8xbf16>, vector<62x8xbf16>, vector<62x62xf32> -> vector<62x62xf32>
    %99 = arith.addf %98, %4 : vector<62x62xf32>
    %cst_38 = arith.constant dense<0xFF800000> : vector<62xf32>
    %100 = vector.multi_reduction <maximumf>, %99, %cst_38 [1] : vector<62x62xf32> to vector<62xf32>
    %101 = vector.shape_cast %100 : vector<62xf32> to vector<62x1xf32>
    %102 = vector.broadcast %101 : vector<62x1xf32> to vector<62x62xf32>
    %103 = arith.subf %99, %102 : vector<62x62xf32>
    %104 = math.exp %103 : vector<62x62xf32>
    %cst_39 = arith.constant dense<0.000000e+00> : vector<62xf32>
    %105 = vector.multi_reduction <add>, %104, %cst_39 [1] : vector<62x62xf32> to vector<62xf32>
    %106 = vector.shape_cast %105 : vector<62xf32> to vector<62x1xf32>
    %107 = tpu.reciprocal %106 {approx = true} : vector<62x1xf32> -> vector<62x1xf32>
    %108 = vector.broadcast %107 : vector<62x1xf32> to vector<62x62xf32>
    %109 = arith.mulf %104, %108 : vector<62x62xf32>
    %110 = vector.extract_strided_slice %33 {offsets = [0, 24], sizes = [62, 8], strides = [1, 1]} : vector<62x32xf32> to vector<62x8xf32>
    %111 = arith.truncf %109 : vector<62x62xf32> to vector<62x62xbf16>
    %112 = arith.truncf %110 : vector<62x8xf32> to vector<62x8xbf16>
    %cst_40 = arith.constant dense<0.000000e+00> : vector<62x8xf32>
    %113 = tpu.matmul %111, %112, %cst_40 {dimension_numbers = #tpu.dot_dimension_numbers<[1], [0], [0], [1], [0, 0, 1, 1], [], []>} : vector<62x62xbf16>, vector<62x8xbf16>, vector<62x8xf32> -> vector<62x8xf32>
    %114 = tpu.concatenate %53, %73, %93, %113 in 1 : vector<62x8xf32>, vector<62x8xf32>, vector<62x8xf32>, vector<62x8xf32> -> vector<62x32xf32>
    %c0_41 = arith.constant 0 : index
    %c0_42 = arith.constant 0 : index
    %c0_43 = arith.constant 0 : index
    %115 = vector.load %arg9[%c0_41, %c0_42, %c0_43] : memref<1x32x32xf32, #tpu.memory_space<vmem>>, vector<1x32x32xf32>
    %116 = vector.shape_cast %115 : vector<1x32x32xf32> to vector<32x32xf32>
    %117 = arith.truncf %114 : vector<62x32xf32> to vector<62x32xbf16>
    %118 = arith.truncf %116 : vector<32x32xf32> to vector<32x32xbf16>
    %cst_44 = arith.constant dense<0.000000e+00> : vector<62x32xf32>
    %119 = tpu.matmul %117, %118, %cst_44 {dimension_numbers = #tpu.dot_dimension_numbers<[1], [0], [0], [1], [0, 0, 1, 1], [], []>} : vector<62x32xbf16>, vector<32x32xbf16>, vector<62x32xf32> -> vector<62x32xf32>
    %c0_45 = arith.constant 0 : index
    %c0_46 = arith.constant 0 : index
    %c0_47 = arith.constant 0 : index
    %120 = vector.load %arg10[%c0_45, %c0_46, %c0_47] : memref<1x1x32xf32, #tpu.memory_space<vmem>>, vector<1x1x32xf32>
    %121 = vector.shape_cast %120 : vector<1x1x32xf32> to vector<1x32xf32>
    %122 = vector.broadcast %121 : vector<1x32xf32> to vector<62x32xf32>
    %123 = arith.addf %119, %122 : vector<62x32xf32>
    %124 = arith.addf %3, %123 : vector<62x32xf32>
    %c0_48 = arith.constant 0 : index
    %c0_49 = arith.constant 0 : index
    %c0_50 = arith.constant 0 : index
    %125 = vector.load %arg11[%c0_48, %c0_49, %c0_50] : memref<1x1x32xf32, #tpu.memory_space<vmem>>, vector<1x1x32xf32>
    %126 = vector.shape_cast %125 : vector<1x1x32xf32> to vector<1x32xf32>
    %c0_51 = arith.constant 0 : index
    %c0_52 = arith.constant 0 : index
    %c0_53 = arith.constant 0 : index
    %127 = vector.load %arg12[%c0_51, %c0_52, %c0_53] : memref<1x1x32xf32, #tpu.memory_space<vmem>>, vector<1x1x32xf32>
    %128 = vector.shape_cast %127 : vector<1x1x32xf32> to vector<1x32xf32>
    %cst_54 = arith.constant dense<0.000000e+00> : vector<62xf32>
    %129 = vector.multi_reduction <add>, %124, %cst_54 [1] : vector<62x32xf32> to vector<62xf32>
    %130 = vector.shape_cast %129 : vector<62xf32> to vector<62x1xf32>
    %cst_55 = arith.constant 3.200000e+01 : f32
    %131 = vector.broadcast %cst_55 : f32 to vector<62x1xf32>
    %132 = arith.divf %130, %131 : vector<62x1xf32>
    %133 = vector.broadcast %132 : vector<62x1xf32> to vector<62x32xf32>
    %134 = arith.subf %124, %133 : vector<62x32xf32>
    %135 = arith.mulf %134, %134 : vector<62x32xf32>
    %cst_56 = arith.constant dense<0.000000e+00> : vector<62xf32>
    %136 = vector.multi_reduction <add>, %135, %cst_56 [1] : vector<62x32xf32> to vector<62xf32>
    %137 = vector.shape_cast %136 : vector<62xf32> to vector<62x1xf32>
    %cst_57 = arith.constant 3.200000e+01 : f32
    %138 = vector.broadcast %cst_57 : f32 to vector<62x1xf32>
    %139 = arith.divf %137, %138 : vector<62x1xf32>
    %140 = vector.broadcast %132 : vector<62x1xf32> to vector<62x32xf32>
    %141 = arith.subf %124, %140 : vector<62x32xf32>
    %cst_58 = arith.constant 9.99999974E-6 : f32
    %142 = vector.broadcast %cst_58 : f32 to vector<62x1xf32>
    %143 = arith.addf %139, %142 : vector<62x1xf32>
    %144 = math.rsqrt %143 : vector<62x1xf32>
    %145 = vector.broadcast %144 : vector<62x1xf32> to vector<62x32xf32>
    %146 = arith.mulf %141, %145 : vector<62x32xf32>
    %147 = vector.broadcast %126 : vector<1x32xf32> to vector<62x32xf32>
    %148 = arith.mulf %146, %147 : vector<62x32xf32>
    %149 = vector.broadcast %128 : vector<1x32xf32> to vector<62x32xf32>
    %150 = arith.addf %148, %149 : vector<62x32xf32>
    %c0_59 = arith.constant 0 : index
    %c0_60 = arith.constant 0 : index
    %c0_61 = arith.constant 0 : index
    %151 = vector.load %arg13[%c0_59, %c0_60, %c0_61] : memref<1x32x64xf32, #tpu.memory_space<vmem>>, vector<1x32x64xf32>
    %152 = vector.shape_cast %151 : vector<1x32x64xf32> to vector<32x64xf32>
    %153 = arith.truncf %150 : vector<62x32xf32> to vector<62x32xbf16>
    %154 = arith.truncf %152 : vector<32x64xf32> to vector<32x64xbf16>
    %cst_62 = arith.constant dense<0.000000e+00> : vector<62x64xf32>
    %155 = tpu.matmul %153, %154, %cst_62 {dimension_numbers = #tpu.dot_dimension_numbers<[1], [0], [0], [1], [0, 0, 1, 1], [], []>} : vector<62x32xbf16>, vector<32x64xbf16>, vector<62x64xf32> -> vector<62x64xf32>
    %c0_63 = arith.constant 0 : index
    %c0_64 = arith.constant 0 : index
    %c0_65 = arith.constant 0 : index
    %156 = vector.load %arg14[%c0_63, %c0_64, %c0_65] : memref<1x1x64xf32, #tpu.memory_space<vmem>>, vector<1x1x64xf32>
    %157 = vector.shape_cast %156 : vector<1x1x64xf32> to vector<1x64xf32>
    %158 = vector.broadcast %157 : vector<1x64xf32> to vector<62x64xf32>
    %159 = arith.addf %155, %158 : vector<62x64xf32>
    %160 = arith.mulf %159, %159 : vector<62x64xf32>
    %161 = arith.mulf %159, %160 : vector<62x64xf32>
    %cst_66 = arith.constant 4.471500e-02 : f32
    %162 = vector.broadcast %cst_66 : f32 to vector<62x64xf32>
    %163 = arith.mulf %162, %161 : vector<62x64xf32>
    %164 = arith.addf %159, %163 : vector<62x64xf32>
    %cst_67 = arith.constant 0.797884583 : f32
    %165 = vector.broadcast %cst_67 : f32 to vector<62x64xf32>
    %166 = arith.mulf %165, %164 : vector<62x64xf32>
    %167 = math.tanh %166 : vector<62x64xf32>
    %cst_68 = arith.constant 1.000000e+00 : f32
    %168 = vector.broadcast %cst_68 : f32 to vector<62x64xf32>
    %169 = arith.addf %168, %167 : vector<62x64xf32>
    %cst_69 = arith.constant 5.000000e-01 : f32
    %170 = vector.broadcast %cst_69 : f32 to vector<62x64xf32>
    %171 = arith.mulf %170, %169 : vector<62x64xf32>
    %172 = arith.mulf %159, %171 : vector<62x64xf32>
    %c0_70 = arith.constant 0 : index
    %c0_71 = arith.constant 0 : index
    %c0_72 = arith.constant 0 : index
    %173 = vector.load %arg15[%c0_70, %c0_71, %c0_72] : memref<1x64x32xf32, #tpu.memory_space<vmem>>, vector<1x64x32xf32>
    %174 = vector.shape_cast %173 : vector<1x64x32xf32> to vector<64x32xf32>
    %175 = arith.truncf %172 : vector<62x64xf32> to vector<62x64xbf16>
    %176 = arith.truncf %174 : vector<64x32xf32> to vector<64x32xbf16>
    %cst_73 = arith.constant dense<0.000000e+00> : vector<62x32xf32>
    %177 = tpu.matmul %175, %176, %cst_73 {dimension_numbers = #tpu.dot_dimension_numbers<[1], [0], [0], [1], [0, 0, 1, 1], [], []>} : vector<62x64xbf16>, vector<64x32xbf16>, vector<62x32xf32> -> vector<62x32xf32>
    %178 = arith.addf %150, %177 : vector<62x32xf32>
    %c0_74 = arith.constant 0 : index
    %c0_75 = arith.constant 0 : index
    %c0_76 = arith.constant 0 : index
    %179 = vector.load %arg16[%c0_74, %c0_75, %c0_76] : memref<1x1x32xf32, #tpu.memory_space<vmem>>, vector<1x1x32xf32>
    %180 = vector.shape_cast %179 : vector<1x1x32xf32> to vector<1x32xf32>
    %181 = vector.broadcast %180 : vector<1x32xf32> to vector<62x32xf32>
    %182 = arith.addf %178, %181 : vector<62x32xf32>
    %c0_77 = arith.constant 0 : index
    %c0_78 = arith.constant 0 : index
    %c0_79 = arith.constant 0 : index
    %183 = vector.load %arg17[%c0_77, %c0_78, %c0_79] : memref<1x1x32xf32, #tpu.memory_space<vmem>>, vector<1x1x32xf32>
    %184 = vector.shape_cast %183 : vector<1x1x32xf32> to vector<1x32xf32>
    %c0_80 = arith.constant 0 : index
    %c0_81 = arith.constant 0 : index
    %c0_82 = arith.constant 0 : index
    %185 = vector.load %arg18[%c0_80, %c0_81, %c0_82] : memref<1x1x32xf32, #tpu.memory_space<vmem>>, vector<1x1x32xf32>
    %186 = vector.shape_cast %185 : vector<1x1x32xf32> to vector<1x32xf32>
    %cst_83 = arith.constant dense<0.000000e+00> : vector<62xf32>
    %187 = vector.multi_reduction <add>, %182, %cst_83 [1] : vector<62x32xf32> to vector<62xf32>
    %188 = vector.shape_cast %187 : vector<62xf32> to vector<62x1xf32>
    %cst_84 = arith.constant 3.200000e+01 : f32
    %189 = vector.broadcast %cst_84 : f32 to vector<62x1xf32>
    %190 = arith.divf %188, %189 : vector<62x1xf32>
    %191 = vector.broadcast %190 : vector<62x1xf32> to vector<62x32xf32>
    %192 = arith.subf %182, %191 : vector<62x32xf32>
    %193 = arith.mulf %192, %192 : vector<62x32xf32>
    %cst_85 = arith.constant dense<0.000000e+00> : vector<62xf32>
    %194 = vector.multi_reduction <add>, %193, %cst_85 [1] : vector<62x32xf32> to vector<62xf32>
    %195 = vector.shape_cast %194 : vector<62xf32> to vector<62x1xf32>
    %cst_86 = arith.constant 3.200000e+01 : f32
    %196 = vector.broadcast %cst_86 : f32 to vector<62x1xf32>
    %197 = arith.divf %195, %196 : vector<62x1xf32>
    %198 = vector.broadcast %190 : vector<62x1xf32> to vector<62x32xf32>
    %199 = arith.subf %182, %198 : vector<62x32xf32>
    %cst_87 = arith.constant 9.99999974E-6 : f32
    %200 = vector.broadcast %cst_87 : f32 to vector<62x1xf32>
    %201 = arith.addf %197, %200 : vector<62x1xf32>
    %202 = math.rsqrt %201 : vector<62x1xf32>
    %203 = vector.broadcast %202 : vector<62x1xf32> to vector<62x32xf32>
    %204 = arith.mulf %199, %203 : vector<62x32xf32>
    %205 = vector.broadcast %184 : vector<1x32xf32> to vector<62x32xf32>
    %206 = arith.mulf %204, %205 : vector<62x32xf32>
    %207 = vector.broadcast %186 : vector<1x32xf32> to vector<62x32xf32>
    %208 = arith.addf %206, %207 : vector<62x32xf32>
    %c0_88 = arith.constant 0 : index
    %c0_89 = arith.constant 0 : index
    %209 = vector.load %arg20[%c0_88, %c0_89] : memref<62x32xf32, #tpu.memory_space<vmem>>, vector<62x32xf32>
    tpu.vector_store %arg20[%c0_88, %c0_89], %208 {strides = array<i32>} : memref<62x32xf32, #tpu.memory_space<vmem>>, vector<62x32xf32>,
    %c0_90 = arith.constant 0 : index
    %c0_91 = arith.constant 0 : index
    %210 = vector.load %arg21[%c0_90, %c0_91] : memref<62x32xf32, #tpu.memory_space<vmem>>, vector<62x32xf32>
    %211 = arith.addf %210, %208 : vector<62x32xf32>
    %c0_92 = arith.constant 0 : index
    %c0_93 = arith.constant 0 : index
    %212 = vector.load %arg21[%c0_92, %c0_93] : memref<62x32xf32, #tpu.memory_space<vmem>>, vector<62x32xf32>
    tpu.vector_store %arg21[%c0_92, %c0_93], %211 {strides = array<i32>} : memref<62x32xf32, #tpu.memory_space<vmem>>, vector<62x32xf32>,
    %c1_i32 = arith.constant 1 : i32
    %213 = arith.cmpi eq, %arg0, %c1_i32 : i32
    %214 = arith.extui %213 : i1 to i32
    %c0_i32_94 = arith.constant 0 : i32
    %215 = arith.cmpi ne, %214, %c0_i32_94 : i32
    scf.if %215 {
      %c0_95 = arith.constant 0 : index
      %c0_96 = arith.constant 0 : index
      %216 = vector.load %arg21[%c0_95, %c0_96] : memref<62x32xf32, #tpu.memory_space<vmem>>, vector<62x32xf32>
      %cst_97 = arith.constant 0.333333343 : f32
      %217 = vector.broadcast %cst_97 : f32 to vector<62x32xf32>
      %218 = arith.mulf %216, %217 : vector<62x32xf32>
      %c0_98 = arith.constant 0 : index
      %c0_99 = arith.constant 0 : index
      %219 = vector.load %arg19[%c0_98, %c0_99] : memref<62x32xf32, #tpu.memory_space<vmem>>, vector<62x32xf32>
      tpu.vector_store %arg19[%c0_98, %c0_99], %218 {strides = array<i32>} : memref<62x32xf32, #tpu.memory_space<vmem>>, vector<62x32xf32>,
    } else {
    }
    return
  }
  func.func @transform_0(%arg0: i32) -> (i32, i32) {
    %c0_i32 = arith.constant 0 : i32
    %c0_i32_0 = arith.constant 0 : i32
    %c0_i32_1 = arith.constant 0 : i32
    return %c0_i32, %c0_i32_0 : i32, i32
  }
  func.func @transform_1(%arg0: i32) -> (i32, i32) {
    %c0_i32 = arith.constant 0 : i32
    %c0_i32_0 = arith.constant 0 : i32
    %c0_i32_1 = arith.constant 0 : i32
    return %c0_i32, %c0_i32_0 : i32, i32
  }
  func.func @transform_2(%arg0: i32) -> (i32, i32, i32) {
    %c0_i32 = arith.constant 0 : i32
    %c0_i32_0 = arith.constant 0 : i32
    %c0_i32_1 = arith.constant 0 : i32
    return %arg0, %c0_i32, %c0_i32_0 : i32, i32, i32
  }
  func.func @transform_3(%arg0: i32) -> (i32, i32, i32) {
    %c0_i32 = arith.constant 0 : i32
    %c0_i32_0 = arith.constant 0 : i32
    %c0_i32_1 = arith.constant 0 : i32
    return %arg0, %c0_i32, %c0_i32_0 : i32, i32, i32
  }
  func.func @transform_4(%arg0: i32) -> (i32, i32, i32) {
    %c0_i32 = arith.constant 0 : i32
    %c0_i32_0 = arith.constant 0 : i32
    %c0_i32_1 = arith.constant 0 : i32
    return %arg0, %c0_i32, %c0_i32_0 : i32, i32, i32
  }
  func.func @transform_5(%arg0: i32) -> (i32, i32, i32) {
    %c0_i32 = arith.constant 0 : i32
    %c0_i32_0 = arith.constant 0 : i32
    %c0_i32_1 = arith.constant 0 : i32
    return %arg0, %c0_i32, %c0_i32_0 : i32, i32, i32
  }
  func.func @transform_6(%arg0: i32) -> (i32, i32, i32) {
    %c0_i32 = arith.constant 0 : i32
    %c0_i32_0 = arith.constant 0 : i32
    %c0_i32_1 = arith.constant 0 : i32
    return %arg0, %c0_i32, %c0_i32_0 : i32, i32, i32
  }
  func.func @transform_7(%arg0: i32) -> (i32, i32, i32) {
    %c0_i32 = arith.constant 0 : i32
    %c0_i32_0 = arith.constant 0 : i32
    %c0_i32_1 = arith.constant 0 : i32
    return %arg0, %c0_i32, %c0_i32_0 : i32, i32, i32
  }
  func.func @transform_8(%arg0: i32) -> (i32, i32, i32) {
    %c0_i32 = arith.constant 0 : i32
    %c0_i32_0 = arith.constant 0 : i32
    %c0_i32_1 = arith.constant 0 : i32
    return %arg0, %c0_i32, %c0_i32_0 : i32, i32, i32
  }
  func.func @transform_9(%arg0: i32) -> (i32, i32, i32) {
    %c0_i32 = arith.constant 0 : i32
    %c0_i32_0 = arith.constant 0 : i32
    %c0_i32_1 = arith.constant 0 : i32
    return %arg0, %c0_i32, %c0_i32_0 : i32, i32, i32
  }
  func.func @transform_10(%arg0: i32) -> (i32, i32, i32) {
    %c0_i32 = arith.constant 0 : i32
    %c0_i32_0 = arith.constant 0 : i32
    %c0_i32_1 = arith.constant 0 : i32
    return %arg0, %c0_i32, %c0_i32_0 : i32, i32, i32
  }
  func.func @transform_11(%arg0: i32) -> (i32, i32, i32) {
    %c0_i32 = arith.constant 0 : i32
    %c0_i32_0 = arith.constant 0 : i32
    %c0_i32_1 = arith.constant 0 : i32
    return %arg0, %c0_i32, %c0_i32_0 : i32, i32, i32
  }
  func.func @transform_12(%arg0: i32) -> (i32, i32, i32) {
    %c0_i32 = arith.constant 0 : i32
    %c0_i32_0 = arith.constant 0 : i32
    %c0_i32_1 = arith.constant 0 : i32
    return %arg0, %c0_i32, %c0_i32_0 : i32, i32, i32
  }
  func.func @transform_13(%arg0: i32) -> (i32, i32, i32) {
    %c0_i32 = arith.constant 0 : i32
    %c0_i32_0 = arith.constant 0 : i32
    %c0_i32_1 = arith.constant 0 : i32
    return %arg0, %c0_i32, %c0_i32_0 : i32, i32, i32
  }
  func.func @transform_14(%arg0: i32) -> (i32, i32, i32) {
    %c0_i32 = arith.constant 0 : i32
    %c0_i32_0 = arith.constant 0 : i32
    %c0_i32_1 = arith.constant 0 : i32
    return %arg0, %c0_i32, %c0_i32_0 : i32, i32, i32
  }
  func.func @transform_15(%arg0: i32) -> (i32, i32, i32) {
    %c0_i32 = arith.constant 0 : i32
    %c0_i32_0 = arith.constant 0 : i32
    %c0_i32_1 = arith.constant 0 : i32
    return %arg0, %c0_i32, %c0_i32_0 : i32, i32, i32
  }
  func.func @transform_16(%arg0: i32) -> (i32, i32, i32) {
    %c0_i32 = arith.constant 0 : i32
    %c0_i32_0 = arith.constant 0 : i32
    %c0_i32_1 = arith.constant 0 : i32
    return %arg0, %c0_i32, %c0_i32_0 : i32, i32, i32
  }
  func.func @transform_17(%arg0: i32) -> (i32, i32, i32) {
    %c0_i32 = arith.constant 0 : i32
    %c0_i32_0 = arith.constant 0 : i32
    %c0_i32_1 = arith.constant 0 : i32
    return %arg0, %c0_i32, %c0_i32_0 : i32, i32, i32
  }
  func.func @transform_18(%arg0: i32) -> (i32, i32) {
    %c0_i32 = arith.constant 0 : i32
    %c0_i32_0 = arith.constant 0 : i32
    %c0_i32_1 = arith.constant 0 : i32
    return %c0_i32, %c0_i32_0 : i32, i32
  }
}

</mosaic_0001>

<llo_original>
// kernel: custom_wav2vec2_forward.5
$region0: #{custom_wav2vec2_forward.5}
  #allocation0 [shape = 'u32[]', space=smem, size = 0x4, offset = 0x4, fixed_abs, tag = 'smem constant byte address 0x4 - core index']
  #allocation1 [shape = 'u32[144,128]{1,0:T(1,128)}', space=vmem, size = 0x12000, scoped, tag = 'internal scratch']
  %s0 = inlined_call_operand.vmem [shape: f32[62,96], index: 0, kind: input, shape index: {}]
  %s1 = inlined_call_operand.vmem [shape: f32[96,32], index: 1, kind: input, shape index: {}]
  %s2 = inlined_call_operand.vmem [shape: f32[1,32], index: 2, kind: input, shape index: {}]
  %s3 = inlined_call_operand.vmem [shape: f32[1,32], index: 3, kind: input, shape index: {}]
  %s4 = inlined_call_operand.vmem [shape: f32[32,32], index: 4, kind: input, shape index: {}]
  %s5 = inlined_call_operand.vmem [shape: f32[1,32], index: 5, kind: input, shape index: {}]
  %s6 = inlined_call_operand.vmem [shape: f32[62,32], index: 6, kind: output, shape index: {}]
  %s7 = sld [smem:[#allocation0]]
  $region34: #{custom_wav2vec2_forward.5} parent=0
    _
  %s9 = ssub.s32 1, %s7
  %s10 = scalar_select 0, %s9, %s7
  // Predicated region
  $region2: #{custom_wav2vec2_forward.5} parent=0 // pred_check
    _
  $region3: #{custom_wav2vec2_forward.5} parent=0 // pred_check_branch
    %12 = sbr.rel (0) target = $region5
  $region4: #{custom_wav2vec2_forward.5} parent=0 // pred_region
    _
  $region5: #{custom_wav2vec2_forward.5} parent=0 // pred_fallthru
    _
  // Predicated region
  $region6: #{custom_wav2vec2_forward.5} parent=0 // pred_check
    _
  $region7: #{custom_wav2vec2_forward.5} parent=0 // pred_check_branch
    %14 = sbr.rel (0) target = $region9
  $region8: #{custom_wav2vec2_forward.5} parent=0 // pred_region
    _
  $region9: #{custom_wav2vec2_forward.5} parent=0 // pred_fallthru
    _
  // Predicated region
  $region10: #{custom_wav2vec2_forward.5} parent=0 // pred_check
    _
  $region11: #{custom_wav2vec2_forward.5} parent=0 // pred_check_branch
    %16 = sbr.rel (0) target = $region13
  $region12: #{custom_wav2vec2_forward.5} parent=0 // pred_region
    _
  $region13: #{custom_wav2vec2_forward.5} parent=0 // pred_fallthru
    _
  // Predicated region
  $region14: #{custom_wav2vec2_forward.5} parent=0 // pred_check
    _
  $region15: #{custom_wav2vec2_forward.5} parent=0 // pred_check_branch
    %18 = sbr.rel (0) target = $region17
  $region16: #{custom_wav2vec2_forward.5} parent=0 // pred_region
    _
  $region17: #{custom_wav2vec2_forward.5} parent=0 // pred_fallthru
    _
  // Predicated region
  $region18: #{custom_wav2vec2_forward.5} parent=0 // pred_check
    _
  $region19: #{custom_wav2vec2_forward.5} parent=0 // pred_check_branch
    %20 = sbr.rel (0) target = $region21
  $region20: #{custom_wav2vec2_forward.5} parent=0 // pred_region
    _
  $region21: #{custom_wav2vec2_forward.5} parent=0 // pred_fallthru
    _
  // Predicated region
  $region22: #{custom_wav2vec2_forward.5} parent=0 // pred_check
    _
  $region23: #{custom_wav2vec2_forward.5} parent=0 // pred_check_branch
    %22 = sbr.rel (0) target = $region25
  $region24: #{custom_wav2vec2_forward.5} parent=0 // pred_region
    _
  $region25: #{custom_wav2vec2_forward.5} parent=0 // pred_fallthru
    _
  %v24 = vld [vmem:[%s0] sm:$0xff]
  %v25 = vld [vmem:[%s0 + $0x8] sm:$0xff]
  %v26 = vld [vmem:[%s0 + $0x10] sm:$0xff]
  %v27 = vld [vmem:[%s0 + $0x18] sm:$0xff]
  %v28 = vld [vmem:[%s0 + $0x20] sm:$0xff]
  %v29 = vld [vmem:[%s0 + $0x28] sm:$0xff]
  %v30 = vld [vmem:[%s0 + $0x30] sm:$0xff]
  %v31 = vld [vmem:[%s0 + $0x38] sm:$0x3f]
  %v32 = vld [vmem:[%s1] sm:$0xff]
  %v33 = vld [vmem:[%s1 + $0x8] sm:$0xff]
  %v34 = vld [vmem:[%s1 + $0x10] sm:$0xff]
  %v35 = vld [vmem:[%s1 + $0x18] sm:$0xff]
  %v36 = vld [vmem:[%s1 + $0x20] sm:$0xff]
  %v37 = vld [vmem:[%s1 + $0x28] sm:$0xff]
  %v38 = vld [vmem:[%s1 + $0x30] sm:$0xff]
  %v39 = vld [vmem:[%s1 + $0x38] sm:$0xff]
  %v40 = vld [vmem:[%s1 + $0x40] sm:$0xff]
  %v41 = vld [vmem:[%s1 + $0x48] sm:$0xff]
  %v42 = vld [vmem:[%s1 + $0x50] sm:$0xff]
  %v43 = vld [vmem:[%s1 + $0x58] sm:$0xff]
  %v44 = vpack.c.bf16 %v25, %v24
  %v45 = vpack.c.bf16 %v27, %v26
  %v46 = vpack.c.bf16 %v29, %v28
  %v47 = vpack.c.bf16 %v31, %v30
  %v48 = vpack.c.bf16 %v33, %v32
  %v49 = vpack.c.bf16 %v35, %v34
  %v50 = vpack.c.bf16 %v37, %v36
  %v51 = vpack.c.bf16 %v39, %v38
  %v52 = vpack.c.bf16 %v41, %v40
  %v53 = vpack.c.bf16 %v43, %v42
  %vm54 = vcmask 785408
  %v56 = vsel %vm54, %v44, 0
  %v59 = vsel %vm54, %v45, 0
  %v62 = vsel %vm54, %v46, 0
  %v65 = vsel %vm54, %v47, 0
  %67 = vmatprep.subr.bf16.mxu0 0
  %68 = vmatpush1.bf16.msra.mxu0 %v48
  %69 = vmatprep.subr.bf16.mxu0 0
  %70 = vmatpush1.bf16.msra.mxu0 %v49
  %71 = vmatprep.subr.bf16.mxu0 0
  %72 = vmatpush1.bf16.msra.mxu0 %v50
  %73 = vmatprep.subr.bf16.mxu0 0
  %74 = vmatpush1.bf16.msra.mxu0 %v51
  %75 = vmatprep.subr.bf16.mxu0 0
  %76 = vmatpush1.bf16.msra.mxu0 %v52
  %77 = vmatprep.subr.bf16.mxu0 0
  %78 = vmatpush1.bf16.msra.mxu0 %v53
  %79 = vmatprep.subr.bf16.mxu0 0
  %80 = vmatpush1.bf16.msra.mxu0 0
  %81 = vmatprep.subr.bf16.mxu0 0
  %82 = vmatpush1.bf16.msra.mxu0 0
  %83 = vmatprep.subr.bf16.mxu0 0
  %84 = vmatpush1.bf16.msra.mxu0 0
  %85 = vmatprep.subr.bf16.mxu0 0
  %86 = vmatpush1.bf16.msra.mxu0 0
  %87 = vmatprep.subr.bf16.mxu0 0
  %88 = vmatpush1.bf16.msra.mxu0 0
  %89 = vmatprep.subr.bf16.mxu0 0
  %90 = vmatpush1.bf16.msra.mxu0 0
  %91 = vmatprep.subr.bf16.mxu0 0
  %92 = vmatpush1.bf16.msra.mxu0 0
  %93 = vmatprep.subr.bf16.mxu0 0
  %94 = vmatpush1.bf16.msra.mxu0 0
  %95 = vmatprep.subr.bf16.mxu0 0
  %96 = vmatpush1.bf16.msra.mxu0 0
  %97 = vmatprep.subr.bf16.mxu0 0
  %98 = vmatpush1.bf16.msra.mxu0 0
  %99 = vmatprep.mubr.bf16.mxu0 0
  %100 = vmatmul.mubr.bf16.gmra.mrb[0].mxu0 %v56
  %v101 = vpop.f32.mrb[0].mxu0
  %v102 = vadd.f32 0.0, %v101
  %v103 = vpop.f32.mrb[0].mxu0
  %v104 = vpop.f32.mrb[0].mxu0
  %v105 = vadd.f32 0.0, %v104
  %v106 = vpop.f32.mrb[0].mxu0
  %107 = vmatprep.mubr.bf16.mxu0 0
  %108 = vmatmul.mubr.bf16.gmra.mrb[0].mxu0 %v59
  %v109 = vpop.f32.mrb[0].mxu0
  %v110 = vadd.f32 0.0, %v109
  %v111 = vpop.f32.mrb[0].mxu0
  %v112 = vpop.f32.mrb[0].mxu0
  %v113 = vadd.f32 0.0, %v112
  %v114 = vpop.f32.mrb[0].mxu0
  %115 = vmatprep.mubr.bf16.mxu0 0
  %116 = vmatmul.mubr.bf16.gmra.mrb[0].mxu0 %v62
  %v117 = vpop.f32.mrb[0].mxu0
  %v118 = vadd.f32 0.0, %v117
  %v119 = vpop.f32.mrb[0].mxu0
  %v120 = vpop.f32.mrb[0].mxu0
  %v121 = vadd.f32 0.0, %v120
  %v122 = vpop.f32.mrb[0].mxu0
  %123 = vmatprep.mubr.bf16.mxu0 0
  %124 = vmatmul.mubr.bf16.gmra.mrb[0].mxu0 %v65
  %v125 = vpop.f32.mrb[0].mxu0
  %v126 = vadd.f32 0.0, %v125
  %v127 = vpop.f32.mrb[0].mxu0
  %v128 = vpop.f32.mrb[0].mxu0
  %v129 = vadd.f32 0.0, %v128
  %v130 = vpop.f32.mrb[0].mxu0
  %131 = vdwg.mxu0
  %v132 = vmul.f32 %v102, %v102
  %v133 = vmul.f32 %v105, %v105
  %v134 = vmul.f32 %v110, %v110
  %v135 = vmul.f32 %v113, %v113
  %v136 = vmul.f32 %v118, %v118
  %v137 = vmul.f32 %v121, %v121
  %v138 = vmul.f32 %v126, %v126
  %v139 = vmul.f32 %v129, %v129
  %v140 = vmul.f32 %v102, %v132
  %v141 = vmul.f32 %v105, %v133
  %v142 = vmul.f32 %v110, %v134
  %v143 = vmul.f32 %v113, %v135
  %v144 = vmul.f32 %v118, %v136
  %v145 = vmul.f32 %v121, %v137
  %v146 = vmul.f32 %v126, %v138
  %v147 = vmul.f32 %v129, %v139
  %v148 = vmul.f32 %v140, 0.044715
  %v149 = vmul.f32 %v141, 0.044715
  %v150 = vmul.f32 %v142, 0.044715
  %v151 = vmul.f32 %v143, 0.044715
  %v152 = vmul.f32 %v144, 0.044715
  %v153 = vmul.f32 %v145, 0.044715
  %v154 = vmul.f32 %v146, 0.044715
  %v155 = vmul.f32 %v147, 0.044715
  %v156 = vadd.f32 %v102, %v148
  %v157 = vadd.f32 %v105, %v149
  %v158 = vadd.f32 %v110, %v150
  %v159 = vadd.f32 %v113, %v151
  %v160 = vadd.f32 %v118, %v152
  %v161 = vadd.f32 %v121, %v153
  %v162 = vadd.f32 %v126, %v154
  %v163 = vadd.f32 %v129, %v155
  %v164 = vmul.f32 %v156, 0.7978846
  %v165 = vmul.f32 %v157, 0.7978846
  %v166 = vmul.f32 %v158, 0.7978846
  %v167 = vmul.f32 %v159, 0.7978846
  %v168 = vmul.f32 %v160, 0.7978846
  %v169 = vmul.f32 %v161, 0.7978846
  %v170 = vmul.f32 %v162, 0.7978846
  %v171 = vmul.f32 %v163, 0.7978846
  %v172 = vtanh.pop %v164
  %v173 = vtanh.pop %v165
  %v174 = vtanh.pop %v166
  %v175 = vtanh.pop %v167
  %v176 = vtanh.pop %v168
  %v177 = vtanh.pop %v169
  %v178 = vtanh.pop %v170
  %v179 = vtanh.pop %v171
  %v180 = vadd.f32 %v172, 1.0
  %v181 = vadd.f32 %v173, 1.0
  %v182 = vadd.f32 %v174, 1.0
  %v183 = vadd.f32 %v175, 1.0
  %v184 = vadd.f32 %v176, 1.0
  %v185 = vadd.f32 %v177, 1.0
  %v186 = vadd.f32 %v178, 1.0
  %v187 = vadd.f32 %v179, 1.0
  %v188 = vmul.f32 %v180, 0.5
  %v189 = vmul.f32 %v181, 0.5
  %v190 = vmul.f32 %v182, 0.5
  %v191 = vmul.f32 %v183, 0.5
  %v192 = vmul.f32 %v184, 0.5
  %v193 = vmul.f32 %v185, 0.5
  %v194 = vmul.f32 %v186, 0.5
  %v195 = vmul.f32 %v187, 0.5
  %v196 = vmul.f32 %v102, %v188
  %v197 = vmul.f32 %v105, %v189
  %v198 = vmul.f32 %v110, %v190
  %v199 = vmul.f32 %v113, %v191
  %v200 = vmul.f32 %v118, %v192
  %v201 = vmul.f32 %v121, %v193
  %v202 = vmul.f32 %v126, %v194
  %v203 = vmul.f32 %v129, %v195
  %v204 = vld [vmem:[%s2] sm:$0x1]
  %v205 = vld [vmem:[%s3] sm:$0x1]
  %vm206 = vcmask 261120
  %v207 = vsel %vm206, %v196, 0.0
  %208 = vadd.xlane.f32.xlu0 %v207
  %v209 = vpop.xlane.xlu0 %208
  %v210 = vsel %vm206, %v197, 0.0
  %211 = vadd.xlane.f32.xlu0 %v210
  %v212 = vpop.xlane.xlu0 %211
  %v213 = vsel %vm206, %v198, 0.0
  %214 = vadd.xlane.f32.xlu0 %v213
  %v215 = vpop.xlane.xlu0 %214
  %v216 = vsel %vm206, %v199, 0.0
  %217 = vadd.xlane.f32.xlu0 %v216
  %v218 = vpop.xlane.xlu0 %217
  %v219 = vsel %vm206, %v200, 0.0
  %220 = vadd.xlane.f32.xlu0 %v219
  %v221 = vpop.xlane.xlu0 %220
  %v222 = vsel %vm206, %v201, 0.0
  %223 = vadd.xlane.f32.xlu0 %v222
  %v224 = vpop.xlane.xlu0 %223
  %v225 = vsel %vm206, %v202, 0.0
  %226 = vadd.xlane.f32.xlu0 %v225
  %v227 = vpop.xlane.xlu0 %226
  %vm228 = vcmask 259072
  %v229 = vsel %vm228, %v203, 0.0
  %230 = vadd.xlane.f32.xlu0 %v229
  %v231 = vpop.xlane.xlu0 %230
  %v232 = vrcp.pop 32.0
  %v233 = vmul.f32 %v209, %v232
  %v234 = vmul.f32 %v212, %v232
  %v235 = vmul.f32 %v215, %v232
  %v236 = vmul.f32 %v218, %v232
  %v237 = vmul.f32 %v221, %v232
  %v238 = vmul.f32 %v224, %v232
  %v239 = vmul.f32 %v227, %v232
  %v240 = vmul.f32 %v231, %v232
  %v241 = vsub.f32 %v196, %v233
  %v242 = vsub.f32 %v197, %v234
  %v243 = vsub.f32 %v198, %v235
  %v244 = vsub.f32 %v199, %v236
  %v245 = vsub.f32 %v200, %v237
  %v246 = vsub.f32 %v201, %v238
  %v247 = vsub.f32 %v202, %v239
  %v248 = vsub.f32 %v203, %v240
  %v249 = vmul.f32 %v241, %v241
  %v250 = vmul.f32 %v242, %v242
  %v251 = vmul.f32 %v243, %v243
  %v252 = vmul.f32 %v244, %v244
  %v253 = vmul.f32 %v245, %v245
  %v254 = vmul.f32 %v246, %v246
  %v255 = vmul.f32 %v247, %v247
  %v256 = vmul.f32 %v248, %v248
  %v257 = vsel %vm206, %v249, 0.0
  %258 = vadd.xlane.f32.xlu0 %v257
  %v259 = vpop.xlane.xlu0 %258
  %v260 = vsel %vm206, %v250, 0.0
  %261 = vadd.xlane.f32.xlu0 %v260
  %v262 = vpop.xlane.xlu0 %261
  %v263 = vsel %vm206, %v251, 0.0
  %264 = vadd.xlane.f32.xlu0 %v263
  %v265 = vpop.xlane.xlu0 %264
  %v266 = vsel %vm206, %v252, 0.0
  %267 = vadd.xlane.f32.xlu0 %v266
  %v268 = vpop.xlane.xlu0 %267
  %v269 = vsel %vm206, %v253, 0.0
  %270 = vadd.xlane.f32.xlu0 %v269
  %v271 = vpop.xlane.xlu0 %270
  %v272 = vsel %vm206, %v254, 0.0
  %273 = vadd.xlane.f32.xlu0 %v272
  %v274 = vpop.xlane.xlu0 %273
  %v275 = vsel %vm206, %v255, 0.0
  %276 = vadd.xlane.f32.xlu0 %v275
  %v277 = vpop.xlane.xlu0 %276
  %v278 = vsel %vm228, %v256, 0.0
  %279 = vadd.xlane.f32.xlu0 %v278
  %v280 = vpop.xlane.xlu0 %279
  %v281 = vmul.f32 %v259, %v232
  %v282 = vmul.f32 %v262, %v232
  %v283 = vmul.f32 %v265, %v232
  %v284 = vmul.f32 %v268, %v232
  %v285 = vmul.f32 %v271, %v232
  %v286 = vmul.f32 %v274, %v232
  %v287 = vmul.f32 %v277, %v232
  %v288 = vmul.f32 %v280, %v232
  %v289 = vadd.f32 %v281, 1e-05
  %v290 = vadd.f32 %v282, 1e-05
  %v291 = vadd.f32 %v283, 1e-05
  %v292 = vadd.f32 %v284, 1e-05
  %v293 = vadd.f32 %v285, 1e-05
  %v294 = vadd.f32 %v286, 1e-05
  %v295 = vadd.f32 %v287, 1e-05
  %v296 = vadd.f32 %v288, 1e-05
  %v297 = vrsqrt.pop %v289
  %v298 = vrsqrt.pop %v290
  %v299 = vrsqrt.pop %v291
  %v300 = vrsqrt.pop %v292
  %v301 = vrsqrt.pop %v293
  %v302 = vrsqrt.pop %v294
  %v303 = vrsqrt.pop %v295
  %v304 = vrsqrt.pop %v296
  %v305 = vmul.f32 %v241, %v297
  %v306 = vmul.f32 %v242, %v298
  %v307 = vmul.f32 %v243, %v299
  %v308 = vmul.f32 %v244, %v300
  %v309 = vmul.f32 %v245, %v301
  %v310 = vmul.f32 %v246, %v302
  %v311 = vmul.f32 %v247, %v303
  %v312 = vmul.f32 %v248, %v304
  %v314 = vlaneseq
  %v315 = vshrl.u32 %v314, 7
  %v316 = vsub.s32 0, %v315
  %v317 = vrot.slane %v204, %v316
  %v319 = vmul.f32 %v305, %v317
  %v320 = vmul.f32 %v306, %v317
  %v321 = vmul.f32 %v307, %v317
  %v322 = vmul.f32 %v308, %v317
  %v323 = vmul.f32 %v309, %v317
  %v324 = vmul.f32 %v310, %v317
  %v325 = vmul.f32 %v311, %v317
  %v326 = vmul.f32 %v312, %v317
  %v328 = vlaneseq
  %v329 = vshrl.u32 %v328, 7
  %v330 = vsub.s32 0, %v329
  %v331 = vrot.slane %v205, %v330
  %v333 = vadd.f32 %v319, %v331
  %v334 = vadd.f32 %v320, %v331
  %v335 = vadd.f32 %v321, %v331
  %v336 = vadd.f32 %v322, %v331
  %v337 = vadd.f32 %v323, %v331
  %v338 = vadd.f32 %v324, %v331
  %v339 = vadd.f32 %v325, %v331
  %v340 = vadd.f32 %v326, %v331
  %v341 = vld [vmem:[%s4] sm:$0xff]
  %v342 = vld [vmem:[%s4 + $0x8] sm:$0xff]
  %v343 = vld [vmem:[%s4 + $0x10] sm:$0xff]
  %v344 = vld [vmem:[%s4 + $0x18] sm:$0xff]
  %v345 = vpack.c.bf16 %v334, %v333
  %v346 = vpack.c.bf16 %v336, %v335
  %v347 = vpack.c.bf16 %v338, %v337
  %v348 = vpack.c.bf16 %v340, %v339
  %v349 = vpack.c.bf16 %v342, %v341
  %v350 = vpack.c.bf16 %v344, %v343
  %v351 = vld [vmem:[%s5] sm:$0x1]
  %v353 = vlaneseq
  %v354 = vshrl.u32 %v353, 7
  %v355 = vsub.s32 0, %v354
  %v356 = vrot.slane %v351, %v355
  %v359 = vsel %vm206, %v345, 0
  %v362 = vsel %vm206, %v346, 0
  %v365 = vsel %vm206, %v347, 0
  %v368 = vsel %vm206, %v348, 0
  %370 = vmatprep.subr.bf16.mxu0 0
  %371 = vmatpush1.bf16.msra.mxu0 %v349
  %372 = vmatprep.subr.bf16.mxu0 0
  %373 = vmatpush1.bf16.msra.mxu0 %v350
  %374 = vmatprep.subr.bf16.mxu0 0
  %375 = vmatpush1.bf16.msra.mxu0 0
  %376 = vmatprep.subr.bf16.mxu0 0
  %377 = vmatpush1.bf16.msra.mxu0 0
  %378 = vmatprep.subr.bf16.mxu0 0
  %379 = vmatpush1.bf16.msra.mxu0 0
  %380 = vmatprep.subr.bf16.mxu0 0
  %381 = vmatpush1.bf16.msra.mxu0 0
  %382 = vmatprep.subr.bf16.mxu0 0
  %383 = vmatpush1.bf16.msra.mxu0 0
  %384 = vmatprep.subr.bf16.mxu0 0
  %385 = vmatpush1.bf16.msra.mxu0 0
  %386 = vmatprep.subr.bf16.mxu0 0
  %387 = vmatpush1.bf16.msra.mxu0 0
  %388 = vmatprep.subr.bf16.mxu0 0
  %389 = vmatpush1.bf16.msra.mxu0 0
  %390 = vmatprep.subr.bf16.mxu0 0
  %391 = vmatpush1.bf16.msra.mxu0 0
  %392 = vmatprep.subr.bf16.mxu0 0
  %393 = vmatpush1.bf16.msra.mxu0 0
  %394 = vmatprep.subr.bf16.mxu0 0
  %395 = vmatpush1.bf16.msra.mxu0 0
  %396 = vmatprep.subr.bf16.mxu0 0
  %397 = vmatpush1.bf16.msra.mxu0 0
  %398 = vmatprep.subr.bf16.mxu0 0
  %399 = vmatpush1.bf16.msra.mxu0 0
  %400 = vmatprep.subr.bf16.mxu0 0
  %401 = vmatpush1.bf16.msra.mxu0 0
  %402 = vmatprep.mubr.bf16.mxu0 0
  %403 = vmatmul.mubr.bf16.gmra.mrb[0].mxu0 %v359
  %v404 = vpop.f32.mrb[0].mxu0
  %v405 = vadd.f32 %v356, %v404
  %v406 = vpop.f32.mrb[0].mxu0
  %v407 = vpop.f32.mrb[0].mxu0
  %v408 = vadd.f32 %v356, %v407
  %v409 = vpop.f32.mrb[0].mxu0
  %410 = vmatprep.mubr.bf16.mxu0 0
  %411 = vmatmul.mubr.bf16.gmra.mrb[0].mxu0 %v362
  %v412 = vpop.f32.mrb[0].mxu0
  %v413 = vadd.f32 %v356, %v412
  %v414 = vpop.f32.mrb[0].mxu0
  %v415 = vpop.f32.mrb[0].mxu0
  %v416 = vadd.f32 %v356, %v415
  %v417 = vpop.f32.mrb[0].mxu0
  %418 = vmatprep.mubr.bf16.mxu0 0
  %419 = vmatmul.mubr.bf16.gmra.mrb[0].mxu0 %v365
  %v420 = vpop.f32.mrb[0].mxu0
  %v421 = vadd.f32 %v356, %v420
  %v422 = vpop.f32.mrb[0].mxu0
  %v423 = vpop.f32.mrb[0].mxu0
  %v424 = vadd.f32 %v356, %v423
  %v425 = vpop.f32.mrb[0].mxu0
  %426 = vmatprep.mubr.bf16.mxu0 0
  %427 = vmatmul.mubr.bf16.gmra.mrb[0].mxu0 %v368
  %v428 = vpop.f32.mrb[0].mxu0
  %v429 = vadd.f32 %v356, %v428
  %v430 = vpop.f32.mrb[0].mxu0
  %v431 = vpop.f32.mrb[0].mxu0
  %v432 = vadd.f32 %v356, %v431
  %v433 = vpop.f32.mrb[0].mxu0
  %434 = vdwg.mxu0
  %435 = vst.msk [vmem:[%s6] sm:$0xff] %vm206, %v405
  %436 = vst.msk [vmem:[%s6 + $0x8] sm:$0xff] %vm206, %v408
  %437 = vst.msk [vmem:[%s6 + $0x10] sm:$0xff] %vm206, %v413
  %438 = vst.msk [vmem:[%s6 + $0x18] sm:$0xff] %vm206, %v416
  %439 = vst.msk [vmem:[%s6 + $0x20] sm:$0xff] %vm206, %v421
  %440 = vst.msk [vmem:[%s6 + $0x28] sm:$0xff] %vm206, %v424
  %441 = vst.msk [vmem:[%s6 + $0x30] sm:$0xff] %vm206, %v429
  %442 = vst.msk [vmem:[%s6 + $0x38] sm:$0x3f] %vm228, %v432
  // Predicated region
  $region26: #{custom_wav2vec2_forward.5} parent=0 // pred_check
    _
  $region27: #{custom_wav2vec2_forward.5} parent=0 // pred_check_branch
    %444 = sbr.rel (0) target = $region29
  $region28: #{custom_wav2vec2_forward.5} parent=0 // pred_region
    _
  $region29: #{custom_wav2vec2_forward.5} parent=0 // pred_fallthru
    _
  // Predicated region
  $region30: #{custom_wav2vec2_forward.5} parent=0 // pred_check
    _
  $region31: #{custom_wav2vec2_forward.5} parent=0 // pred_check_branch
    %446 = sbr.rel (0) target = $region33
  $region32: #{custom_wav2vec2_forward.5} parent=0 // pred_region
    _
  $region33: #{custom_wav2vec2_forward.5} parent=0 // pred_fallthru
    _

// kernel: custom_wav2vec2_forward.4
$region0: #{custom_wav2vec2_forward.4}
  #allocation0 [shape = 'u32[]', space=smem, size = 0x4, offset = 0x4, fixed_abs, tag = 'smem constant byte address 0x4 - core index']
  #allocation1 [shape = 'u32[144,128]{1,0:T(1,128)}', space=vmem, size = 0x12000, scoped, tag = 'internal scratch']
  %s0 = inlined_call_operand.vmem [shape: f32[2,320], index: 0, kind: input, shape index: {}]
  %s1 = inlined_call_operand.vmem [shape: f32[2,63,10], index: 1, kind: input, shape index: {}]
  %s2 = inlined_call_operand.vmem [shape: f32[10,32], index: 2, kind: input, shape index: {}]
  %s3 = inlined_call_operand.vmem [shape: f32[1,32], index: 3, kind: input, shape index: {}]
  %s4 = inlined_call_operand.vmem [shape: f32[1,32], index: 4, kind: input, shape index: {}]
  %s5 = inlined_call_operand.vmem [shape: f32[2,63,32], index: 5, kind: output, shape index: {}]
  %s6 = sld [smem:[#allocation0]]
  $region30: #{custom_wav2vec2_forward.4} parent=0
    _
  %s8 = ssub.s32 1, %s6
  %s9 = scalar_select 0, %s8, %s6
  // Predicated region
  $region2: #{custom_wav2vec2_forward.4} parent=0 // pred_check
    _
  $region3: #{custom_wav2vec2_forward.4} parent=0 // pred_check_branch
    %11 = sbr.rel (0) target = $region5
  $region4: #{custom_wav2vec2_forward.4} parent=0 // pred_region
    _
  $region5: #{custom_wav2vec2_forward.4} parent=0 // pred_fallthru
    _
  // Predicated region
  $region6: #{custom_wav2vec2_forward.4} parent=0 // pred_check
    _
  $region7: #{custom_wav2vec2_forward.4} parent=0 // pred_check_branch
    %13 = sbr.rel (0) target = $region9
  $region8: #{custom_wav2vec2_forward.4} parent=0 // pred_region
    _
  $region9: #{custom_wav2vec2_forward.4} parent=0 // pred_fallthru
    _
  // Predicated region
  $region10: #{custom_wav2vec2_forward.4} parent=0 // pred_check
    _
  $region11: #{custom_wav2vec2_forward.4} parent=0 // pred_check_branch
    %15 = sbr.rel (0) target = $region13
  $region12: #{custom_wav2vec2_forward.4} parent=0 // pred_region
    _
  $region13: #{custom_wav2vec2_forward.4} parent=0 // pred_fallthru
    _
  // Predicated region
  $region14: #{custom_wav2vec2_forward.4} parent=0 // pred_check
    _
  $region15: #{custom_wav2vec2_forward.4} parent=0 // pred_check_branch
    %17 = sbr.rel (0) target = $region17
  $region16: #{custom_wav2vec2_forward.4} parent=0 // pred_region
    _
  $region17: #{custom_wav2vec2_forward.4} parent=0 // pred_fallthru
    _
  // Predicated region
  $region18: #{custom_wav2vec2_forward.4} parent=0 // pred_check
    _
  $region19: #{custom_wav2vec2_forward.4} parent=0 // pred_check_branch
    %19 = sbr.rel (0) target = $region21
  $region20: #{custom_wav2vec2_forward.4} parent=0 // pred_region
    _
  $region21: #{custom_wav2vec2_forward.4} parent=0 // pred_fallthru
    _
  %v21 = vld [vmem:[%s0] sm:$0x3f]
  %v22 = vld [vmem:[%s3] sm:$0x1]
  %v23 = vld [vmem:[%s4] sm:$0x1]
  %v25 = vlaneseq
  %v26 = vshrl.u32 %v25, 7
  %v27 = vsub.s32 0, %v26
  %v28 = vrot.slane %v21, %v27
  %v29 = vlaneseq
  %v30 = vshrl.u32 %v29, 7
  %v31 = vsub.s32 2, %v30
  %v32 = vrot.slane %v21, %v31
  %v33 = vlaneseq
  %v34 = vshrl.u32 %v33, 7
  %v35 = vsub.s32 4, %v34
  %v36 = vrot.slane %v21, %v35
  %vm40 = vcmask 1040384
  %v41 = vsel %vm40, %v28, 0.0
  %v42 = vsel %vm40, %v32, 0.0
  %v43 = vadd.f32 %v41, %v42
  %vm44 = vcmask 516096
  %v45 = vsel %vm44, %v36, 0.0
  %v46 = vadd.f32 %v43, %v45
  %47 = vadd.xlane.f32.xlu0 %v46
  %v48 = vpop.xlane.xlu0 %47
  %v49 = vrcp.pop 320.0
  %v50 = vmul.f32 %v48, %v49
  %v53 = vunpack.c.l.s4 269488144
  %v54 = vunpack.c.0.s8 %v53
  %v55 = vlaneseq
  %v56 = vshrl.u32 %v55, 7
  %v57 = vsub.s32 %v54, %v56
  %v58 = vrot.slane %v50, %v57
  %v60 = vsub.f32 %v21, %v58
  %v61 = vmul.f32 %v60, %v60
  %v63 = vlaneseq
  %v64 = vshrl.u32 %v63, 7
  %v65 = vsub.s32 0, %v64
  %v66 = vrot.slane %v61, %v65
  %v67 = vlaneseq
  %v68 = vshrl.u32 %v67, 7
  %v69 = vsub.s32 2, %v68
  %v70 = vrot.slane %v61, %v69
  %v71 = vlaneseq
  %v72 = vshrl.u32 %v71, 7
  %v73 = vsub.s32 4, %v72
  %v74 = vrot.slane %v61, %v73
  %v78 = vsel %vm40, %v66, 0.0
  %v79 = vsel %vm40, %v70, 0.0
  %v80 = vadd.f32 %v78, %v79
  %v81 = vsel %vm44, %v74, 0.0
  %v82 = vadd.f32 %v80, %v81
  %83 = vadd.xlane.f32.xlu0 %v82
  %v84 = vpop.xlane.xlu0 %83
  %v85 = vmul.f32 %v84, %v49
  %v86 = vadd.f32 %v85, 1e-07
  %v87 = vrsqrt.pop %v86
  %v88 = vld [vmem:[%s1] sm:$0xff]
  %v89 = vld [vmem:[%s1 + $0x8] sm:$0xff]
  %v90 = vld [vmem:[%s1 + $0x10] sm:$0xff]
  %v91 = vld [vmem:[%s1 + $0x18] sm:$0xff]
  %v92 = vld [vmem:[%s1 + $0x20] sm:$0xff]
  %v93 = vld [vmem:[%s1 + $0x28] sm:$0xff]
  %v94 = vld [vmem:[%s1 + $0x30] sm:$0xff]
  %v95 = vld [vmem:[%s1 + $0x38] sm:$0x7f]
  %v96 = vlaneseq
  %v97 = vshrl.u32 %v96, 7
  %v98 = vsub.s32 0, %v97
  %v99 = vrot.slane %v50, %v98
  %v100 = vsub.f32 %v88, %v99
  %v101 = vsub.f32 %v89, %v99
  %v102 = vsub.f32 %v90, %v99
  %v103 = vsub.f32 %v91, %v99
  %v104 = vsub.f32 %v92, %v99
  %v105 = vsub.f32 %v93, %v99
  %v106 = vsub.f32 %v94, %v99
  %v107 = vsub.f32 %v95, %v99
  %v108 = vlaneseq
  %v109 = vshrl.u32 %v108, 7
  %v110 = vsub.s32 0, %v109
  %v111 = vrot.slane %v87, %v110
  %v112 = vmul.f32 %v100, %v111
  %v113 = vmul.f32 %v101, %v111
  %v114 = vmul.f32 %v102, %v111
  %v115 = vmul.f32 %v103, %v111
  %v116 = vmul.f32 %v104, %v111
  %v117 = vmul.f32 %v105, %v111
  %v118 = vmul.f32 %v106, %v111
  %v119 = vmul.f32 %v107, %v111
  %v120 = vld [vmem:[%s2] sm:$0xff]
  %v121 = vld [vmem:[%s2 + $0x8] sm:$0x3]
  %v122 = vpack.c.bf16 %v113, %v112
  %v123 = vpack.c.bf16 %v115, %v114
  %v124 = vpack.c.bf16 %v117, %v116
  %v125 = vpack.c.bf16 %v119, %v118
  %v126 = vpack.c.bf16 %v121, %v120
  %vm127 = vcmask 80896
  %v129 = vsel %vm127, %v122, 0
  %v132 = vsel %vm127, %v123, 0
  %v135 = vsel %vm127, %v124, 0
  %v138 = vsel %vm127, %v125, 0
  %vm140 = vcmask 1044480
  %v142 = vsel %vm140, %v126, 0
  %144 = vmatprep.subr.bf16.mxu0 0
  %145 = vmatpush1.bf16.msra.mxu0 %v142
  %146 = vmatprep.subr.bf16.mxu0 0
  %147 = vmatpush1.bf16.msra.mxu0 0
  %148 = vmatprep.subr.bf16.mxu0 0
  %149 = vmatpush1.bf16.msra.mxu0 0
  %150 = vmatprep.subr.bf16.mxu0 0
  %151 = vmatpush1.bf16.msra.mxu0 0
  %152 = vmatprep.subr.bf16.mxu0 0
  %153 = vmatpush1.bf16.msra.mxu0 0
  %154 = vmatprep.subr.bf16.mxu0 0
  %155 = vmatpush1.bf16.msra.mxu0 0
  %156 = vmatprep.subr.bf16.mxu0 0
  %157 = vmatpush1.bf16.msra.mxu0 0
  %158 = vmatprep.subr.bf16.mxu0 0
  %159 = vmatpush1.bf16.msra.mxu0 0
  %160 = vmatprep.subr.bf16.mxu0 0
  %161 = vmatpush1.bf16.msra.mxu0 0
  %162 = vmatprep.subr.bf16.mxu0 0
  %163 = vmatpush1.bf16.msra.mxu0 0
  %164 = vmatprep.subr.bf16.mxu0 0
  %165 = vmatpush1.bf16.msra.mxu0 0
  %166 = vmatprep.subr.bf16.mxu0 0
  %167 = vmatpush1.bf16.msra.mxu0 0
  %168 = vmatprep.subr.bf16.mxu0 0
  %169 = vmatpush1.bf16.msra.mxu0 0
  %170 = vmatprep.subr.bf16.mxu0 0
  %171 = vmatpush1.bf16.msra.mxu0 0
  %172 = vmatprep.subr.bf16.mxu0 0
  %173 = vmatpush1.bf16.msra.mxu0 0
  %174 = vmatprep.subr.bf16.mxu0 0
  %175 = vmatpush1.bf16.msra.mxu0 0
  %176 = vmatprep.mubr.bf16.mxu0 0
  %177 = vmatmul.mubr.bf16.gmra.mrb[0].mxu0 %v129
  %v178 = vpop.f32.mrb[0].mxu0
  %v179 = vadd.f32 0.0, %v178
  %v180 = vpop.f32.mrb[0].mxu0
  %v181 = vpop.f32.mrb[0].mxu0
  %v182 = vadd.f32 0.0, %v181
  %v183 = vpop.f32.mrb[0].mxu0
  %184 = vmatprep.mubr.bf16.mxu0 0
  %185 = vmatmul.mubr.bf16.gmra.mrb[0].mxu0 %v132
  %v186 = vpop.f32.mrb[0].mxu0
  %v187 = vadd.f32 0.0, %v186
  %v188 = vpop.f32.mrb[0].mxu0
  %v189 = vpop.f32.mrb[0].mxu0
  %v190 = vadd.f32 0.0, %v189
  %v191 = vpop.f32.mrb[0].mxu0
  %192 = vmatprep.mubr.bf16.mxu0 0
  %193 = vmatmul.mubr.bf16.gmra.mrb[0].mxu0 %v135
  %v194 = vpop.f32.mrb[0].mxu0
  %v195 = vadd.f32 0.0, %v194
  %v196 = vpop.f32.mrb[0].mxu0
  %v197 = vpop.f32.mrb[0].mxu0
  %v198 = vadd.f32 0.0, %v197
  %v199 = vpop.f32.mrb[0].mxu0
  %200 = vmatprep.mubr.bf16.mxu0 0
  %201 = vmatmul.mubr.bf16.gmra.mrb[0].mxu0 %v138
  %v202 = vpop.f32.mrb[0].mxu0
  %v203 = vadd.f32 0.0, %v202
  %v204 = vpop.f32.mrb[0].mxu0
  %v205 = vpop.f32.mrb[0].mxu0
  %v206 = vadd.f32 0.0, %v205
  %v207 = vpop.f32.mrb[0].mxu0
  %208 = vdwg.mxu0
  %vm209 = vcmask 261120
  %v210 = vsel %vm209, %v179, 0.0
  %v211 = vsel %vm209, %v182, 0.0
  %v212 = vadd.f32 %v210, %v211
  %v213 = vsel %vm209, %v187, 0.0
  %v214 = vadd.f32 %v212, %v213
  %v215 = vsel %vm209, %v190, 0.0
  %v216 = vadd.f32 %v214, %v215
  %v217 = vsel %vm209, %v195, 0.0
  %v218 = vadd.f32 %v216, %v217
  %v219 = vsel %vm209, %v198, 0.0
  %v220 = vadd.f32 %v218, %v219
  %v221 = vsel %vm209, %v203, 0.0
  %v222 = vadd.f32 %v220, %v221
  %vm223 = vcmask 260096
  %v224 = vsel %vm223, %v206, 0.0
  %v225 = vadd.f32 %v222, %v224
  %v226 = vrot.slane %v225, 4
  %v227 = vadd.f32 %v225, %v226
  %v228 = vrot.slane %v227, 2
  %v229 = vadd.f32 %v227, %v228
  %v230 = vrot.slane %v229, 1
  %v231 = vadd.f32 %v229, %v230
  %v232 = vrcp.pop 63.0
  %v233 = vmul.f32 %v231, %v232
  %v234 = vsub.f32 %v179, %v233
  %v235 = vsub.f32 %v182, %v233
  %v236 = vsub.f32 %v187, %v233
  %v237 = vsub.f32 %v190, %v233
  %v238 = vsub.f32 %v195, %v233
  %v239 = vsub.f32 %v198, %v233
  %v240 = vsub.f32 %v203, %v233
  %v241 = vsub.f32 %v206, %v233
  %v242 = vmul.f32 %v234, %v234
  %v243 = vmul.f32 %v235, %v235
  %v244 = vmul.f32 %v236, %v236
  %v245 = vmul.f32 %v237, %v237
  %v246 = vmul.f32 %v238, %v238
  %v247 = vmul.f32 %v239, %v239
  %v248 = vmul.f32 %v240, %v240
  %v249 = vmul.f32 %v241, %v241
  %v250 = vsel %vm209, %v242, 0.0
  %v251 = vsel %vm209, %v243, 0.0
  %v252 = vadd.f32 %v250, %v251
  %v253 = vsel %vm209, %v244, 0.0
  %v254 = vadd.f32 %v252, %v253
  %v255 = vsel %vm209, %v245, 0.0
  %v256 = vadd.f32 %v254, %v255
  %v257 = vsel %vm209, %v246, 0.0
  %v258 = vadd.f32 %v256, %v257
  %v259 = vsel %vm209, %v247, 0.0
  %v260 = vadd.f32 %v258, %v259
  %v261 = vsel %vm209, %v248, 0.0
  %v262 = vadd.f32 %v260, %v261
  %v263 = vsel %vm223, %v249, 0.0
  %v264 = vadd.f32 %v262, %v263
  %v265 = vrot.slane %v264, 4
  %v266 = vadd.f32 %v264, %v265
  %v267 = vrot.slane %v266, 2
  %v268 = vadd.f32 %v266, %v267
  %v269 = vrot.slane %v268, 1
  %v270 = vadd.f32 %v268, %v269
  %v271 = vmul.f32 %v270, %v232
  %v272 = vadd.f32 %v271, 1e-05
  %v273 = vrsqrt.pop %v272
  %v274 = vmul.f32 %v234, %v273
  %v275 = vmul.f32 %v235, %v273
  %v276 = vmul.f32 %v236, %v273
  %v277 = vmul.f32 %v237, %v273
  %v278 = vmul.f32 %v238, %v273
  %v279 = vmul.f32 %v239, %v273
  %v280 = vmul.f32 %v240, %v273
  %v281 = vmul.f32 %v241, %v273
  %v283 = vlaneseq
  %v284 = vshrl.u32 %v283, 7
  %v285 = vsub.s32 0, %v284
  %v286 = vrot.slane %v22, %v285
  %v288 = vmul.f32 %v274, %v286
  %v289 = vmul.f32 %v275, %v286
  %v290 = vmul.f32 %v276, %v286
  %v291 = vmul.f32 %v277, %v286
  %v292 = vmul.f32 %v278, %v286
  %v293 = vmul.f32 %v279, %v286
  %v294 = vmul.f32 %v280, %v286
  %v295 = vmul.f32 %v281, %v286
  %v297 = vlaneseq
  %v298 = vshrl.u32 %v297, 7
  %v299 = vsub.s32 0, %v298
  %v300 = vrot.slane %v23, %v299
  %v302 = vadd.f32 %v288, %v300
  %v303 = vadd.f32 %v289, %v300
  %v304 = vadd.f32 %v290, %v300
  %v305 = vadd.f32 %v291, %v300
  %v306 = vadd.f32 %v292, %v300
  %v307 = vadd.f32 %v293, %v300
  %v308 = vadd.f32 %v294, %v300
  %v309 = vadd.f32 %v295, %v300
  %v310 = vmul.f32 %v302, %v302
  %v311 = vmul.f32 %v303, %v303
  %v312 = vmul.f32 %v304, %v304
  %v313 = vmul.f32 %v305, %v305
  %v314 = vmul.f32 %v306, %v306
  %v315 = vmul.f32 %v307, %v307
  %v316 = vmul.f32 %v308, %v308
  %v317 = vmul.f32 %v309, %v309
  %v318 = vmul.f32 %v302, %v310
  %v319 = vmul.f32 %v303, %v311
  %v320 = vmul.f32 %v304, %v312
  %v321 = vmul.f32 %v305, %v313
  %v322 = vmul.f32 %v306, %v314
  %v323 = vmul.f32 %v307, %v315
  %v324 = vmul.f32 %v308, %v316
  %v325 = vmul.f32 %v309, %v317
  %v326 = vmul.f32 %v318, 0.044715
  %v327 = vmul.f32 %v319, 0.044715
  %v328 = vmul.f32 %v320, 0.044715
  %v329 = vmul.f32 %v321, 0.044715
  %v330 = vmul.f32 %v322, 0.044715
  %v331 = vmul.f32 %v323, 0.044715
  %v332 = vmul.f32 %v324, 0.044715
  %v333 = vmul.f32 %v325, 0.044715
  %v334 = vadd.f32 %v302, %v326
  %v335 = vadd.f32 %v303, %v327
  %v336 = vadd.f32 %v304, %v328
  %v337 = vadd.f32 %v305, %v329
  %v338 = vadd.f32 %v306, %v330
  %v339 = vadd.f32 %v307, %v331
  %v340 = vadd.f32 %v308, %v332
  %v341 = vadd.f32 %v309, %v333
  %v342 = vmul.f32 %v334, 0.7978846
  %v343 = vmul.f32 %v335, 0.7978846
  %v344 = vmul.f32 %v336, 0.7978846
  %v345 = vmul.f32 %v337, 0.7978846
  %v346 = vmul.f32 %v338, 0.7978846
  %v347 = vmul.f32 %v339, 0.7978846
  %v348 = vmul.f32 %v340, 0.7978846
  %v349 = vmul.f32 %v341, 0.7978846
  %v350 = vtanh.pop %v342
  %v351 = vtanh.pop %v343
  %v352 = vtanh.pop %v344
  %v353 = vtanh.pop %v345
  %v354 = vtanh.pop %v346
  %v355 = vtanh.pop %v347
  %v356 = vtanh.pop %v348
  %v357 = vtanh.pop %v349
  %v358 = vadd.f32 %v350, 1.0
  %v359 = vadd.f32 %v351, 1.0
  %v360 = vadd.f32 %v352, 1.0
  %v361 = vadd.f32 %v353, 1.0
  %v362 = vadd.f32 %v354, 1.0
  %v363 = vadd.f32 %v355, 1.0
  %v364 = vadd.f32 %v356, 1.0
  %v365 = vadd.f32 %v357, 1.0
  %v366 = vmul.f32 %v358, 0.5
  %v367 = vmul.f32 %v359, 0.5
  %v368 = vmul.f32 %v360, 0.5
  %v369 = vmul.f32 %v361, 0.5
  %v370 = vmul.f32 %v362, 0.5
  %v371 = vmul.f32 %v363, 0.5
  %v372 = vmul.f32 %v364, 0.5
  %v373 = vmul.f32 %v365, 0.5
  %v374 = vmul.f32 %v302, %v366
  %v375 = vmul.f32 %v303, %v367
  %v376 = vmul.f32 %v304, %v368
  %v377 = vmul.f32 %v305, %v369
  %v378 = vmul.f32 %v306, %v370
  %v379 = vmul.f32 %v307, %v371
  %v380 = vmul.f32 %v308, %v372
  %v381 = vmul.f32 %v309, %v373
  %382 = vst.msk [vmem:[%s5] sm:$0xff] %vm209, %v374
  %383 = vst.msk [vmem:[%s5 + $0x8] sm:$0xff] %vm209, %v375
  %384 = vst.msk [vmem:[%s5 + $0x10] sm:$0xff] %vm209, %v376
  %385 = vst.msk [vmem:[%s5 + $0x18] sm:$0xff] %vm209, %v377
  %386 = vst.msk [vmem:[%s5 + $0x20] sm:$0xff] %vm209, %v378
  %387 = vst.msk [vmem:[%s5 + $0x28] sm:$0xff] %vm209, %v379
  %388 = vst.msk [vmem:[%s5 + $0x30] sm:$0xff] %vm209, %v380
  %389 = vst.msk [vmem:[%s5 + $0x38] sm:$0x7f] %vm223, %v381
  %v390 = vlaneseq
  %v391 = vshrl.u32 %v390, 7
  %v392 = vsub.s32 1, %v391
  %v393 = vrot.slane %v21, %v392
  %v394 = vlaneseq
  %v395 = vshrl.u32 %v394, 7
  %v396 = vsub.s32 3, %v395
  %v397 = vrot.slane %v21, %v396
  %v398 = vlaneseq
  %v399 = vshrl.u32 %v398, 7
  %v400 = vsub.s32 5, %v399
  %v401 = vrot.slane %v21, %v400
  %vm405 = vcmask 1041409
  %v406 = vsel %vm405, %v393, 0.0
  %v407 = vsel %vm405, %v397, 0.0
  %v408 = vadd.f32 %v406, %v407
  %vm409 = vcmask 517121
  %v410 = vsel %vm409, %v401, 0.0
  %v411 = vadd.f32 %v408, %v410
  %412 = vadd.xlane.f32.xlu0 %v411
  %v413 = vpop.xlane.xlu0 %412
  %v414 = vmul.f32 %v413, %v49
  %v417 = vunpack.c.l.s4 269488144
  %v418 = vunpack.c.0.s8 %v417
  %v419 = vlaneseq
  %v420 = vshrl.u32 %v419, 7
  %v421 = vsub.s32 %v418, %v420
  %v422 = vrot.slane %v414, %v421
  %v424 = vsub.f32 %v21, %v422
  %v425 = vmul.f32 %v424, %v424
  %v427 = vlaneseq
  %v428 = vshrl.u32 %v427, 7
  %v429 = vsub.s32 1, %v428
  %v430 = vrot.slane %v425, %v429
  %v431 = vlaneseq
  %v432 = vshrl.u32 %v431, 7
  %v433 = vsub.s32 3, %v432
  %v434 = vrot.slane %v425, %v433
  %v435 = vlaneseq
  %v436 = vshrl.u32 %v435, 7
  %v437 = vsub.s32 5, %v436
  %v438 = vrot.slane %v425, %v437
  %v442 = vsel %vm405, %v430, 0.0
  %v443 = vsel %vm405, %v434, 0.0
  %v444 = vadd.f32 %v442, %v443
  %v445 = vsel %vm409, %v438, 0.0
  %v446 = vadd.f32 %v444, %v445
  %447 = vadd.xlane.f32.xlu0 %v446
  %v448 = vpop.xlane.xlu0 %447
  %v449 = vmul.f32 %v448, %v49
  %v450 = vadd.f32 %v449, 1e-07
  %v451 = vrsqrt.pop %v450
  %s452 = scalar_lea.vmem %s1, 64
  %v453 = vld [vmem:[%s452] sm:$0xff]
  %v454 = vld [vmem:[%s452 + $0x8] sm:$0xff]
  %v455 = vld [vmem:[%s452 + $0x10] sm:$0xff]
  %v456 = vld [vmem:[%s452 + $0x18] sm:$0xff]
  %v457 = vld [vmem:[%s452 + $0x20] sm:$0xff]
  %v458 = vld [vmem:[%s452 + $0x28] sm:$0xff]
  %v459 = vld [vmem:[%s452 + $0x30] sm:$0xff]
  %v460 = vld [vmem:[%s452 + $0x38] sm:$0x7f]
  %v461 = vlaneseq
  %v462 = vshrl.u32 %v461, 7
  %v463 = vsub.s32 1, %v462
  %v464 = vrot.slane %v414, %v463
  %v465 = vsub.f32 %v453, %v464
  %v466 = vsub.f32 %v454, %v464
  %v467 = vsub.f32 %v455, %v464
  %v468 = vsub.f32 %v456, %v464
  %v469 = vsub.f32 %v457, %v464
  %v470 = vsub.f32 %v458, %v464
  %v471 = vsub.f32 %v459, %v464
  %v472 = vsub.f32 %v460, %v464
  %v473 = vlaneseq
  %v474 = vshrl.u32 %v473, 7
  %v475 = vsub.s32 1, %v474
  %v476 = vrot.slane %v451, %v475
  %v477 = vmul.f32 %v465, %v476
  %v478 = vmul.f32 %v466, %v476
  %v479 = vmul.f32 %v467, %v476
  %v480 = vmul.f32 %v468, %v476
  %v481 = vmul.f32 %v469, %v476
  %v482 = vmul.f32 %v470, %v476
  %v483 = vmul.f32 %v471, %v476
  %v484 = vmul.f32 %v472, %v476
  %v485 = vld [vmem:[%s2] sm:$0xff]
  %v486 = vld [vmem:[%s2 + $0x8] sm:$0x3]
  %v487 = vpack.c.bf16 %v478, %v477
  %v488 = vpack.c.bf16 %v480, %v479
  %v489 = vpack.c.bf16 %v482, %v481
  %v490 = vpack.c.bf16 %v484, %v483
  %v491 = vpack.c.bf16 %v486, %v485
  %v493 = vsel %vm127, %v487, 0
  %v496 = vsel %vm127, %v488, 0
  %v499 = vsel %vm127, %v489, 0
  %v502 = vsel %vm127, %v490, 0
  %v505 = vsel %vm140, %v491, 0
  %507 = vmatprep.subr.bf16.mxu0 0
  %508 = vmatpush1.bf16.msra.mxu0 %v505
  %509 = vmatprep.subr.bf16.mxu0 0
  %510 = vmatpush1.bf16.msra.mxu0 0
  %511 = vmatprep.subr.bf16.mxu0 0
  %512 = vmatpush1.bf16.msra.mxu0 0
  %513 = vmatprep.subr.bf16.mxu0 0
  %514 = vmatpush1.bf16.msra.mxu0 0
  %515 = vmatprep.subr.bf16.mxu0 0
  %516 = vmatpush1.bf16.msra.mxu0 0
  %517 = vmatprep.subr.bf16.mxu0 0
  %518 = vmatpush1.bf16.msra.mxu0 0
  %519 = vmatprep.subr.bf16.mxu0 0
  %520 = vmatpush1.bf16.msra.mxu0 0
  %521 = vmatprep.subr.bf16.mxu0 0
  %522 = vmatpush1.bf16.msra.mxu0 0
  %523 = vmatprep.subr.bf16.mxu0 0
  %524 = vmatpush1.bf16.msra.mxu0 0
  %525 = vmatprep.subr.bf16.mxu0 0
  %526 = vmatpush1.bf16.msra.mxu0 0
  %527 = vmatprep.subr.bf16.mxu0 0
  %528 = vmatpush1.bf16.msra.mxu0 0
  %529 = vmatprep.subr.bf16.mxu0 0
  %530 = vmatpush1.bf16.msra.mxu0 0
  %531 = vmatprep.subr.bf16.mxu0 0
  %532 = vmatpush1.bf16.msra.mxu0 0
  %533 = vmatprep.subr.bf16.mxu0 0
  %534 = vmatpush1.bf16.msra.mxu0 0
  %535 = vmatprep.subr.bf16.mxu0 0
  %536 = vmatpush1.bf16.msra.mxu0 0
  %537 = vmatprep.subr.bf16.mxu0 0
  %538 = vmatpush1.bf16.msra.mxu0 0
  %539 = vmatprep.mubr.bf16.mxu0 0
  %540 = vmatmul.mubr.bf16.gmra.mrb[0].mxu0 %v493
  %v541 = vpop.f32.mrb[0].mxu0
  %v542 = vadd.f32 0.0, %v541
  %v543 = vpop.f32.mrb[0].mxu0
  %v544 = vpop.f32.mrb[0].mxu0
  %v545 = vadd.f32 0.0, %v544
  %v546 = vpop.f32.mrb[0].mxu0
  %547 = vmatprep.mubr.bf16.mxu0 0
  %548 = vmatmul.mubr.bf16.gmra.mrb[0].mxu0 %v496
  %v549 = vpop.f32.mrb[0].mxu0
  %v550 = vadd.f32 0.0, %v549
  %v551 = vpop.f32.mrb[0].mxu0
  %v552 = vpop.f32.mrb[0].mxu0
  %v553 = vadd.f32 0.0, %v552
  %v554 = vpop.f32.mrb[0].mxu0
  %555 = vmatprep.mubr.bf16.mxu0 0
  %556 = vmatmul.mubr.bf16.gmra.mrb[0].mxu0 %v499
  %v557 = vpop.f32.mrb[0].mxu0
  %v558 = vadd.f32 0.0, %v557
  %v559 = vpop.f32.mrb[0].mxu0
  %v560 = vpop.f32.mrb[0].mxu0
  %v561 = vadd.f32 0.0, %v560
  %v562 = vpop.f32.mrb[0].mxu0
  %563 = vmatprep.mubr.bf16.mxu0 0
  %564 = vmatmul.mubr.bf16.gmra.mrb[0].mxu0 %v502
  %v565 = vpop.f32.mrb[0].mxu0
  %v566 = vadd.f32 0.0, %v565
  %v567 = vpop.f32.mrb[0].mxu0
  %v568 = vpop.f32.mrb[0].mxu0
  %v569 = vadd.f32 0.0, %v568
  %v570 = vpop.f32.mrb[0].mxu0
  %571 = vdwg.mxu0
  %v572 = vsel %vm209, %v542, 0.0
  %v573 = vsel %vm209, %v545, 0.0
  %v574 = vadd.f32 %v572, %v573
  %v575 = vsel %vm209, %v550, 0.0
  %v576 = vadd.f32 %v574, %v575
  %v577 = vsel %vm209, %v553, 0.0
  %v578 = vadd.f32 %v576, %v577
  %v579 = vsel %vm209, %v558, 0.0
  %v580 = vadd.f32 %v578, %v579
  %v581 = vsel %vm209, %v561, 0.0
  %v582 = vadd.f32 %v580, %v581
  %v583 = vsel %vm209, %v566, 0.0
  %v584 = vadd.f32 %v582, %v583
  %v585 = vsel %vm223, %v569, 0.0
  %v586 = vadd.f32 %v584, %v585
  %v587 = vrot.slane %v586, 4
  %v588 = vadd.f32 %v586, %v587
  %v589 = vrot.slane %v588, 2
  %v590 = vadd.f32 %v588, %v589
  %v591 = vrot.slane %v590, 1
  %v592 = vadd.f32 %v590, %v591
  %v593 = vmul.f32 %v592, %v232
  %v594 = vsub.f32 %v542, %v593
  %v595 = vsub.f32 %v545, %v593
  %v596 = vsub.f32 %v550, %v593
  %v597 = vsub.f32 %v553, %v593
  %v598 = vsub.f32 %v558, %v593
  %v599 = vsub.f32 %v561, %v593
  %v600 = vsub.f32 %v566, %v593
  %v601 = vsub.f32 %v569, %v593
  %v602 = vmul.f32 %v594, %v594
  %v603 = vmul.f32 %v595, %v595
  %v604 = vmul.f32 %v596, %v596
  %v605 = vmul.f32 %v597, %v597
  %v606 = vmul.f32 %v598, %v598
  %v607 = vmul.f32 %v599, %v599
  %v608 = vmul.f32 %v600, %v600
  %v609 = vmul.f32 %v601, %v601
  %v610 = vsel %vm209, %v602, 0.0
  %v611 = vsel %vm209, %v603, 0.0
  %v612 = vadd.f32 %v610, %v611
  %v613 = vsel %vm209, %v604, 0.0
  %v614 = vadd.f32 %v612, %v613
  %v615 = vsel %vm209, %v605, 0.0
  %v616 = vadd.f32 %v614, %v615
  %v617 = vsel %vm209, %v606, 0.0
  %v618 = vadd.f32 %v616, %v617
  %v619 = vsel %vm209, %v607, 0.0
  %v620 = vadd.f32 %v618, %v619
  %v621 = vsel %vm209, %v608, 0.0
  %v622 = vadd.f32 %v620, %v621
  %v623 = vsel %vm223, %v609, 0.0
  %v624 = vadd.f32 %v622, %v623
  %v625 = vrot.slane %v624, 4
  %v626 = vadd.f32 %v624, %v625
  %v627 = vrot.slane %v626, 2
  %v628 = vadd.f32 %v626, %v627
  %v629 = vrot.slane %v628, 1
  %v630 = vadd.f32 %v628, %v629
  %v631 = vmul.f32 %v630, %v232
  %v632 = vadd.f32 %v631, 1e-05
  %v633 = vrsqrt.pop %v632
  %v634 = vmul.f32 %v594, %v633
  %v635 = vmul.f32 %v595, %v633
  %v636 = vmul.f32 %v596, %v633
  %v637 = vmul.f32 %v597, %v633
  %v638 = vmul.f32 %v598, %v633
  %v639 = vmul.f32 %v599, %v633
  %v640 = vmul.f32 %v600, %v633
  %v641 = vmul.f32 %v601, %v633
  %v642 = vmul.f32 %v634, %v286
  %v643 = vmul.f32 %v635, %v286
  %v644 = vmul.f32 %v636, %v286
  %v645 = vmul.f32 %v637, %v286
  %v646 = vmul.f32 %v638, %v286
  %v647 = vmul.f32 %v639, %v286
  %v648 = vmul.f32 %v640, %v286
  %v649 = vmul.f32 %v641, %v286
  %v650 = vadd.f32 %v642, %v300
  %v651 = vadd.f32 %v643, %v300
  %v652 = vadd.f32 %v644, %v300
  %v653 = vadd.f32 %v645, %v300
  %v654 = vadd.f32 %v646, %v300
  %v655 = vadd.f32 %v647, %v300
  %v656 = vadd.f32 %v648, %v300
  %v657 = vadd.f32 %v649, %v300
  %v658 = vmul.f32 %v650, %v650
  %v659 = vmul.f32 %v651, %v651
  %v660 = vmul.f32 %v652, %v652
  %v661 = vmul.f32 %v653, %v653
  %v662 = vmul.f32 %v654, %v654
  %v663 = vmul.f32 %v655, %v655
  %v664 = vmul.f32 %v656, %v656
  %v665 = vmul.f32 %v657, %v657
  %v666 = vmul.f32 %v650, %v658
  %v667 = vmul.f32 %v651, %v659
  %v668 = vmul.f32 %v652, %v660
  %v669 = vmul.f32 %v653, %v661
  %v670 = vmul.f32 %v654, %v662
  %v671 = vmul.f32 %v655, %v663
  %v672 = vmul.f32 %v656, %v664
  %v673 = vmul.f32 %v657, %v665
  %v674 = vmul.f32 %v666, 0.044715
  %v675 = vmul.f32 %v667, 0.044715
  %v676 = vmul.f32 %v668, 0.044715
  %v677 = vmul.f32 %v669, 0.044715
  %v678 = vmul.f32 %v670, 0.044715
  %v679 = vmul.f32 %v671, 0.044715
  %v680 = vmul.f32 %v672, 0.044715
  %v681 = vmul.f32 %v673, 0.044715
  %v682 = vadd.f32 %v650, %v674
  %v683 = vadd.f32 %v651, %v675
  %v684 = vadd.f32 %v652, %v676
  %v685 = vadd.f32 %v653, %v677
  %v686 = vadd.f32 %v654, %v678
  %v687 = vadd.f32 %v655, %v679
  %v688 = vadd.f32 %v656, %v680
  %v689 = vadd.f32 %v657, %v681
  %v690 = vmul.f32 %v682, 0.7978846
  %v691 = vmul.f32 %v683, 0.7978846
  %v692 = vmul.f32 %v684, 0.7978846
  %v693 = vmul.f32 %v685, 0.7978846
  %v694 = vmul.f32 %v686, 0.7978846
  %v695 = vmul.f32 %v687, 0.7978846
  %v696 = vmul.f32 %v688, 0.7978846
  %v697 = vmul.f32 %v689, 0.7978846
  %v698 = vtanh.pop %v690
  %v699 = vtanh.pop %v691
  %v700 = vtanh.pop %v692
  %v701 = vtanh.pop %v693
  %v702 = vtanh.pop %v694
  %v703 = vtanh.pop %v695
  %v704 = vtanh.pop %v696
  %v705 = vtanh.pop %v697
  %v706 = vadd.f32 %v698, 1.0
  %v707 = vadd.f32 %v699, 1.0
  %v708 = vadd.f32 %v700, 1.0
  %v709 = vadd.f32 %v701, 1.0
  %v710 = vadd.f32 %v702, 1.0
  %v711 = vadd.f32 %v703, 1.0
  %v712 = vadd.f32 %v704, 1.0
  %v713 = vadd.f32 %v705, 1.0
  %v714 = vmul.f32 %v706, 0.5
  %v715 = vmul.f32 %v707, 0.5
  %v716 = vmul.f32 %v708, 0.5
  %v717 = vmul.f32 %v709, 0.5
  %v718 = vmul.f32 %v710, 0.5
  %v719 = vmul.f32 %v711, 0.5
  %v720 = vmul.f32 %v712, 0.5
  %v721 = vmul.f32 %v713, 0.5
  %v722 = vmul.f32 %v650, %v714
  %v723 = vmul.f32 %v651, %v715
  %v724 = vmul.f32 %v652, %v716
  %v725 = vmul.f32 %v653, %v717
  %v726 = vmul.f32 %v654, %v718
  %v727 = vmul.f32 %v655, %v719
  %v728 = vmul.f32 %v656, %v720
  %v729 = vmul.f32 %v657, %v721
  %s730 = scalar_lea.vmem %s5, 64
  %731 = vst.msk [vmem:[%s730] sm:$0xff] %vm209, %v722
  %732 = vst.msk [vmem:[%s730 + $0x8] sm:$0xff] %vm209, %v723
  %733 = vst.msk [vmem:[%s730 + $0x10] sm:$0xff] %vm209, %v724
  %734 = vst.msk [vmem:[%s730 + $0x18] sm:$0xff] %vm209, %v725
  %735 = vst.msk [vmem:[%s730 + $0x20] sm:$0xff] %vm209, %v726
  %736 = vst.msk [vmem:[%s730 + $0x28] sm:$0xff] %vm209, %v727
  %737 = vst.msk [vmem:[%s730 + $0x30] sm:$0xff] %vm209, %v728
  %738 = vst.msk [vmem:[%s730 + $0x38] sm:$0x7f] %vm223, %v729
  // Predicated region
  $region22: #{custom_wav2vec2_forward.4} parent=0 // pred_check
    _
  $region23: #{custom_wav2vec2_forward.4} parent=0 // pred_check_branch
    %740 = sbr.rel (0) target = $region25
  $region24: #{custom_wav2vec2_forward.4} parent=0 // pred_region
    _
  $region25: #{custom_wav2vec2_forward.4} parent=0 // pred_fallthru
    _
  // Predicated region
  $region26: #{custom_wav2vec2_forward.4} parent=0 // pred_check
    _
  $region27: #{custom_wav2vec2_forward.4} parent=0 // pred_check_branch
    %742 = sbr.rel (0) target = $region29
  $region28: #{custom_wav2vec2_forward.4} parent=0 // pred_region
    _
  $region29: #{custom_wav2vec2_forward.4} parent=0 // pred_fallthru
    _

// kernel: custom_wav2vec2_forward.6
$region0: #{custom_wav2vec2_forward.6}
  #allocation0 [shape = 'u32[]', space=smem, size = 0x4, offset = 0x4, fixed_abs, tag = 'smem constant byte address 0x4 - core index']
  #allocation1 [shape = 'u32[144,128]{1,0:T(1,128)}', space=vmem, size = 0x12000, scoped, tag = 'internal scratch']
  %s0 = inlined_call_operand.vmem [shape: f32[62,32], index: 0, kind: input, shape index: {}]
  %s1 = inlined_call_operand.vmem [shape: f32[2,62,64], index: 1, kind: input, shape index: {}]
  %s2 = inlined_call_operand.vmem [shape: f32[2,64,16], index: 2, kind: input, shape index: {}]
  %s3 = inlined_call_operand.vmem [shape: f32[1,32], index: 3, kind: input, shape index: {}]
  %s4 = inlined_call_operand.vmem [shape: f32[1,32], index: 4, kind: input, shape index: {}]
  %s5 = inlined_call_operand.vmem [shape: f32[1,32], index: 5, kind: input, shape index: {}]
  %s6 = inlined_call_operand.vmem [shape: f32[62,32], index: 6, kind: output, shape index: {}]
  %s7 = sld [smem:[#allocation0]]
  $region34: #{custom_wav2vec2_forward.6} parent=0
    _
  %s9 = ssub.s32 1, %s7
  %s10 = scalar_select 0, %s9, %s7
  // Predicated region
  $region2: #{custom_wav2vec2_forward.6} parent=0 // pred_check
    _
  $region3: #{custom_wav2vec2_forward.6} parent=0 // pred_check_branch
    %12 = sbr.rel (0) target = $region5
  $region4: #{custom_wav2vec2_forward.6} parent=0 // pred_region
    _
  $region5: #{custom_wav2vec2_forward.6} parent=0 // pred_fallthru
    _
  // Predicated region
  $region6: #{custom_wav2vec2_forward.6} parent=0 // pred_check
    _
  $region7: #{custom_wav2vec2_forward.6} parent=0 // pred_check_branch
    %14 = sbr.rel (0) target = $region9
  $region8: #{custom_wav2vec2_forward.6} parent=0 // pred_region
    _
  $region9: #{custom_wav2vec2_forward.6} parent=0 // pred_fallthru
    _
  // Predicated region
  $region10: #{custom_wav2vec2_forward.6} parent=0 // pred_check
    _
  $region11: #{custom_wav2vec2_forward.6} parent=0 // pred_check_branch
    %16 = sbr.rel (0) target = $region13
  $region12: #{custom_wav2vec2_forward.6} parent=0 // pred_region
    _
  $region13: #{custom_wav2vec2_forward.6} parent=0 // pred_fallthru
    _
  // Predicated region
  $region14: #{custom_wav2vec2_forward.6} parent=0 // pred_check
    _
  $region15: #{custom_wav2vec2_forward.6} parent=0 // pred_check_branch
    %18 = sbr.rel (0) target = $region17
  $region16: #{custom_wav2vec2_forward.6} parent=0 // pred_region
    _
  $region17: #{custom_wav2vec2_forward.6} parent=0 // pred_fallthru
    _
  // Predicated region
  $region18: #{custom_wav2vec2_forward.6} parent=0 // pred_check
    _
  $region19: #{custom_wav2vec2_forward.6} parent=0 // pred_check_branch
    %20 = sbr.rel (0) target = $region21
  $region20: #{custom_wav2vec2_forward.6} parent=0 // pred_region
    _
  $region21: #{custom_wav2vec2_forward.6} parent=0 // pred_fallthru
    _
  // Predicated region
  $region22: #{custom_wav2vec2_forward.6} parent=0 // pred_check
    _
  $region23: #{custom_wav2vec2_forward.6} parent=0 // pred_check_branch
    %22 = sbr.rel (0) target = $region25
  $region24: #{custom_wav2vec2_forward.6} parent=0 // pred_region
    _
  $region25: #{custom_wav2vec2_forward.6} parent=0 // pred_fallthru
    _
  %v24 = vld [vmem:[%s0] sm:$0xff]
  %v25 = vld [vmem:[%s0 + $0x8] sm:$0xff]
  %v26 = vld [vmem:[%s0 + $0x10] sm:$0xff]
  %v27 = vld [vmem:[%s0 + $0x18] sm:$0xff]
  %v28 = vld [vmem:[%s0 + $0x20] sm:$0xff]
  %v29 = vld [vmem:[%s0 + $0x28] sm:$0xff]
  %v30 = vld [vmem:[%s0 + $0x30] sm:$0xff]
  %v31 = vld [vmem:[%s0 + $0x38] sm:$0x3f]
  %v32 = vld [vmem:[%s1] sm:$0xff]
  %v33 = vld [vmem:[%s1 + $0x8] sm:$0xff]
  %v34 = vld [vmem:[%s1 + $0x10] sm:$0xff]
  %v35 = vld [vmem:[%s1 + $0x18] sm:$0xff]
  %v36 = vld [vmem:[%s1 + $0x20] sm:$0xff]
  %v37 = vld [vmem:[%s1 + $0x28] sm:$0xff]
  %v38 = vld [vmem:[%s1 + $0x30] sm:$0xff]
  %v39 = vld [vmem:[%s1 + $0x38] sm:$0x3f]
  %v40 = vld [vmem:[%s2] sm:$0xff]
  %v41 = vld [vmem:[%s2 + $0x8] sm:$0xff]
  %v42 = vld [vmem:[%s2 + $0x10] sm:$0xff]
  %v43 = vld [vmem:[%s2 + $0x18] sm:$0xff]
  %v44 = vld [vmem:[%s2 + $0x20] sm:$0xff]
  %v45 = vld [vmem:[%s2 + $0x28] sm:$0xff]
  %v46 = vld [vmem:[%s2 + $0x30] sm:$0xff]
  %v47 = vld [vmem:[%s2 + $0x38] sm:$0xff]
  %v48 = vpack.c.bf16 %v33, %v32
  %v49 = vpack.c.bf16 %v35, %v34
  %v50 = vpack.c.bf16 %v37, %v36
  %v51 = vpack.c.bf16 %v39, %v38
  %v52 = vpack.c.bf16 %v41, %v40
  %v53 = vpack.c.bf16 %v43, %v42
  %v54 = vpack.c.bf16 %v45, %v44
  %v55 = vpack.c.bf16 %v47, %v46
  %vm56 = vcmask 523264
  %v58 = vsel %vm56, %v48, 0
  %v61 = vsel %vm56, %v49, 0
  %v64 = vsel %vm56, %v50, 0
  %v67 = vsel %vm56, %v51, 0
  %69 = vmatprep.subr.bf16.mxu0 0
  %70 = vmatpush1.bf16.msra.mxu0 %v52
  %71 = vmatprep.subr.bf16.mxu0 0
  %72 = vmatpush1.bf16.msra.mxu0 %v53
  %73 = vmatprep.subr.bf16.mxu0 0
  %74 = vmatpush1.bf16.msra.mxu0 %v54
  %75 = vmatprep.subr.bf16.mxu0 0
  %76 = vmatpush1.bf16.msra.mxu0 %v55
  %77 = vmatprep.subr.bf16.mxu0 0
  %78 = vmatpush1.bf16.msra.mxu0 0
  %79 = vmatprep.subr.bf16.mxu0 0
  %80 = vmatpush1.bf16.msra.mxu0 0
  %81 = vmatprep.subr.bf16.mxu0 0
  %82 = vmatpush1.bf16.msra.mxu0 0
  %83 = vmatprep.subr.bf16.mxu0 0
  %84 = vmatpush1.bf16.msra.mxu0 0
  %85 = vmatprep.subr.bf16.mxu0 0
  %86 = vmatpush1.bf16.msra.mxu0 0
  %87 = vmatprep.subr.bf16.mxu0 0
  %88 = vmatpush1.bf16.msra.mxu0 0
  %89 = vmatprep.subr.bf16.mxu0 0
  %90 = vmatpush1.bf16.msra.mxu0 0
  %91 = vmatprep.subr.bf16.mxu0 0
  %92 = vmatpush1.bf16.msra.mxu0 0
  %93 = vmatprep.subr.bf16.mxu0 0
  %94 = vmatpush1.bf16.msra.mxu0 0
  %95 = vmatprep.subr.bf16.mxu0 0
  %96 = vmatpush1.bf16.msra.mxu0 0
  %97 = vmatprep.subr.bf16.mxu0 0
  %98 = vmatpush1.bf16.msra.mxu0 0
  %99 = vmatprep.subr.bf16.mxu0 0
  %100 = vmatpush1.bf16.msra.mxu0 0
  %101 = vmatprep.mubr.bf16.mxu0 0
  %102 = vmatmul.mubr.bf16.gmra.mrb[0].mxu0 %v58
  %v103 = vpop.f32.mrb[0].mxu0
  %v104 = vadd.f32 0.0, %v103
  %v105 = vpop.f32.mrb[0].mxu0
  %v106 = vpop.f32.mrb[0].mxu0
  %v107 = vadd.f32 0.0, %v106
  %v108 = vpop.f32.mrb[0].mxu0
  %109 = vmatprep.mubr.bf16.mxu0 0
  %110 = vmatmul.mubr.bf16.gmra.mrb[0].mxu0 %v61
  %v111 = vpop.f32.mrb[0].mxu0
  %v112 = vadd.f32 0.0, %v111
  %v113 = vpop.f32.mrb[0].mxu0
  %v114 = vpop.f32.mrb[0].mxu0
  %v115 = vadd.f32 0.0, %v114
  %v116 = vpop.f32.mrb[0].mxu0
  %117 = vmatprep.mubr.bf16.mxu0 0
  %118 = vmatmul.mubr.bf16.gmra.mrb[0].mxu0 %v64
  %v119 = vpop.f32.mrb[0].mxu0
  %v120 = vadd.f32 0.0, %v119
  %v121 = vpop.f32.mrb[0].mxu0
  %v122 = vpop.f32.mrb[0].mxu0
  %v123 = vadd.f32 0.0, %v122
  %v124 = vpop.f32.mrb[0].mxu0
  %125 = vmatprep.mubr.bf16.mxu0 0
  %126 = vmatmul.mubr.bf16.gmra.mrb[0].mxu0 %v67
  %v127 = vpop.f32.mrb[0].mxu0
  %v128 = vadd.f32 0.0, %v127
  %v129 = vpop.f32.mrb[0].mxu0
  %v130 = vpop.f32.mrb[0].mxu0
  %v131 = vadd.f32 0.0, %v130
  %v132 = vpop.f32.mrb[0].mxu0
  %133 = vdwg.mxu0
  %s134 = scalar_lea.vmem %s1, 64
  %v135 = vld [vmem:[%s134] sm:$0xff]
  %v136 = vld [vmem:[%s134 + $0x8] sm:$0xff]
  %v137 = vld [vmem:[%s134 + $0x10] sm:$0xff]
  %v138 = vld [vmem:[%s134 + $0x18] sm:$0xff]
  %v139 = vld [vmem:[%s134 + $0x20] sm:$0xff]
  %v140 = vld [vmem:[%s134 + $0x28] sm:$0xff]
  %v141 = vld [vmem:[%s134 + $0x30] sm:$0xff]
  %v142 = vld [vmem:[%s134 + $0x38] sm:$0x3f]
  %s143 = scalar_lea.vmem %s2, 64
  %v144 = vld [vmem:[%s143] sm:$0xff]
  %v145 = vld [vmem:[%s143 + $0x8] sm:$0xff]
  %v146 = vld [vmem:[%s143 + $0x10] sm:$0xff]
  %v147 = vld [vmem:[%s143 + $0x18] sm:$0xff]
  %v148 = vld [vmem:[%s143 + $0x20] sm:$0xff]
  %v149 = vld [vmem:[%s143 + $0x28] sm:$0xff]
  %v150 = vld [vmem:[%s143 + $0x30] sm:$0xff]
  %v151 = vld [vmem:[%s143 + $0x38] sm:$0xff]
  %v152 = vpack.c.bf16 %v136, %v135
  %v153 = vpack.c.bf16 %v138, %v137
  %v154 = vpack.c.bf16 %v140, %v139
  %v155 = vpack.c.bf16 %v142, %v141
  %v156 = vpack.c.bf16 %v145, %v144
  %v157 = vpack.c.bf16 %v147, %v146
  %v158 = vpack.c.bf16 %v149, %v148
  %v159 = vpack.c.bf16 %v151, %v150
  %v161 = vsel %vm56, %v152, 0
  %v164 = vsel %vm56, %v153, 0
  %v167 = vsel %vm56, %v154, 0
  %v170 = vsel %vm56, %v155, 0
  %172 = vmatprep.subr.bf16.mxu0 0
  %173 = vmatpush1.bf16.msra.mxu0 %v156
  %174 = vmatprep.subr.bf16.mxu0 0
  %175 = vmatpush1.bf16.msra.mxu0 %v157
  %176 = vmatprep.subr.bf16.mxu0 0
  %177 = vmatpush1.bf16.msra.mxu0 %v158
  %178 = vmatprep.subr.bf16.mxu0 0
  %179 = vmatpush1.bf16.msra.mxu0 %v159
  %180 = vmatprep.subr.bf16.mxu0 0
  %181 = vmatpush1.bf16.msra.mxu0 0
  %182 = vmatprep.subr.bf16.mxu0 0
  %183 = vmatpush1.bf16.msra.mxu0 0
  %184 = vmatprep.subr.bf16.mxu0 0
  %185 = vmatpush1.bf16.msra.mxu0 0
  %186 = vmatprep.subr.bf16.mxu0 0
  %187 = vmatpush1.bf16.msra.mxu0 0
  %188 = vmatprep.subr.bf16.mxu0 0
  %189 = vmatpush1.bf16.msra.mxu0 0
  %190 = vmatprep.subr.bf16.mxu0 0
  %191 = vmatpush1.bf16.msra.mxu0 0
  %192 = vmatprep.subr.bf16.mxu0 0
  %193 = vmatpush1.bf16.msra.mxu0 0
  %194 = vmatprep.subr.bf16.mxu0 0
  %195 = vmatpush1.bf16.msra.mxu0 0
  %196 = vmatprep.subr.bf16.mxu0 0
  %197 = vmatpush1.bf16.msra.mxu0 0
  %198 = vmatprep.subr.bf16.mxu0 0
  %199 = vmatpush1.bf16.msra.mxu0 0
  %200 = vmatprep.subr.bf16.mxu0 0
  %201 = vmatpush1.bf16.msra.mxu0 0
  %202 = vmatprep.subr.bf16.mxu0 0
  %203 = vmatpush1.bf16.msra.mxu0 0
  %204 = vmatprep.mubr.bf16.mxu0 0
  %205 = vmatmul.mubr.bf16.gmra.mrb[0].mxu0 %v161
  %v206 = vpop.f32.mrb[0].mxu0
  %v207 = vadd.f32 0.0, %v206
  %v208 = vpop.f32.mrb[0].mxu0
  %v209 = vpop.f32.mrb[0].mxu0
  %v210 = vadd.f32 0.0, %v209
  %v211 = vpop.f32.mrb[0].mxu0
  %212 = vmatprep.mubr.bf16.mxu0 0
  %213 = vmatmul.mubr.bf16.gmra.mrb[0].mxu0 %v164
  %v214 = vpop.f32.mrb[0].mxu0
  %v215 = vadd.f32 0.0, %v214
  %v216 = vpop.f32.mrb[0].mxu0
  %v217 = vpop.f32.mrb[0].mxu0
  %v218 = vadd.f32 0.0, %v217
  %v219 = vpop.f32.mrb[0].mxu0
  %220 = vmatprep.mubr.bf16.mxu0 0
  %221 = vmatmul.mubr.bf16.gmra.mrb[0].mxu0 %v167
  %v222 = vpop.f32.mrb[0].mxu0
  %v223 = vadd.f32 0.0, %v222
  %v224 = vpop.f32.mrb[0].mxu0
  %v225 = vpop.f32.mrb[0].mxu0
  %v226 = vadd.f32 0.0, %v225
  %v227 = vpop.f32.mrb[0].mxu0
  %228 = vmatprep.mubr.bf16.mxu0 0
  %229 = vmatmul.mubr.bf16.gmra.mrb[0].mxu0 %v170
  %v230 = vpop.f32.mrb[0].mxu0
  %v231 = vadd.f32 0.0, %v230
  %v232 = vpop.f32.mrb[0].mxu0
  %v233 = vpop.f32.mrb[0].mxu0
  %v234 = vadd.f32 0.0, %v233
  %v235 = vpop.f32.mrb[0].mxu0
  %236 = vdwg.mxu0
  %245 = vrot.lane.b32.xlu0 %v207, 16
  %v246 = vpop.permute.xlu0 %245
  %247 = vrot.lane.b32.xlu0 %v210, 16
  %v248 = vpop.permute.xlu0 %247
  %249 = vrot.lane.b32.xlu0 %v215, 16
  %v250 = vpop.permute.xlu0 %249
  %251 = vrot.lane.b32.xlu0 %v218, 16
  %v252 = vpop.permute.xlu0 %251
  %253 = vrot.lane.b32.xlu0 %v223, 16
  %v254 = vpop.permute.xlu0 %253
  %255 = vrot.lane.b32.xlu0 %v226, 16
  %v256 = vpop.permute.xlu0 %255
  %257 = vrot.lane.b32.xlu0 %v231, 16
  %v258 = vpop.permute.xlu0 %257
  %259 = vrot.lane.b32.xlu0 %v234, 16
  %v260 = vpop.permute.xlu0 %259
  %vm269 = vcmask 130048
  %v270 = vsel %vm269, %v104, %v246
  %v271 = vsel %vm269, %v107, %v248
  %v272 = vsel %vm269, %v112, %v250
  %v273 = vsel %vm269, %v115, %v252
  %v274 = vsel %vm269, %v120, %v254
  %v275 = vsel %vm269, %v123, %v256
  %v276 = vsel %vm269, %v128, %v258
  %v277 = vsel %vm269, %v131, %v260
  %v278 = vld [vmem:[%s3] sm:$0x1]
  %v280 = vlaneseq
  %v281 = vshrl.u32 %v280, 7
  %v282 = vsub.s32 0, %v281
  %v283 = vrot.slane %v278, %v282
  %v285 = vadd.f32 %v270, %v283
  %v286 = vadd.f32 %v271, %v283
  %v287 = vadd.f32 %v272, %v283
  %v288 = vadd.f32 %v273, %v283
  %v289 = vadd.f32 %v274, %v283
  %v290 = vadd.f32 %v275, %v283
  %v291 = vadd.f32 %v276, %v283
  %v292 = vadd.f32 %v277, %v283
  %v293 = vmul.f32 %v285, %v285
  %v294 = vmul.f32 %v286, %v286
  %v295 = vmul.f32 %v287, %v287
  %v296 = vmul.f32 %v288, %v288
  %v297 = vmul.f32 %v289, %v289
  %v298 = vmul.f32 %v290, %v290
  %v299 = vmul.f32 %v291, %v291
  %v300 = vmul.f32 %v292, %v292
  %v301 = vmul.f32 %v285, %v293
  %v302 = vmul.f32 %v286, %v294
  %v303 = vmul.f32 %v287, %v295
  %v304 = vmul.f32 %v288, %v296
  %v305 = vmul.f32 %v289, %v297
  %v306 = vmul.f32 %v290, %v298
  %v307 = vmul.f32 %v291, %v299
  %v308 = vmul.f32 %v292, %v300
  %v309 = vmul.f32 %v301, 0.044715
  %v310 = vmul.f32 %v302, 0.044715
  %v311 = vmul.f32 %v303, 0.044715
  %v312 = vmul.f32 %v304, 0.044715
  %v313 = vmul.f32 %v305, 0.044715
  %v314 = vmul.f32 %v306, 0.044715
  %v315 = vmul.f32 %v307, 0.044715
  %v316 = vmul.f32 %v308, 0.044715
  %v317 = vadd.f32 %v285, %v309
  %v318 = vadd.f32 %v286, %v310
  %v319 = vadd.f32 %v287, %v311
  %v320 = vadd.f32 %v288, %v312
  %v321 = vadd.f32 %v289, %v313
  %v322 = vadd.f32 %v290, %v314
  %v323 = vadd.f32 %v291, %v315
  %v324 = vadd.f32 %v292, %v316
  %v325 = vmul.f32 %v317, 0.7978846
  %v326 = vmul.f32 %v318, 0.7978846
  %v327 = vmul.f32 %v319, 0.7978846
  %v328 = vmul.f32 %v320, 0.7978846
  %v329 = vmul.f32 %v321, 0.7978846
  %v330 = vmul.f32 %v322, 0.7978846
  %v331 = vmul.f32 %v323, 0.7978846
  %v332 = vmul.f32 %v324, 0.7978846
  %v333 = vtanh.pop %v325
  %v334 = vtanh.pop %v326
  %v335 = vtanh.pop %v327
  %v336 = vtanh.pop %v328
  %v337 = vtanh.pop %v329
  %v338 = vtanh.pop %v330
  %v339 = vtanh.pop %v331
  %v340 = vtanh.pop %v332
  %v341 = vadd.f32 %v333, 1.0
  %v342 = vadd.f32 %v334, 1.0
  %v343 = vadd.f32 %v335, 1.0
  %v344 = vadd.f32 %v336, 1.0
  %v345 = vadd.f32 %v337, 1.0
  %v346 = vadd.f32 %v338, 1.0
  %v347 = vadd.f32 %v339, 1.0
  %v348 = vadd.f32 %v340, 1.0
  %v349 = vmul.f32 %v341, 0.5
  %v350 = vmul.f32 %v342, 0.5
  %v351 = vmul.f32 %v343, 0.5
  %v352 = vmul.f32 %v344, 0.5
  %v353 = vmul.f32 %v345, 0.5
  %v354 = vmul.f32 %v346, 0.5
  %v355 = vmul.f32 %v347, 0.5
  %v356 = vmul.f32 %v348, 0.5
  %v357 = vmul.f32 %v285, %v349
  %v358 = vmul.f32 %v286, %v350
  %v359 = vmul.f32 %v287, %v351
  %v360 = vmul.f32 %v288, %v352
  %v361 = vmul.f32 %v289, %v353
  %v362 = vmul.f32 %v290, %v354
  %v363 = vmul.f32 %v291, %v355
  %v364 = vmul.f32 %v292, %v356
  %v365 = vadd.f32 %v24, %v357
  %v366 = vadd.f32 %v25, %v358
  %v367 = vadd.f32 %v26, %v359
  %v368 = vadd.f32 %v27, %v360
  %v369 = vadd.f32 %v28, %v361
  %v370 = vadd.f32 %v29, %v362
  %v371 = vadd.f32 %v30, %v363
  %v372 = vadd.f32 %v31, %v364
  %v373 = vld [vmem:[%s4] sm:$0x1]
  %v374 = vld [vmem:[%s5] sm:$0x1]
  %vm375 = vcmask 261120
  %v376 = vsel %vm375, %v365, 0.0
  %377 = vadd.xlane.f32.xlu0 %v376
  %v378 = vpop.xlane.xlu0 %377
  %v379 = vsel %vm375, %v366, 0.0
  %380 = vadd.xlane.f32.xlu0 %v379
  %v381 = vpop.xlane.xlu0 %380
  %v382 = vsel %vm375, %v367, 0.0
  %383 = vadd.xlane.f32.xlu0 %v382
  %v384 = vpop.xlane.xlu0 %383
  %v385 = vsel %vm375, %v368, 0.0
  %386 = vadd.xlane.f32.xlu0 %v385
  %v387 = vpop.xlane.xlu0 %386
  %v388 = vsel %vm375, %v369, 0.0
  %389 = vadd.xlane.f32.xlu0 %v388
  %v390 = vpop.xlane.xlu0 %389
  %v391 = vsel %vm375, %v370, 0.0
  %392 = vadd.xlane.f32.xlu0 %v391
  %v393 = vpop.xlane.xlu0 %392
  %v394 = vsel %vm375, %v371, 0.0
  %395 = vadd.xlane.f32.xlu0 %v394
  %v396 = vpop.xlane.xlu0 %395
  %vm397 = vcmask 259072
  %v398 = vsel %vm397, %v372, 0.0
  %399 = vadd.xlane.f32.xlu0 %v398
  %v400 = vpop.xlane.xlu0 %399
  %v401 = vrcp.pop 32.0
  %v402 = vmul.f32 %v378, %v401
  %v403 = vmul.f32 %v381, %v401
  %v404 = vmul.f32 %v384, %v401
  %v405 = vmul.f32 %v387, %v401
  %v406 = vmul.f32 %v390, %v401
  %v407 = vmul.f32 %v393, %v401
  %v408 = vmul.f32 %v396, %v401
  %v409 = vmul.f32 %v400, %v401
  %v410 = vsub.f32 %v365, %v402
  %v411 = vsub.f32 %v366, %v403
  %v412 = vsub.f32 %v367, %v404
  %v413 = vsub.f32 %v368, %v405
  %v414 = vsub.f32 %v369, %v406
  %v415 = vsub.f32 %v370, %v407
  %v416 = vsub.f32 %v371, %v408
  %v417 = vsub.f32 %v372, %v409
  %v418 = vmul.f32 %v410, %v410
  %v419 = vmul.f32 %v411, %v411
  %v420 = vmul.f32 %v412, %v412
  %v421 = vmul.f32 %v413, %v413
  %v422 = vmul.f32 %v414, %v414
  %v423 = vmul.f32 %v415, %v415
  %v424 = vmul.f32 %v416, %v416
  %v425 = vmul.f32 %v417, %v417
  %v426 = vsel %vm375, %v418, 0.0
  %427 = vadd.xlane.f32.xlu0 %v426
  %v428 = vpop.xlane.xlu0 %427
  %v429 = vsel %vm375, %v419, 0.0
  %430 = vadd.xlane.f32.xlu0 %v429
  %v431 = vpop.xlane.xlu0 %430
  %v432 = vsel %vm375, %v420, 0.0
  %433 = vadd.xlane.f32.xlu0 %v432
  %v434 = vpop.xlane.xlu0 %433
  %v435 = vsel %vm375, %v421, 0.0
  %436 = vadd.xlane.f32.xlu0 %v435
  %v437 = vpop.xlane.xlu0 %436
  %v438 = vsel %vm375, %v422, 0.0
  %439 = vadd.xlane.f32.xlu0 %v438
  %v440 = vpop.xlane.xlu0 %439
  %v441 = vsel %vm375, %v423, 0.0
  %442 = vadd.xlane.f32.xlu0 %v441
  %v443 = vpop.xlane.xlu0 %442
  %v444 = vsel %vm375, %v424, 0.0
  %445 = vadd.xlane.f32.xlu0 %v444
  %v446 = vpop.xlane.xlu0 %445
  %v447 = vsel %vm397, %v425, 0.0
  %448 = vadd.xlane.f32.xlu0 %v447
  %v449 = vpop.xlane.xlu0 %448
  %v450 = vmul.f32 %v428, %v401
  %v451 = vmul.f32 %v431, %v401
  %v452 = vmul.f32 %v434, %v401
  %v453 = vmul.f32 %v437, %v401
  %v454 = vmul.f32 %v440, %v401
  %v455 = vmul.f32 %v443, %v401
  %v456 = vmul.f32 %v446, %v401
  %v457 = vmul.f32 %v449, %v401
  %v458 = vadd.f32 %v450, 1e-05
  %v459 = vadd.f32 %v451, 1e-05
  %v460 = vadd.f32 %v452, 1e-05
  %v461 = vadd.f32 %v453, 1e-05
  %v462 = vadd.f32 %v454, 1e-05
  %v463 = vadd.f32 %v455, 1e-05
  %v464 = vadd.f32 %v456, 1e-05
  %v465 = vadd.f32 %v457, 1e-05
  %v466 = vrsqrt.pop %v458
  %v467 = vrsqrt.pop %v459
  %v468 = vrsqrt.pop %v460
  %v469 = vrsqrt.pop %v461
  %v470 = vrsqrt.pop %v462
  %v471 = vrsqrt.pop %v463
  %v472 = vrsqrt.pop %v464
  %v473 = vrsqrt.pop %v465
  %v474 = vmul.f32 %v410, %v466
  %v475 = vmul.f32 %v411, %v467
  %v476 = vmul.f32 %v412, %v468
  %v477 = vmul.f32 %v413, %v469
  %v478 = vmul.f32 %v414, %v470
  %v479 = vmul.f32 %v415, %v471
  %v480 = vmul.f32 %v416, %v472
  %v481 = vmul.f32 %v417, %v473
  %v483 = vlaneseq
  %v484 = vshrl.u32 %v483, 7
  %v485 = vsub.s32 0, %v484
  %v486 = vrot.slane %v373, %v485
  %v488 = vmul.f32 %v474, %v486
  %v489 = vmul.f32 %v475, %v486
  %v490 = vmul.f32 %v476, %v486
  %v491 = vmul.f32 %v477, %v486
  %v492 = vmul.f32 %v478, %v486
  %v493 = vmul.f32 %v479, %v486
  %v494 = vmul.f32 %v480, %v486
  %v495 = vmul.f32 %v481, %v486
  %v497 = vlaneseq
  %v498 = vshrl.u32 %v497, 7
  %v499 = vsub.s32 0, %v498
  %v500 = vrot.slane %v374, %v499
  %v502 = vadd.f32 %v488, %v500
  %v503 = vadd.f32 %v489, %v500
  %v504 = vadd.f32 %v490, %v500
  %v505 = vadd.f32 %v491, %v500
  %v506 = vadd.f32 %v492, %v500
  %v507 = vadd.f32 %v493, %v500
  %v508 = vadd.f32 %v494, %v500
  %v509 = vadd.f32 %v495, %v500
  %510 = vst.msk [vmem:[%s6] sm:$0xff] %vm375, %v502
  %511 = vst.msk [vmem:[%s6 + $0x8] sm:$0xff] %vm375, %v503
  %512 = vst.msk [vmem:[%s6 + $0x10] sm:$0xff] %vm375, %v504
  %513 = vst.msk [vmem:[%s6 + $0x18] sm:$0xff] %vm375, %v505
  %514 = vst.msk [vmem:[%s6 + $0x20] sm:$0xff] %vm375, %v506
  %515 = vst.msk [vmem:[%s6 + $0x28] sm:$0xff] %vm375, %v507
  %516 = vst.msk [vmem:[%s6 + $0x30] sm:$0xff] %vm375, %v508
  %517 = vst.msk [vmem:[%s6 + $0x38] sm:$0x3f] %vm397, %v509
  // Predicated region
  $region26: #{custom_wav2vec2_forward.6} parent=0 // pred_check
    _
  $region27: #{custom_wav2vec2_forward.6} parent=0 // pred_check_branch
    %519 = sbr.rel (0) target = $region29
  $region28: #{custom_wav2vec2_forward.6} parent=0 // pred_region
    _
  $region29: #{custom_wav2vec2_forward.6} parent=0 // pred_fallthru
    _
  // Predicated region
  $region30: #{custom_wav2vec2_forward.6} parent=0 // pred_check
    _
  $region31: #{custom_wav2vec2_forward.6} parent=0 // pred_check_branch
    %521 = sbr.rel (0) target = $region33
  $region32: #{custom_wav2vec2_forward.6} parent=0 // pred_region
    _
  $region33: #{custom_wav2vec2_forward.6} parent=0 // pred_fallthru
    _

// kernel: custom_wav2vec2_forward.7
$region0: #{custom_wav2vec2_forward.7}
  #allocation0 [shape = 'u32[]', space=smem, size = 0x4, offset = 0x4, fixed_abs, tag = 'smem constant byte address 0x4 - core index']
  #allocation1 [shape = 'u32[144,128]{1,0:T(1,128)}', space=vmem, size = 0x12000, scoped, tag = 'internal scratch']
  #allocation2 [shape = 'f32[62,32]{1,0:T(8,128)}', space=vmem, size = 0x8000, scoped, tag = 'scratch operand']
  #allocation3 [shape = 'f32[62,32]{1,0:T(8,128)}', space=vmem, size = 0x8000, scoped, tag = 'scratch operand']
  %s0 = inlined_call_operand.vmem [shape: f32[62,32], index: 0, kind: input, shape index: {}]
  %s1 = inlined_call_operand.vmem [shape: f32[62,62], index: 1, kind: input, shape index: {}]
  %s2 = inlined_call_operand.vmem [shape: f32[2,32,32], index: 2, kind: input, shape index: {}]
  %s3 = inlined_call_operand.vmem [shape: f32[2,1,32], index: 3, kind: input, shape index: {}]
  %s4 = inlined_call_operand.vmem [shape: f32[2,32,32], index: 4, kind: input, shape index: {}]
  %s5 = inlined_call_operand.vmem [shape: f32[2,1,32], index: 5, kind: input, shape index: {}]
  %s6 = inlined_call_operand.vmem [shape: f32[2,32,32], index: 6, kind: input, shape index: {}]
  %s7 = inlined_call_operand.vmem [shape: f32[2,1,32], index: 7, kind: input, shape index: {}]
  %s8 = inlined_call_operand.vmem [shape: f32[2,32,32], index: 8, kind: input, shape index: {}]
  %s9 = inlined_call_operand.vmem [shape: f32[2,1,32], index: 9, kind: input, shape index: {}]
  %s10 = inlined_call_operand.vmem [shape: f32[2,1,32], index: 10, kind: input, shape index: {}]
  %s11 = inlined_call_operand.vmem [shape: f32[2,1,32], index: 11, kind: input, shape index: {}]
  %s12 = inlined_call_operand.vmem [shape: f32[2,32,64], index: 12, kind: input, shape index: {}]
  %s13 = inlined_call_operand.vmem [shape: f32[2,1,64], index: 13, kind: input, shape index: {}]
  %s14 = inlined_call_operand.vmem [shape: f32[2,64,32], index: 14, kind: input, shape index: {}]
  %s15 = inlined_call_operand.vmem [shape: f32[2,1,32], index: 15, kind: input, shape index: {}]
  %s16 = inlined_call_operand.vmem [shape: f32[2,1,32], index: 16, kind: input, shape index: {}]
  %s17 = inlined_call_operand.vmem [shape: f32[2,1,32], index: 17, kind: input, shape index: {}]
  %s18 = inlined_call_operand.vmem [shape: f32[62,32], index: 18, kind: output, shape index: {}]
  %s19 = sld [smem:[#allocation0]]
  $region113: #{custom_wav2vec2_forward.7} parent=0
    _
  %s21 = ssub.s32 1, %s19
  %s22 = scalar_select 0, %s21, %s19
  loop: start=0, step=1, limit=4
  $region2: #{custom_wav2vec2_forward.7} parent=0 // loop_pre_header
    _
  $region3: #{custom_wav2vec2_forward.7} parent=0 // loop_header
    %s24 = sphi 0, %s28
    %p25 = scmp.ge.s32.totalorder %s24, 4
    %s32 = sphi 0, %s32
    %s34 = sphi 0, %s32
    %s35 = sphi 0, %s34
    %s49 = sphi 0, %s35
    %s53 = sphi 0, %s53
    %s55 = sphi 0, %s53
    %s56 = sphi 0, %s55
    %s70 = sphi 0, %s56
    %s76 = sphi 0, %s78
    %s79 = sphi 0, %s76
    %s80 = sphi 0, %s79
    %s96 = sphi 0, %s80
    %s102 = sphi 0, %s104
    %s105 = sphi 0, %s102
    %s106 = sphi 0, %s105
    %s122 = sphi 0, %s106
    %s128 = sphi 0, %s130
    %s131 = sphi 0, %s128
    %s132 = sphi 0, %s131
    %s148 = sphi 0, %s132
    %s154 = sphi 0, %s156
    %s157 = sphi 0, %s154
    %s158 = sphi 0, %s157
    %s174 = sphi 0, %s158
    %s180 = sphi 0, %s182
    %s183 = sphi 0, %s180
    %s184 = sphi 0, %s183
    %s200 = sphi 0, %s184
    %s206 = sphi 0, %s208
    %s209 = sphi 0, %s206
    %s210 = sphi 0, %s209
    %s226 = sphi 0, %s210
    %s232 = sphi 0, %s234
    %s235 = sphi 0, %s232
    %s236 = sphi 0, %s235
    %s252 = sphi 0, %s236
    %s258 = sphi 0, %s260
    %s261 = sphi 0, %s258
    %s262 = sphi 0, %s261
    %s278 = sphi 0, %s262
    %s284 = sphi 0, %s286
    %s287 = sphi 0, %s284
    %s288 = sphi 0, %s287
    %s304 = sphi 0, %s288
    %s310 = sphi 0, %s312
    %s313 = sphi 0, %s310
    %s314 = sphi 0, %s313
    %s330 = sphi 0, %s314
    %s336 = sphi 0, %s338
    %s339 = sphi 0, %s336
    %s340 = sphi 0, %s339
    %s356 = sphi 0, %s340
    %s362 = sphi 0, %s364
    %s365 = sphi 0, %s362
    %s366 = sphi 0, %s365
    %s382 = sphi 0, %s366
    %s388 = sphi 0, %s390
    %s391 = sphi 0, %s388
    %s392 = sphi 0, %s391
    %s408 = sphi 0, %s392
    %s414 = sphi 0, %s416
    %s417 = sphi 0, %s414
    %s418 = sphi 0, %s417
    %s434 = sphi 0, %s418
    %s440 = sphi 0, %s442
    %s443 = sphi 0, %s440
    %s444 = sphi 0, %s443
    %s460 = sphi 0, %s444
    %s466 = sphi 0, %s468
    %s469 = sphi 0, %s466
    %s470 = sphi 0, %s469
    %s486 = sphi 0, %s470
    %s490 = sphi 0, %s490
    %s492 = sphi 0, %s490
    %s493 = sphi 0, %s492
    %s507 = sphi 0, %s493
  $region4: #{custom_wav2vec2_forward.7} parent=0 // loop_header_branch
    %27 = sbr.rel (%p25) target = $region8
  $region5: #{custom_wav2vec2_forward.7} parent=0 // loop_body
    %s29 = ssub.s32 %s24, 1
    %s30 = ssub.s32 %s24, 2
    %s31 = sadd.s32 %s24, 1
    %s33 = sadd.s32 %s32, 1
    %p36 = scmp.eq.s32.totalorder %s24, 1
    %p37 = scmp.ne.s32.totalorder %s32, %s34
    %p38 = scmp.eq.s32.totalorder %s24, 0
    %p39 = por %p37, %p38
    %p40 = scmp.ne.s32.totalorder %s32, %s34
    %p41 = scmp.eq.s32.totalorder %s29, 1
    %p42 = por %p40, %p41
    %p43 = scmp.ne.s32.totalorder %s34, %s35
    %p44 = scmp.eq.s32.totalorder %s29, 0
    %p45 = por %p43, %p44
    %p46 = scmp.ne.s32.totalorder %s34, %s35
    %p47 = scmp.eq.s32.totalorder %s30, 1
    %p48 = por %p46, %p47
    %p50 = scmp.ne.s32.totalorder %s35, %s49
    %p51 = scmp.eq.s32.totalorder %s30, 0
    %p52 = por %p50, %p51
    %s54 = sadd.s32 %s53, 1
    %p57 = scmp.eq.s32.totalorder %s24, 1
    %p58 = scmp.ne.s32.totalorder %s53, %s55
    %p59 = scmp.eq.s32.totalorder %s24, 0
    %p60 = por %p58, %p59
    %p61 = scmp.ne.s32.totalorder %s53, %s55
    %p62 = scmp.eq.s32.totalorder %s29, 1
    %p63 = por %p61, %p62
    %p64 = scmp.ne.s32.totalorder %s55, %s56
    %p65 = scmp.eq.s32.totalorder %s29, 0
    %p66 = por %p64, %p65
    %p67 = scmp.ne.s32.totalorder %s55, %s56
    %p68 = scmp.eq.s32.totalorder %s30, 1
    %p69 = por %p67, %p68
    %p71 = scmp.ne.s32.totalorder %s56, %s70
    %p72 = scmp.eq.s32.totalorder %s30, 0
    %p73 = por %p71, %p72
    %s74 = ssub.s32 %s24, %s31
    %p75 = scmp.eq.s32.totalorder %s74, 0
    %s77 = sadd.s32 %s76, 1
    %s78 = scalar_select %p75, %s76, %s77
    %p81 = pneg %p75
    %p82 = scmp.eq.s32.totalorder %s24, 1
    %p83 = por %p81, %p82
    %p84 = scmp.ne.s32.totalorder %s76, %s79
    %p85 = scmp.eq.s32.totalorder %s24, 0
    %p86 = por %p84, %p85
    %p87 = scmp.ne.s32.totalorder %s76, %s79
    %p88 = scmp.eq.s32.totalorder %s29, 1
    %p89 = por %p87, %p88
    %p90 = scmp.ne.s32.totalorder %s79, %s80
    %p91 = scmp.eq.s32.totalorder %s29, 0
    %p92 = por %p90, %p91
    %p93 = scmp.ne.s32.totalorder %s79, %s80
    %p94 = scmp.eq.s32.totalorder %s30, 1
    %p95 = por %p93, %p94
    %p97 = scmp.ne.s32.totalorder %s80, %s96
    %p98 = scmp.eq.s32.totalorder %s30, 0
    %p99 = por %p97, %p98
    %s100 = ssub.s32 %s24, %s31
    %p101 = scmp.eq.s32.totalorder %s100, 0
    %s103 = sadd.s32 %s102, 1
    %s104 = scalar_select %p101, %s102, %s103
    %p107 = pneg %p101
    %p108 = scmp.eq.s32.totalorder %s24, 1
    %p109 = por %p107, %p108
    %p110 = scmp.ne.s32.totalorder %s102, %s105
    %p111 = scmp.eq.s32.totalorder %s24, 0
    %p112 = por %p110, %p111
    %p113 = scmp.ne.s32.totalorder %s102, %s105
    %p114 = scmp.eq.s32.totalorder %s29, 1
    %p115 = por %p113, %p114
    %p116 = scmp.ne.s32.totalorder %s105, %s106
    %p117 = scmp.eq.s32.totalorder %s29, 0
    %p118 = por %p116, %p117
    %p119 = scmp.ne.s32.totalorder %s105, %s106
    %p120 = scmp.eq.s32.totalorder %s30, 1
    %p121 = por %p119, %p120
    %p123 = scmp.ne.s32.totalorder %s106, %s122
    %p124 = scmp.eq.s32.totalorder %s30, 0
    %p125 = por %p123, %p124
    %s126 = ssub.s32 %s24, %s31
    %p127 = scmp.eq.s32.totalorder %s126, 0
    %s129 = sadd.s32 %s128, 1
    %s130 = scalar_select %p127, %s128, %s129
    %p133 = pneg %p127
    %p134 = scmp.eq.s32.totalorder %s24, 1
    %p135 = por %p133, %p134
    %p136 = scmp.ne.s32.totalorder %s128, %s131
    %p137 = scmp.eq.s32.totalorder %s24, 0
    %p138 = por %p136, %p137
    %p139 = scmp.ne.s32.totalorder %s128, %s131
    %p140 = scmp.eq.s32.totalorder %s29, 1
    %p141 = por %p139, %p140
    %p142 = scmp.ne.s32.totalorder %s131, %s132
    %p143 = scmp.eq.s32.totalorder %s29, 0
    %p144 = por %p142, %p143
    %p145 = scmp.ne.s32.totalorder %s131, %s132
    %p146 = scmp.eq.s32.totalorder %s30, 1
    %p147 = por %p145, %p146
    %p149 = scmp.ne.s32.totalorder %s132, %s148
    %p150 = scmp.eq.s32.totalorder %s30, 0
    %p151 = por %p149, %p150
    %s152 = ssub.s32 %s24, %s31
    %p153 = scmp.eq.s32.totalorder %s152, 0
    %s155 = sadd.s32 %s154, 1
    %s156 = scalar_select %p153, %s154, %s155
    %p159 = pneg %p153
    %p160 = scmp.eq.s32.totalorder %s24, 1
    %p161 = por %p159, %p160
    %p162 = scmp.ne.s32.totalorder %s154, %s157
    %p163 = scmp.eq.s32.totalorder %s24, 0
    %p164 = por %p162, %p163
    %p165 = scmp.ne.s32.totalorder %s154, %s157
    %p166 = scmp.eq.s32.totalorder %s29, 1
    %p167 = por %p165, %p166
    %p168 = scmp.ne.s32.totalorder %s157, %s158
    %p169 = scmp.eq.s32.totalorder %s29, 0
    %p170 = por %p168, %p169
    %p171 = scmp.ne.s32.totalorder %s157, %s158
    %p172 = scmp.eq.s32.totalorder %s30, 1
    %p173 = por %p171, %p172
    %p175 = scmp.ne.s32.totalorder %s158, %s174
    %p176 = scmp.eq.s32.totalorder %s30, 0
    %p177 = por %p175, %p176
    %s178 = ssub.s32 %s24, %s31
    %p179 = scmp.eq.s32.totalorder %s178, 0
    %s181 = sadd.s32 %s180, 1
    %s182 = scalar_select %p179, %s180, %s181
    %p185 = pneg %p179
    %p186 = scmp.eq.s32.totalorder %s24, 1
    %p187 = por %p185, %p186
    %p188 = scmp.ne.s32.totalorder %s180, %s183
    %p189 = scmp.eq.s32.totalorder %s24, 0
    %p190 = por %p188, %p189
    %p191 = scmp.ne.s32.totalorder %s180, %s183
    %p192 = scmp.eq.s32.totalorder %s29, 1
    %p193 = por %p191, %p192
    %p194 = scmp.ne.s32.totalorder %s183, %s184
    %p195 = scmp.eq.s32.totalorder %s29, 0
    %p196 = por %p194, %p195
    %p197 = scmp.ne.s32.totalorder %s183, %s184
    %p198 = scmp.eq.s32.totalorder %s30, 1
    %p199 = por %p197, %p198
    %p201 = scmp.ne.s32.totalorder %s184, %s200
    %p202 = scmp.eq.s32.totalorder %s30, 0
    %p203 = por %p201, %p202
    %s204 = ssub.s32 %s24, %s31
    %p205 = scmp.eq.s32.totalorder %s204, 0
    %s207 = sadd.s32 %s206, 1
    %s208 = scalar_select %p205, %s206, %s207
    %p211 = pneg %p205
    %p212 = scmp.eq.s32.totalorder %s24, 1
    %p213 = por %p211, %p212
    %p214 = scmp.ne.s32.totalorder %s206, %s209
    %p215 = scmp.eq.s32.totalorder %s24, 0
    %p216 = por %p214, %p215
    %p217 = scmp.ne.s32.totalorder %s206, %s209
    %p218 = scmp.eq.s32.totalorder %s29, 1
    %p219 = por %p217, %p218
    %p220 = scmp.ne.s32.totalorder %s209, %s210
    %p221 = scmp.eq.s32.totalorder %s29, 0
    %p222 = por %p220, %p221
    %p223 = scmp.ne.s32.totalorder %s209, %s210
    %p224 = scmp.eq.s32.totalorder %s30, 1
    %p225 = por %p223, %p224
    %p227 = scmp.ne.s32.totalorder %s210, %s226
    %p228 = scmp.eq.s32.totalorder %s30, 0
    %p229 = por %p227, %p228
    %s230 = ssub.s32 %s24, %s31
    %p231 = scmp.eq.s32.totalorder %s230, 0
    %s233 = sadd.s32 %s232, 1
    %s234 = scalar_select %p231, %s232, %s233
    %p237 = pneg %p231
    %p238 = scmp.eq.s32.totalorder %s24, 1
    %p239 = por %p237, %p238
    %p240 = scmp.ne.s32.totalorder %s232, %s235
    %p241 = scmp.eq.s32.totalorder %s24, 0
    %p242 = por %p240, %p241
    %p243 = scmp.ne.s32.totalorder %s232, %s235
    %p244 = scmp.eq.s32.totalorder %s29, 1
    %p245 = por %p243, %p244
    %p246 = scmp.ne.s32.totalorder %s235, %s236
    %p247 = scmp.eq.s32.totalorder %s29, 0
    %p248 = por %p246, %p247
    %p249 = scmp.ne.s32.totalorder %s235, %s236
    %p250 = scmp.eq.s32.totalorder %s30, 1
    %p251 = por %p249, %p250
    %p253 = scmp.ne.s32.totalorder %s236, %s252
    %p254 = scmp.eq.s32.totalorder %s30, 0
    %p255 = por %p253, %p254
    %s256 = ssub.s32 %s24, %s31
    %p257 = scmp.eq.s32.totalorder %s256, 0
    %s259 = sadd.s32 %s258, 1
    %s260 = scalar_select %p257, %s258, %s259
    %p263 = pneg %p257
    %p264 = scmp.eq.s32.totalorder %s24, 1
    %p265 = por %p263, %p264
    %p266 = scmp.ne.s32.totalorder %s258, %s261
    %p267 = scmp.eq.s32.totalorder %s24, 0
    %p268 = por %p266, %p267
    %p269 = scmp.ne.s32.totalorder %s258, %s261
    %p270 = scmp.eq.s32.totalorder %s29, 1
    %p271 = por %p269, %p270
    %p272 = scmp.ne.s32.totalorder %s261, %s262
    %p273 = scmp.eq.s32.totalorder %s29, 0
    %p274 = por %p272, %p273
    %p275 = scmp.ne.s32.totalorder %s261, %s262
    %p276 = scmp.eq.s32.totalorder %s30, 1
    %p277 = por %p275, %p276
    %p279 = scmp.ne.s32.totalorder %s262, %s278
    %p280 = scmp.eq.s32.totalorder %s30, 0
    %p281 = por %p279, %p280
    %s282 = ssub.s32 %s24, %s31
    %p283 = scmp.eq.s32.totalorder %s282, 0
    %s285 = sadd.s32 %s284, 1
    %s286 = scalar_select %p283, %s284, %s285
    %p289 = pneg %p283
    %p290 = scmp.eq.s32.totalorder %s24, 1
    %p291 = por %p289, %p290
    %p292 = scmp.ne.s32.totalorder %s284, %s287
    %p293 = scmp.eq.s32.totalorder %s24, 0
    %p294 = por %p292, %p293
    %p295 = scmp.ne.s32.totalorder %s284, %s287
    %p296 = scmp.eq.s32.totalorder %s29, 1
    %p297 = por %p295, %p296
    %p298 = scmp.ne.s32.totalorder %s287, %s288
    %p299 = scmp.eq.s32.totalorder %s29, 0
    %p300 = por %p298, %p299
    %p301 = scmp.ne.s32.totalorder %s287, %s288
    %p302 = scmp.eq.s32.totalorder %s30, 1
    %p303 = por %p301, %p302
    %p305 = scmp.ne.s32.totalorder %s288, %s304
    %p306 = scmp.eq.s32.totalorder %s30, 0
    %p307 = por %p305, %p306
    %s308 = ssub.s32 %s24, %s31
    %p309 = scmp.eq.s32.totalorder %s308, 0
    %s311 = sadd.s32 %s310, 1
    %s312 = scalar_select %p309, %s310, %s311
    %p315 = pneg %p309
    %p316 = scmp.eq.s32.totalorder %s24, 1
    %p317 = por %p315, %p316
    %p318 = scmp.ne.s32.totalorder %s310, %s313
    %p319 = scmp.eq.s32.totalorder %s24, 0
    %p320 = por %p318, %p319
    %p321 = scmp.ne.s32.totalorder %s310, %s313
    %p322 = scmp.eq.s32.totalorder %s29, 1
    %p323 = por %p321, %p322
    %p324 = scmp.ne.s32.totalorder %s313, %s314
    %p325 = scmp.eq.s32.totalorder %s29, 0
    %p326 = por %p324, %p325
    %p327 = scmp.ne.s32.totalorder %s313, %s314
    %p328 = scmp.eq.s32.totalorder %s30, 1
    %p329 = por %p327, %p328
    %p331 = scmp.ne.s32.totalorder %s314, %s330
    %p332 = scmp.eq.s32.totalorder %s30, 0
    %p333 = por %p331, %p332
    %s334 = ssub.s32 %s24, %s31
    %p335 = scmp.eq.s32.totalorder %s334, 0
    %s337 = sadd.s32 %s336, 1
    %s338 = scalar_select %p335, %s336, %s337
    %p341 = pneg %p335
    %p342 = scmp.eq.s32.totalorder %s24, 1
    %p343 = por %p341, %p342
    %p344 = scmp.ne.s32.totalorder %s336, %s339
    %p345 = scmp.eq.s32.totalorder %s24, 0
    %p346 = por %p344, %p345
    %p347 = scmp.ne.s32.totalorder %s336, %s339
    %p348 = scmp.eq.s32.totalorder %s29, 1
    %p349 = por %p347, %p348
    %p350 = scmp.ne.s32.totalorder %s339, %s340
    %p351 = scmp.eq.s32.totalorder %s29, 0
    %p352 = por %p350, %p351
    %p353 = scmp.ne.s32.totalorder %s339, %s340
    %p354 = scmp.eq.s32.totalorder %s30, 1
    %p355 = por %p353, %p354
    %p357 = scmp.ne.s32.totalorder %s340, %s356
    %p358 = scmp.eq.s32.totalorder %s30, 0
    %p359 = por %p357, %p358
    %s360 = ssub.s32 %s24, %s31
    %p361 = scmp.eq.s32.totalorder %s360, 0
    %s363 = sadd.s32 %s362, 1
    %s364 = scalar_select %p361, %s362, %s363
    %p367 = pneg %p361
    %p368 = scmp.eq.s32.totalorder %s24, 1
    %p369 = por %p367, %p368
    %p370 = scmp.ne.s32.totalorder %s362, %s365
    %p371 = scmp.eq.s32.totalorder %s24, 0
    %p372 = por %p370, %p371
    %p373 = scmp.ne.s32.totalorder %s362, %s365
    %p374 = scmp.eq.s32.totalorder %s29, 1
    %p375 = por %p373, %p374
    %p376 = scmp.ne.s32.totalorder %s365, %s366
    %p377 = scmp.eq.s32.totalorder %s29, 0
    %p378 = por %p376, %p377
    %p379 = scmp.ne.s32.totalorder %s365, %s366
    %p380 = scmp.eq.s32.totalorder %s30, 1
    %p381 = por %p379, %p380
    %p383 = scmp.ne.s32.totalorder %s366, %s382
    %p384 = scmp.eq.s32.totalorder %s30, 0
    %p385 = por %p383, %p384
    %s386 = ssub.s32 %s24, %s31
    %p387 = scmp.eq.s32.totalorder %s386, 0
    %s389 = sadd.s32 %s388, 1
    %s390 = scalar_select %p387, %s388, %s389
    %p393 = pneg %p387
    %p394 = scmp.eq.s32.totalorder %s24, 1
    %p395 = por %p393, %p394
    %p396 = scmp.ne.s32.totalorder %s388, %s391
    %p397 = scmp.eq.s32.totalorder %s24, 0
    %p398 = por %p396, %p397
    %p399 = scmp.ne.s32.totalorder %s388, %s391
    %p400 = scmp.eq.s32.totalorder %s29, 1
    %p401 = por %p399, %p400
    %p402 = scmp.ne.s32.totalorder %s391, %s392
    %p403 = scmp.eq.s32.totalorder %s29, 0
    %p404 = por %p402, %p403
    %p405 = scmp.ne.s32.totalorder %s391, %s392
    %p406 = scmp.eq.s32.totalorder %s30, 1
    %p407 = por %p405, %p406
    %p409 = scmp.ne.s32.totalorder %s392, %s408
    %p410 = scmp.eq.s32.totalorder %s30, 0
    %p411 = por %p409, %p410
    %s412 = ssub.s32 %s24, %s31
    %p413 = scmp.eq.s32.totalorder %s412, 0
    %s415 = sadd.s32 %s414, 1
    %s416 = scalar_select %p413, %s414, %s415
    %p419 = pneg %p413
    %p420 = scmp.eq.s32.totalorder %s24, 1
    %p421 = por %p419, %p420
    %p422 = scmp.ne.s32.totalorder %s414, %s417
    %p423 = scmp.eq.s32.totalorder %s24, 0
    %p424 = por %p422, %p423
    %p425 = scmp.ne.s32.totalorder %s414, %s417
    %p426 = scmp.eq.s32.totalorder %s29, 1
    %p427 = por %p425, %p426
    %p428 = scmp.ne.s32.totalorder %s417, %s418
    %p429 = scmp.eq.s32.totalorder %s29, 0
    %p430 = por %p428, %p429
    %p431 = scmp.ne.s32.totalorder %s417, %s418
    %p432 = scmp.eq.s32.totalorder %s30, 1
    %p433 = por %p431, %p432
    %p435 = scmp.ne.s32.totalorder %s418, %s434
    %p436 = scmp.eq.s32.totalorder %s30, 0
    %p437 = por %p435, %p436
    %s438 = ssub.s32 %s24, %s31
    %p439 = scmp.eq.s32.totalorder %s438, 0
    %s441 = sadd.s32 %s440, 1
    %s442 = scalar_select %p439, %s440, %s441
    %p445 = pneg %p439
    %p446 = scmp.eq.s32.totalorder %s24, 1
    %p447 = por %p445, %p446
    %p448 = scmp.ne.s32.totalorder %s440, %s443
    %p449 = scmp.eq.s32.totalorder %s24, 0
    %p450 = por %p448, %p449
    %p451 = scmp.ne.s32.totalorder %s440, %s443
    %p452 = scmp.eq.s32.totalorder %s29, 1
    %p453 = por %p451, %p452
    %p454 = scmp.ne.s32.totalorder %s443, %s444
    %p455 = scmp.eq.s32.totalorder %s29, 0
    %p456 = por %p454, %p455
    %p457 = scmp.ne.s32.totalorder %s443, %s444
    %p458 = scmp.eq.s32.totalorder %s30, 1
    %p459 = por %p457, %p458
    %p461 = scmp.ne.s32.totalorder %s444, %s460
    %p462 = scmp.eq.s32.totalorder %s30, 0
    %p463 = por %p461, %p462
    %s464 = ssub.s32 %s24, %s31
    %p465 = scmp.eq.s32.totalorder %s464, 0
    %s467 = sadd.s32 %s466, 1
    %s468 = scalar_select %p465, %s466, %s467
    %p471 = pneg %p465
    %p472 = scmp.eq.s32.totalorder %s24, 1
    %p473 = por %p471, %p472
    %p474 = scmp.ne.s32.totalorder %s466, %s469
    %p475 = scmp.eq.s32.totalorder %s24, 0
    %p476 = por %p474, %p475
    %p477 = scmp.ne.s32.totalorder %s466, %s469
    %p478 = scmp.eq.s32.totalorder %s29, 1
    %p479 = por %p477, %p478
    %p480 = scmp.ne.s32.totalorder %s469, %s470
    %p481 = scmp.eq.s32.totalorder %s29, 0
    %p482 = por %p480, %p481
    %p483 = scmp.ne.s32.totalorder %s469, %s470
    %p484 = scmp.eq.s32.totalorder %s30, 1
    %p485 = por %p483, %p484
    %p487 = scmp.ne.s32.totalorder %s470, %s486
    %p488 = scmp.eq.s32.totalorder %s30, 0
    %p489 = por %p487, %p488
    %s491 = sadd.s32 %s490, 1
    %p494 = scmp.eq.s32.totalorder %s24, 1
    %p495 = scmp.ne.s32.totalorder %s490, %s492
    %p496 = scmp.eq.s32.totalorder %s24, 0
    %p497 = por %p495, %p496
    %p498 = scmp.ne.s32.totalorder %s490, %s492
    %p499 = scmp.eq.s32.totalorder %s29, 1
    %p500 = por %p498, %p499
    %p501 = scmp.ne.s32.totalorder %s492, %s493
    %p502 = scmp.eq.s32.totalorder %s29, 0
    %p503 = por %p501, %p502
    %p504 = scmp.ne.s32.totalorder %s492, %s493
    %p505 = scmp.eq.s32.totalorder %s30, 1
    %p506 = por %p504, %p505
    %p508 = scmp.ne.s32.totalorder %s493, %s507
    %p509 = scmp.eq.s32.totalorder %s30, 0
    %p510 = por %p508, %p509
    %p511 = scmp.le.s32.totalorder 1, %s24
    %p512 = scmp.lt.s32.totalorder %s24, 3
    %p513 = pnand %p511, %p512
    %p514 = pneg %p513
    // Predicated region
    $region9: #{custom_wav2vec2_forward.7} parent=5 // pred_check
      _
    $region10: #{custom_wav2vec2_forward.7} parent=5 // pred_check_branch
      %516 = sbr.rel (%p513) target = $region12
    $region11: #{custom_wav2vec2_forward.7} parent=5 // pred_region
      %s517 = ssub.s32 %s24, 1
      // Predicated region
      $region13: #{custom_wav2vec2_forward.7} parent=11 // pred_check
        %p518 = pneg %p45
      $region14: #{custom_wav2vec2_forward.7} parent=11 // pred_check_branch
        %520 = sbr.rel (%p518) target = $region16
      $region15: #{custom_wav2vec2_forward.7} parent=11 // pred_region
        _
      $region16: #{custom_wav2vec2_forward.7} parent=11 // pred_fallthru
        _
      // Predicated region
      $region17: #{custom_wav2vec2_forward.7} parent=11 // pred_check
        %p521 = pneg %p66
      $region18: #{custom_wav2vec2_forward.7} parent=11 // pred_check_branch
        %523 = sbr.rel (%p521) target = $region20
      $region19: #{custom_wav2vec2_forward.7} parent=11 // pred_region
        _
      $region20: #{custom_wav2vec2_forward.7} parent=11 // pred_fallthru
        _
    $region12: #{custom_wav2vec2_forward.7} parent=5 // pred_fallthru
      _
    %p524 = scmp.lt.s32.totalorder %s24, 2
    // Predicated region
    $region21: #{custom_wav2vec2_forward.7} parent=5 // pred_check
      %p525 = pneg %p524
    $region22: #{custom_wav2vec2_forward.7} parent=5 // pred_check_branch
      %527 = sbr.rel (%p525) target = $region24
    $region23: #{custom_wav2vec2_forward.7} parent=5 // pred_region
      // Predicated region
      $region25: #{custom_wav2vec2_forward.7} parent=23 // pred_check
        %p528 = pneg %p86
      $region26: #{custom_wav2vec2_forward.7} parent=23 // pred_check_branch
        %530 = sbr.rel (%p528) target = $region28
      $region27: #{custom_wav2vec2_forward.7} parent=23 // pred_region
        %p531 = scmp.lt.s32.totalorder %s24, 1
        %s532 = scalar_select %p531, %s24, 1
        %s533 = smul.addr %s532, 4
        %s534 = smul.addr %s533, 8
        %s535 = scalar_lea.vmem %s2, %s534
      $region28: #{custom_wav2vec2_forward.7} parent=23 // pred_fallthru
        _
      // Predicated region
      $region29: #{custom_wav2vec2_forward.7} parent=23 // pred_check
        %p536 = pneg %p112
      $region30: #{custom_wav2vec2_forward.7} parent=23 // pred_check_branch
        %538 = sbr.rel (%p536) target = $region32
      $region31: #{custom_wav2vec2_forward.7} parent=23 // pred_region
        %p539 = scmp.lt.s32.totalorder %s24, 1
        %s540 = scalar_select %p539, %s24, 1
        %s541 = scalar_lea.vmem %s3, %s540
      $region32: #{custom_wav2vec2_forward.7} parent=23 // pred_fallthru
        _
      // Predicated region
      $region33: #{custom_wav2vec2_forward.7} parent=23 // pred_check
        %p542 = pneg %p138
      $region34: #{custom_wav2vec2_forward.7} parent=23 // pred_check_branch
        %544 = sbr.rel (%p542) target = $region36
      $region35: #{custom_wav2vec2_forward.7} parent=23 // pred_region
        %p545 = scmp.lt.s32.totalorder %s24, 1
        %s546 = scalar_select %p545, %s24, 1
        %s547 = smul.addr %s546, 4
        %s548 = smul.addr %s547, 8
        %s549 = scalar_lea.vmem %s4, %s548
      $region36: #{custom_wav2vec2_forward.7} parent=23 // pred_fallthru
        _
      // Predicated region
      $region37: #{custom_wav2vec2_forward.7} parent=23 // pred_check
        %p550 = pneg %p164
      $region38: #{custom_wav2vec2_forward.7} parent=23 // pred_check_branch
        %552 = sbr.rel (%p550) target = $region40
      $region39: #{custom_wav2vec2_forward.7} parent=23 // pred_region
        %p553 = scmp.lt.s32.totalorder %s24, 1
        %s554 = scalar_select %p553, %s24, 1
        %s555 = scalar_lea.vmem %s5, %s554
      $region40: #{custom_wav2vec2_forward.7} parent=23 // pred_fallthru
        _
      // Predicated region
      $region41: #{custom_wav2vec2_forward.7} parent=23 // pred_check
        %p556 = pneg %p190
      $region42: #{custom_wav2vec2_forward.7} parent=23 // pred_check_branch
        %558 = sbr.rel (%p556) target = $region44
      $region43: #{custom_wav2vec2_forward.7} parent=23 // pred_region
        %p559 = scmp.lt.s32.totalorder %s24, 1
        %s560 = scalar_select %p559, %s24, 1
        %s561 = smul.addr %s560, 4
        %s562 = smul.addr %s561, 8
        %s563 = scalar_lea.vmem %s6, %s562
      $region44: #{custom_wav2vec2_forward.7} parent=23 // pred_fallthru
        _
      // Predicated region
      $region45: #{custom_wav2vec2_forward.7} parent=23 // pred_check
        %p564 = pneg %p216
      $region46: #{custom_wav2vec2_forward.7} parent=23 // pred_check_branch
        %566 = sbr.rel (%p564) target = $region48
      $region47: #{custom_wav2vec2_forward.7} parent=23 // pred_region
        %p567 = scmp.lt.s32.totalorder %s24, 1
        %s568 = scalar_select %p567, %s24, 1
        %s569 = scalar_lea.vmem %s7, %s568
      $region48: #{custom_wav2vec2_forward.7} parent=23 // pred_fallthru
        _
      // Predicated region
      $region49: #{custom_wav2vec2_forward.7} parent=23 // pred_check
        %p570 = pneg %p242
      $region50: #{custom_wav2vec2_forward.7} parent=23 // pred_check_branch
        %572 = sbr.rel (%p570) target = $region52
      $region51: #{custom_wav2vec2_forward.7} parent=23 // pred_region
        %p573 = scmp.lt.s32.totalorder %s24, 1
        %s574 = scalar_select %p573, %s24, 1
        %s575 = smul.addr %s574, 4
        %s576 = smul.addr %s575, 8
        %s577 = scalar_lea.vmem %s8, %s576
      $region52: #{custom_wav2vec2_forward.7} parent=23 // pred_fallthru
        _
      // Predicated region
      $region53: #{custom_wav2vec2_forward.7} parent=23 // pred_check
        %p578 = pneg %p268
      $region54: #{custom_wav2vec2_forward.7} parent=23 // pred_check_branch
        %580 = sbr.rel (%p578) target = $region56
      $region55: #{custom_wav2vec2_forward.7} parent=23 // pred_region
        %p581 = scmp.lt.s32.totalorder %s24, 1
        %s582 = scalar_select %p581, %s24, 1
        %s583 = scalar_lea.vmem %s9, %s582
      $region56: #{custom_wav2vec2_forward.7} parent=23 // pred_fallthru
        _
      // Predicated region
      $region57: #{custom_wav2vec2_forward.7} parent=23 // pred_check
        %p584 = pneg %p294
      $region58: #{custom_wav2vec2_forward.7} parent=23 // pred_check_branch
        %586 = sbr.rel (%p584) target = $region60
      $region59: #{custom_wav2vec2_forward.7} parent=23 // pred_region
        %p587 = scmp.lt.s32.totalorder %s24, 1
        %s588 = scalar_select %p587, %s24, 1
        %s589 = scalar_lea.vmem %s10, %s588
      $region60: #{custom_wav2vec2_forward.7} parent=23 // pred_fallthru
        _
      // Predicated region
      $region61: #{custom_wav2vec2_forward.7} parent=23 // pred_check
        %p590 = pneg %p320
      $region62: #{custom_wav2vec2_forward.7} parent=23 // pred_check_branch
        %592 = sbr.rel (%p590) target = $region64
      $region63: #{custom_wav2vec2_forward.7} parent=23 // pred_region
        %p593 = scmp.lt.s32.totalorder %s24, 1
        %s594 = scalar_select %p593, %s24, 1
        %s595 = scalar_lea.vmem %s11, %s594
      $region64: #{custom_wav2vec2_forward.7} parent=23 // pred_fallthru
        _
      // Predicated region
      $region65: #{custom_wav2vec2_forward.7} parent=23 // pred_check
        %p596 = pneg %p346
      $region66: #{custom_wav2vec2_forward.7} parent=23 // pred_check_branch
        %598 = sbr.rel (%p596) target = $region68
      $region67: #{custom_wav2vec2_forward.7} parent=23 // pred_region
        %p599 = scmp.lt.s32.totalorder %s24, 1
        %s600 = scalar_select %p599, %s24, 1
        %s601 = smul.addr %s600, 4
        %s602 = smul.addr %s601, 8
        %s603 = scalar_lea.vmem %s12, %s602
      $region68: #{custom_wav2vec2_forward.7} parent=23 // pred_fallthru
        _
      // Predicated region
      $region69: #{custom_wav2vec2_forward.7} parent=23 // pred_check
        %p604 = pneg %p372
      $region70: #{custom_wav2vec2_forward.7} parent=23 // pred_check_branch
        %606 = sbr.rel (%p604) target = $region72
      $region71: #{custom_wav2vec2_forward.7} parent=23 // pred_region
        %p607 = scmp.lt.s32.totalorder %s24, 1
        %s608 = scalar_select %p607, %s24, 1
        %s609 = scalar_lea.vmem %s13, %s608
      $region72: #{custom_wav2vec2_forward.7} parent=23 // pred_fallthru
        _
      // Predicated region
      $region73: #{custom_wav2vec2_forward.7} parent=23 // pred_check
        %p610 = pneg %p398
      $region74: #{custom_wav2vec2_forward.7} parent=23 // pred_check_branch
        %612 = sbr.rel (%p610) target = $region76
      $region75: #{custom_wav2vec2_forward.7} parent=23 // pred_region
        %p613 = scmp.lt.s32.totalorder %s24, 1
        %s614 = scalar_select %p613, %s24, 1
        %s615 = smul.addr %s614, 8
        %s616 = smul.addr %s615, 8
        %s617 = scalar_lea.vmem %s14, %s616
      $region76: #{custom_wav2vec2_forward.7} parent=23 // pred_fallthru
        _
      // Predicated region
      $region77: #{custom_wav2vec2_forward.7} parent=23 // pred_check
        %p618 = pneg %p424
      $region78: #{custom_wav2vec2_forward.7} parent=23 // pred_check_branch
        %620 = sbr.rel (%p618) target = $region80
      $region79: #{custom_wav2vec2_forward.7} parent=23 // pred_region
        %p621 = scmp.lt.s32.totalorder %s24, 1
        %s622 = scalar_select %p621, %s24, 1
        %s623 = scalar_lea.vmem %s15, %s622
      $region80: #{custom_wav2vec2_forward.7} parent=23 // pred_fallthru
        _
      // Predicated region
      $region81: #{custom_wav2vec2_forward.7} parent=23 // pred_check
        %p624 = pneg %p450
      $region82: #{custom_wav2vec2_forward.7} parent=23 // pred_check_branch
        %626 = sbr.rel (%p624) target = $region84
      $region83: #{custom_wav2vec2_forward.7} parent=23 // pred_region
        %p627 = scmp.lt.s32.totalorder %s24, 1
        %s628 = scalar_select %p627, %s24, 1
        %s629 = scalar_lea.vmem %s16, %s628
      $region84: #{custom_wav2vec2_forward.7} parent=23 // pred_fallthru
        _
      // Predicated region
      $region85: #{custom_wav2vec2_forward.7} parent=23 // pred_check
        %p630 = pneg %p476
      $region86: #{custom_wav2vec2_forward.7} parent=23 // pred_check_branch
        %632 = sbr.rel (%p630) target = $region88
      $region87: #{custom_wav2vec2_forward.7} parent=23 // pred_region
        %p633 = scmp.lt.s32.totalorder %s24, 1
        %s634 = scalar_select %p633, %s24, 1
        %s635 = scalar_lea.vmem %s17, %s634
      $region88: #{custom_wav2vec2_forward.7} parent=23 // pred_fallthru
        _
    $region24: #{custom_wav2vec2_forward.7} parent=5 // pred_fallthru
      _
    %p636 = scmp.le.s32.totalorder 1, %s24
    %p637 = scmp.lt.s32.totalorder %s24, 3
    %p638 = pnand %p636, %p637
    %p639 = pneg %p638
    // Predicated region
    $region89: #{custom_wav2vec2_forward.7} parent=5 // pred_check
      _
    $region90: #{custom_wav2vec2_forward.7} parent=5 // pred_check_branch
      %641 = sbr.rel (%p638) target = $region92
    $region91: #{custom_wav2vec2_forward.7} parent=5 // pred_region
      %s642 = ssub.s32 %s24, 1
      %p643 = pneg %p45
      %p644 = pneg %p42
      %p645 = pneg %p66
      %p646 = pneg %p63
      %p647 = scmp.lt.s32.totalorder %s29, 1
      %s648 = scalar_select %p647, %s29, 1
      %s649 = smul.addr %s648, 4
      %s650 = smul.addr %s649, 8
      %s651 = scalar_lea.vmem %s2, %s650
      %p652 = pneg %p92
      %p653 = pneg %p89
      %p654 = scmp.lt.s32.totalorder %s29, 1
      %s655 = scalar_select %p654, %s29, 1
      %s656 = scalar_lea.vmem %s3, %s655
      %p657 = pneg %p118
      %p658 = pneg %p115
      %p659 = scmp.lt.s32.totalorder %s29, 1
      %s660 = scalar_select %p659, %s29, 1
      %s661 = smul.addr %s660, 4
      %s662 = smul.addr %s661, 8
      %s663 = scalar_lea.vmem %s4, %s662
      %p664 = pneg %p144
      %p665 = pneg %p141
      %p666 = scmp.lt.s32.totalorder %s29, 1
      %s667 = scalar_select %p666, %s29, 1
      %s668 = scalar_lea.vmem %s5, %s667
      %p669 = pneg %p170
      %p670 = pneg %p167
      %p671 = scmp.lt.s32.totalorder %s29, 1
      %s672 = scalar_select %p671, %s29, 1
      %s673 = smul.addr %s672, 4
      %s674 = smul.addr %s673, 8
      %s675 = scalar_lea.vmem %s6, %s674
      %p676 = pneg %p196
      %p677 = pneg %p193
      %p678 = scmp.lt.s32.totalorder %s29, 1
      %s679 = scalar_select %p678, %s29, 1
      %s680 = scalar_lea.vmem %s7, %s679
      %p681 = pneg %p222
      %p682 = pneg %p219
      %p683 = scmp.lt.s32.totalorder %s29, 1
      %s684 = scalar_select %p683, %s29, 1
      %s685 = smul.addr %s684, 4
      %s686 = smul.addr %s685, 8
      %s687 = scalar_lea.vmem %s8, %s686
      %p688 = pneg %p248
      %p689 = pneg %p245
      %p690 = scmp.lt.s32.totalorder %s29, 1
      %s691 = scalar_select %p690, %s29, 1
      %s692 = scalar_lea.vmem %s9, %s691
      %p693 = pneg %p274
      %p694 = pneg %p271
      %p695 = scmp.lt.s32.totalorder %s29, 1
      %s696 = scalar_select %p695, %s29, 1
      %s697 = scalar_lea.vmem %s10, %s696
      %p698 = pneg %p300
      %p699 = pneg %p297
      %p700 = scmp.lt.s32.totalorder %s29, 1
      %s701 = scalar_select %p700, %s29, 1
      %s702 = scalar_lea.vmem %s11, %s701
      %p703 = pneg %p326
      %p704 = pneg %p323
      %p705 = scmp.lt.s32.totalorder %s29, 1
      %s706 = scalar_select %p705, %s29, 1
      %s707 = smul.addr %s706, 4
      %s708 = smul.addr %s707, 8
      %s709 = scalar_lea.vmem %s12, %s708
      %p710 = pneg %p352
      %p711 = pneg %p349
      %p712 = scmp.lt.s32.totalorder %s29, 1
      %s713 = scalar_select %p712, %s29, 1
      %s714 = scalar_lea.vmem %s13, %s713
      %p715 = pneg %p378
      %p716 = pneg %p375
      %p717 = scmp.lt.s32.totalorder %s29, 1
      %s718 = scalar_select %p717, %s29, 1
      %s719 = smul.addr %s718, 8
      %s720 = smul.addr %s719, 8
      %s721 = scalar_lea.vmem %s14, %s720
      %p722 = pneg %p404
      %p723 = pneg %p401
      %p724 = scmp.lt.s32.totalorder %s29, 1
      %s725 = scalar_select %p724, %s29, 1
      %s726 = scalar_lea.vmem %s15, %s725
      %p727 = pneg %p430
      %p728 = pneg %p427
      %p729 = scmp.lt.s32.totalorder %s29, 1
      %s730 = scalar_select %p729, %s29, 1
      %s731 = scalar_lea.vmem %s16, %s730
      %p732 = pneg %p456
      %p733 = pneg %p453
      %p734 = scmp.lt.s32.totalorder %s29, 1
      %s735 = scalar_select %p734, %s29, 1
      %s736 = scalar_lea.vmem %s17, %s735
      %p737 = pneg %p482
      %p738 = pneg %p479
      %p739 = pneg %p503
      %p740 = pneg %p500
      %p741 = scmp.lt.s32.totalorder %s29, 1
      %s742 = scalar_select %p741, %s29, 1
      %s743 = smul.addr %s742, 4
      %s744 = smul.addr %s743, 8
      %s745 = scalar_lea.vmem %s2, %s744
      %p746 = scmp.lt.s32.totalorder %s29, 1
      %s747 = scalar_select %p746, %s29, 1
      %s748 = scalar_lea.vmem %s3, %s747
      %p749 = scmp.lt.s32.totalorder %s29, 1
      %s750 = scalar_select %p749, %s29, 1
      %s751 = smul.addr %s750, 4
      %s752 = smul.addr %s751, 8
      %s753 = scalar_lea.vmem %s4, %s752
      %p754 = scmp.lt.s32.totalorder %s29, 1
      %s755 = scalar_select %p754, %s29, 1
      %s756 = scalar_lea.vmem %s5, %s755
      %p757 = scmp.lt.s32.totalorder %s29, 1
      %s758 = scalar_select %p757, %s29, 1
      %s759 = smul.addr %s758, 4
      %s760 = smul.addr %s759, 8
      %s761 = scalar_lea.vmem %s6, %s760
      %p762 = scmp.lt.s32.totalorder %s29, 1
      %s763 = scalar_select %p762, %s29, 1
      %s764 = scalar_lea.vmem %s7, %s763
      %p765 = scmp.lt.s32.totalorder %s29, 1
      %s766 = scalar_select %p765, %s29, 1
      %s767 = smul.addr %s766, 4
      %s768 = smul.addr %s767, 8
      %s769 = scalar_lea.vmem %s8, %s768
      %p770 = scmp.lt.s32.totalorder %s29, 1
      %s771 = scalar_select %p770, %s29, 1
      %s772 = scalar_lea.vmem %s9, %s771
      %p773 = scmp.lt.s32.totalorder %s29, 1
      %s774 = scalar_select %p773, %s29, 1
      %s775 = scalar_lea.vmem %s10, %s774
      %p776 = scmp.lt.s32.totalorder %s29, 1
      %s777 = scalar_select %p776, %s29, 1
      %s778 = scalar_lea.vmem %s11, %s777
      %p779 = scmp.lt.s32.totalorder %s29, 1
      %s780 = scalar_select %p779, %s29, 1
      %s781 = smul.addr %s780, 4
      %s782 = smul.addr %s781, 8
      %s783 = scalar_lea.vmem %s12, %s782
      %p784 = scmp.lt.s32.totalorder %s29, 1
      %s785 = scalar_select %p784, %s29, 1
      %s786 = scalar_lea.vmem %s13, %s785
      %p787 = scmp.lt.s32.totalorder %s29, 1
      %s788 = scalar_select %p787, %s29, 1
      %s789 = smul.addr %s788, 8
      %s790 = smul.addr %s789, 8
      %s791 = scalar_lea.vmem %s14, %s790
      %p792 = scmp.lt.s32.totalorder %s29, 1
      %s793 = scalar_select %p792, %s29, 1
      %s794 = scalar_lea.vmem %s15, %s793
      %p795 = scmp.lt.s32.totalorder %s29, 1
      %s796 = scalar_select %p795, %s29, 1
      %s797 = scalar_lea.vmem %s16, %s796
      %p798 = scmp.lt.s32.totalorder %s29, 1
      %s799 = scalar_select %p798, %s29, 1
      %s800 = scalar_lea.vmem %s17, %s799
      %p802 = scmp.eq.s32.totalorder %s29, 0
      // Predicated region
      $region93: #{custom_wav2vec2_forward.7} parent=91 // pred_check
        %p803 = pneg %p802
      $region94: #{custom_wav2vec2_forward.7} parent=91 // pred_check_branch
        %805 = sbr.rel (%p803) target = $region96
      $region95: #{custom_wav2vec2_forward.7} parent=91 // pred_region
        %v806 = vld [vmem:[%s0] sm:$0xff]
        %v807 = vld [vmem:[%s0 + $0x8] sm:$0xff]
        %v808 = vld [vmem:[%s0 + $0x10] sm:$0xff]
        %v809 = vld [vmem:[%s0 + $0x18] sm:$0xff]
        %v810 = vld [vmem:[%s0 + $0x20] sm:$0xff]
        %v811 = vld [vmem:[%s0 + $0x28] sm:$0xff]
        %v812 = vld [vmem:[%s0 + $0x30] sm:$0xff]
        %v813 = vld [vmem:[%s0 + $0x38] sm:$0x3f]
        %vm814 = vcmask 261120
        %815 = vst.msk [vmem:[#allocation2] sm:$0xff] %vm814, %v806
        %816 = vst.msk [vmem:[#allocation2 + $0x8] sm:$0xff] %vm814, %v807
        %817 = vst.msk [vmem:[#allocation2 + $0x10] sm:$0xff] %vm814, %v808
        %818 = vst.msk [vmem:[#allocation2 + $0x18] sm:$0xff] %vm814, %v809
        %819 = vst.msk [vmem:[#allocation2 + $0x20] sm:$0xff] %vm814, %v810
        %820 = vst.msk [vmem:[#allocation2 + $0x28] sm:$0xff] %vm814, %v811
        %821 = vst.msk [vmem:[#allocation2 + $0x30] sm:$0xff] %vm814, %v812
        %vm822 = vcmask 259072
        %823 = vst.msk [vmem:[#allocation2 + $0x38] sm:$0x3f] %vm822, %v813
        %824 = vst.msk [vmem:[#allocation3] sm:$0xff] %vm814, %v806
        %825 = vst.msk [vmem:[#allocation3 + $0x8] sm:$0xff] %vm814, %v807
        %826 = vst.msk [vmem:[#allocation3 + $0x10] sm:$0xff] %vm814, %v808
        %827 = vst.msk [vmem:[#allocation3 + $0x18] sm:$0xff] %vm814, %v809
        %828 = vst.msk [vmem:[#allocation3 + $0x20] sm:$0xff] %vm814, %v810
        %829 = vst.msk [vmem:[#allocation3 + $0x28] sm:$0xff] %vm814, %v811
        %830 = vst.msk [vmem:[#allocation3 + $0x30] sm:$0xff] %vm814, %v812
        %831 = vst.msk [vmem:[#allocation3 + $0x38] sm:$0x3f] %vm822, %v813
      $region96: #{custom_wav2vec2_forward.7} parent=91 // pred_fallthru
        _
      %v832 = vld [vmem:[#allocation2] sm:$0xff]
      %v833 = vld [vmem:[#allocation2 + $0x8] sm:$0xff]
      %v834 = vld [vmem:[#allocation2 + $0x10] sm:$0xff]
      %v835 = vld [vmem:[#allocation2 + $0x18] sm:$0xff]
      %v836 = vld [vmem:[#allocation2 + $0x20] sm:$0xff]
      %v837 = vld [vmem:[#allocation2 + $0x28] sm:$0xff]
      %v838 = vld [vmem:[#allocation2 + $0x30] sm:$0xff]
      %v839 = vld [vmem:[#allocation2 + $0x38] sm:$0x3f]
      %v840 = vld [vmem:[%s1] sm:$0xff]
      %v841 = vld [vmem:[%s1 + $0x8] sm:$0xff]
      %v842 = vld [vmem:[%s1 + $0x10] sm:$0xff]
      %v843 = vld [vmem:[%s1 + $0x18] sm:$0xff]
      %v844 = vld [vmem:[%s1 + $0x20] sm:$0xff]
      %v845 = vld [vmem:[%s1 + $0x28] sm:$0xff]
      %v846 = vld [vmem:[%s1 + $0x30] sm:$0xff]
      %v847 = vld [vmem:[%s1 + $0x38] sm:$0x3f]
      %v848 = vld [vmem:[%s745] sm:$0xff]
      %v849 = vld [vmem:[%s745 + $0x8] sm:$0xff]
      %v850 = vld [vmem:[%s745 + $0x10] sm:$0xff]
      %v851 = vld [vmem:[%s745 + $0x18] sm:$0xff]
      %v852 = vpack.c.bf16 %v833, %v832
      %v853 = vpack.c.bf16 %v835, %v834
      %v854 = vpack.c.bf16 %v837, %v836
      %v855 = vpack.c.bf16 %v839, %v838
      %v856 = vpack.c.bf16 %v849, %v848
      %v857 = vpack.c.bf16 %v851, %v850
      %v858 = vld [vmem:[%s748] sm:$0x1]
      %v860 = vlaneseq
      %v861 = vshrl.u32 %v860, 7
      %v862 = vsub.s32 0, %v861
      %v863 = vrot.slane %v858, %v862
      %vm865 = vcmask 261120
      %v867 = vsel %vm865, %v852, 0
      %v870 = vsel %vm865, %v853, 0
      %v873 = vsel %vm865, %v854, 0
      %v876 = vsel %vm865, %v855, 0
      %878 = vmatprep.subr.bf16.mxu0 0
      %879 = vmatpush1.bf16.msra.mxu0 %v856
      %880 = vmatprep.subr.bf16.mxu0 0
      %881 = vmatpush1.bf16.msra.mxu0 %v857
      %882 = vmatprep.subr.bf16.mxu0 0
      %883 = vmatpush1.bf16.msra.mxu0 0
      %884 = vmatprep.subr.bf16.mxu0 0
      %885 = vmatpush1.bf16.msra.mxu0 0
      %886 = vmatprep.subr.bf16.mxu0 0
      %887 = vmatpush1.bf16.msra.mxu0 0
      %888 = vmatprep.subr.bf16.mxu0 0
      %889 = vmatpush1.bf16.msra.mxu0 0
      %890 = vmatprep.subr.bf16.mxu0 0
      %891 = vmatpush1.bf16.msra.mxu0 0
      %892 = vmatprep.subr.bf16.mxu0 0
      %893 = vmatpush1.bf16.msra.mxu0 0
      %894 = vmatprep.subr.bf16.mxu0 0
      %895 = vmatpush1.bf16.msra.mxu0 0
      %896 = vmatprep.subr.bf16.mxu0 0
      %897 = vmatpush1.bf16.msra.mxu0 0
      %898 = vmatprep.subr.bf16.mxu0 0
      %899 = vmatpush1.bf16.msra.mxu0 0
      %900 = vmatprep.subr.bf16.mxu0 0
      %901 = vmatpush1.bf16.msra.mxu0 0
      %902 = vmatprep.subr.bf16.mxu0 0
      %903 = vmatpush1.bf16.msra.mxu0 0
      %904 = vmatprep.subr.bf16.mxu0 0
      %905 = vmatpush1.bf16.msra.mxu0 0
      %906 = vmatprep.subr.bf16.mxu0 0
      %907 = vmatpush1.bf16.msra.mxu0 0
      %908 = vmatprep.subr.bf16.mxu0 0
      %909 = vmatpush1.bf16.msra.mxu0 0
      %910 = vmatprep.mubr.bf16.mxu0 0
      %911 = vmatmul.mubr.bf16.gmra.mrb[0].mxu0 %v867
      %v912 = vpop.f32.mrb[0].mxu0
      %v913 = vadd.f32 %v863, %v912
      %v914 = vpop.f32.mrb[0].mxu0
      %v915 = vpop.f32.mrb[0].mxu0
      %v916 = vadd.f32 %v863, %v915
      %v917 = vpop.f32.mrb[0].mxu0
      %918 = vmatprep.mubr.bf16.mxu0 0
      %919 = vmatmul.mubr.bf16.gmra.mrb[0].mxu0 %v870
      %v920 = vpop.f32.mrb[0].mxu0
      %v921 = vadd.f32 %v863, %v920
      %v922 = vpop.f32.mrb[0].mxu0
      %v923 = vpop.f32.mrb[0].mxu0
      %v924 = vadd.f32 %v863, %v923
      %v925 = vpop.f32.mrb[0].mxu0
      %926 = vmatprep.mubr.bf16.mxu0 0
      %927 = vmatmul.mubr.bf16.gmra.mrb[0].mxu0 %v873
      %v928 = vpop.f32.mrb[0].mxu0
      %v929 = vadd.f32 %v863, %v928
      %v930 = vpop.f32.mrb[0].mxu0
      %v931 = vpop.f32.mrb[0].mxu0
      %v932 = vadd.f32 %v863, %v931
      %v933 = vpop.f32.mrb[0].mxu0
      %934 = vmatprep.mubr.bf16.mxu0 0
      %935 = vmatmul.mubr.bf16.gmra.mrb[0].mxu0 %v876
      %v936 = vpop.f32.mrb[0].mxu0
      %v937 = vadd.f32 %v863, %v936
      %v938 = vpop.f32.mrb[0].mxu0
      %v939 = vpop.f32.mrb[0].mxu0
      %v940 = vadd.f32 %v863, %v939
      %v941 = vpop.f32.mrb[0].mxu0
      %942 = vdwg.mxu0
      %v943 = vmul.f32 %v913, 0.35355338
      %v944 = vmul.f32 %v916, 0.35355338
      %v945 = vmul.f32 %v921, 0.35355338
      %v946 = vmul.f32 %v924, 0.35355338
      %v947 = vmul.f32 %v929, 0.35355338
      %v948 = vmul.f32 %v932, 0.35355338
      %v949 = vmul.f32 %v937, 0.35355338
      %v950 = vmul.f32 %v940, 0.35355338
      %v951 = vld [vmem:[%s753] sm:$0xff]
      %v952 = vld [vmem:[%s753 + $0x8] sm:$0xff]
      %v953 = vld [vmem:[%s753 + $0x10] sm:$0xff]
      %v954 = vld [vmem:[%s753 + $0x18] sm:$0xff]
      %v955 = vpack.c.bf16 %v952, %v951
      %v956 = vpack.c.bf16 %v954, %v953
      %v957 = vld [vmem:[%s756] sm:$0x1]
      %v959 = vlaneseq
      %v960 = vshrl.u32 %v959, 7
      %v961 = vsub.s32 0, %v960
      %v962 = vrot.slane %v957, %v961
      %964 = vmatprep.subr.bf16.mxu0 0
      %965 = vmatpush1.bf16.msra.mxu0 %v955
      %966 = vmatprep.subr.bf16.mxu0 0
      %967 = vmatpush1.bf16.msra.mxu0 %v956
      %968 = vmatprep.subr.bf16.mxu0 0
      %969 = vmatpush1.bf16.msra.mxu0 0
      %970 = vmatprep.subr.bf16.mxu0 0
      %971 = vmatpush1.bf16.msra.mxu0 0
      %972 = vmatprep.subr.bf16.mxu0 0
      %973 = vmatpush1.bf16.msra.mxu0 0
      %974 = vmatprep.subr.bf16.mxu0 0
      %975 = vmatpush1.bf16.msra.mxu0 0
      %976 = vmatprep.subr.bf16.mxu0 0
      %977 = vmatpush1.bf16.msra.mxu0 0
      %978 = vmatprep.subr.bf16.mxu0 0
      %979 = vmatpush1.bf16.msra.mxu0 0
      %980 = vmatprep.subr.bf16.mxu0 0
      %981 = vmatpush1.bf16.msra.mxu0 0
      %982 = vmatprep.subr.bf16.mxu0 0
      %983 = vmatpush1.bf16.msra.mxu0 0
      %984 = vmatprep.subr.bf16.mxu0 0
      %985 = vmatpush1.bf16.msra.mxu0 0
      %986 = vmatprep.subr.bf16.mxu0 0
      %987 = vmatpush1.bf16.msra.mxu0 0
      %988 = vmatprep.subr.bf16.mxu0 0
      %989 = vmatpush1.bf16.msra.mxu0 0
      %990 = vmatprep.subr.bf16.mxu0 0
      %991 = vmatpush1.bf16.msra.mxu0 0
      %992 = vmatprep.subr.bf16.mxu0 0
      %993 = vmatpush1.bf16.msra.mxu0 0
      %994 = vmatprep.subr.bf16.mxu0 0
      %995 = vmatpush1.bf16.msra.mxu0 0
      %996 = vmatprep.mubr.bf16.mxu0 0
      %997 = vmatmul.mubr.bf16.gmra.mrb[0].mxu0 %v867
      %v998 = vpop.f32.mrb[0].mxu0
      %v999 = vadd.f32 %v962, %v998
      %v1000 = vpop.f32.mrb[0].mxu0
      %v1001 = vpop.f32.mrb[0].mxu0
      %v1002 = vadd.f32 %v962, %v1001
      %v1003 = vpop.f32.mrb[0].mxu0
      %1004 = vmatprep.mubr.bf16.mxu0 0
      %1005 = vmatmul.mubr.bf16.gmra.mrb[0].mxu0 %v870
      %v1006 = vpop.f32.mrb[0].mxu0
      %v1007 = vadd.f32 %v962, %v1006
      %v1008 = vpop.f32.mrb[0].mxu0
      %v1009 = vpop.f32.mrb[0].mxu0
      %v1010 = vadd.f32 %v962, %v1009
      %v1011 = vpop.f32.mrb[0].mxu0
      %1012 = vmatprep.mubr.bf16.mxu0 0
      %1013 = vmatmul.mubr.bf16.gmra.mrb[0].mxu0 %v873
      %v1014 = vpop.f32.mrb[0].mxu0
      %v1015 = vadd.f32 %v962, %v1014
      %v1016 = vpop.f32.mrb[0].mxu0
      %v1017 = vpop.f32.mrb[0].mxu0
      %v1018 = vadd.f32 %v962, %v1017
      %v1019 = vpop.f32.mrb[0].mxu0
      %1020 = vmatprep.mubr.bf16.mxu0 0
      %1021 = vmatmul.mubr.bf16.gmra.mrb[0].mxu0 %v876
      %v1022 = vpop.f32.mrb[0].mxu0
      %v1023 = vadd.f32 %v962, %v1022
      %v1024 = vpop.f32.mrb[0].mxu0
      %v1025 = vpop.f32.mrb[0].mxu0
      %v1026 = vadd.f32 %v962, %v1025
      %v1027 = vpop.f32.mrb[0].mxu0
      %1028 = vdwg.mxu0
      %v1029 = vld [vmem:[%s761] sm:$0xff]
      %v1030 = vld [vmem:[%s761 + $0x8] sm:$0xff]
      %v1031 = vld [vmem:[%s761 + $0x10] sm:$0xff]
      %v1032 = vld [vmem:[%s761 + $0x18] sm:$0xff]
      %v1033 = vpack.c.bf16 %v1030, %v1029
      %v1034 = vpack.c.bf16 %v1032, %v1031
      %v1035 = vld [vmem:[%s764] sm:$0x1]
      %v1037 = vlaneseq
      %v1038 = vshrl.u32 %v1037, 7
      %v1039 = vsub.s32 0, %v1038
      %v1040 = vrot.slane %v1035, %v1039
      %1042 = vmatprep.subr.bf16.mxu0 0
      %1043 = vmatpush1.bf16.msra.mxu0 %v1033
      %1044 = vmatprep.subr.bf16.mxu0 0
      %1045 = vmatpush1.bf16.msra.mxu0 %v1034
      %1046 = vmatprep.subr.bf16.mxu0 0
      %1047 = vmatpush1.bf16.msra.mxu0 0
      %1048 = vmatprep.subr.bf16.mxu0 0
      %1049 = vmatpush1.bf16.msra.mxu0 0
      %1050 = vmatprep.subr.bf16.mxu0 0
      %1051 = vmatpush1.bf16.msra.mxu0 0
      %1052 = vmatprep.subr.bf16.mxu0 0
      %1053 = vmatpush1.bf16.msra.mxu0 0
      %1054 = vmatprep.subr.bf16.mxu0 0
      %1055 = vmatpush1.bf16.msra.mxu0 0
      %1056 = vmatprep.subr.bf16.mxu0 0
      %1057 = vmatpush1.bf16.msra.mxu0 0
      %1058 = vmatprep.subr.bf16.mxu0 0
      %1059 = vmatpush1.bf16.msra.mxu0 0
      %1060 = vmatprep.subr.bf16.mxu0 0
      %1061 = vmatpush1.bf16.msra.mxu0 0
      %1062 = vmatprep.subr.bf16.mxu0 0
      %1063 = vmatpush1.bf16.msra.mxu0 0
      %1064 = vmatprep.subr.bf16.mxu0 0
      %1065 = vmatpush1.bf16.msra.mxu0 0
      %1066 = vmatprep.subr.bf16.mxu0 0
      %1067 = vmatpush1.bf16.msra.mxu0 0
      %1068 = vmatprep.subr.bf16.mxu0 0
      %1069 = vmatpush1.bf16.msra.mxu0 0
      %1070 = vmatprep.subr.bf16.mxu0 0
      %1071 = vmatpush1.bf16.msra.mxu0 0
      %1072 = vmatprep.subr.bf16.mxu0 0
      %1073 = vmatpush1.bf16.msra.mxu0 0
      %1074 = vmatprep.mubr.bf16.mxu0 0
      %1075 = vmatmul.mubr.bf16.gmra.mrb[0].mxu0 %v867
      %v1076 = vpop.f32.mrb[0].mxu0
      %v1077 = vadd.f32 %v1040, %v1076
      %v1078 = vpop.f32.mrb[0].mxu0
      %v1079 = vpop.f32.mrb[0].mxu0
      %v1080 = vadd.f32 %v1040, %v1079
      %v1081 = vpop.f32.mrb[0].mxu0
      %1082 = vmatprep.mubr.bf16.mxu0 0
      %1083 = vmatmul.mubr.bf16.gmra.mrb[0].mxu0 %v870
      %v1084 = vpop.f32.mrb[0].mxu0
      %v1085 = vadd.f32 %v1040, %v1084
      %v1086 = vpop.f32.mrb[0].mxu0
      %v1087 = vpop.f32.mrb[0].mxu0
      %v1088 = vadd.f32 %v1040, %v1087
      %v1089 = vpop.f32.mrb[0].mxu0
      %1090 = vmatprep.mubr.bf16.mxu0 0
      %1091 = vmatmul.mubr.bf16.gmra.mrb[0].mxu0 %v873
      %v1092 = vpop.f32.mrb[0].mxu0
      %v1093 = vadd.f32 %v1040, %v1092
      %v1094 = vpop.f32.mrb[0].mxu0
      %v1095 = vpop.f32.mrb[0].mxu0
      %v1096 = vadd.f32 %v1040, %v1095
      %v1097 = vpop.f32.mrb[0].mxu0
      %1098 = vmatprep.mubr.bf16.mxu0 0
      %1099 = vmatmul.mubr.bf16.gmra.mrb[0].mxu0 %v876
      %v1100 = vpop.f32.mrb[0].mxu0
      %v1101 = vadd.f32 %v1040, %v1100
      %v1102 = vpop.f32.mrb[0].mxu0
      %v1103 = vpop.f32.mrb[0].mxu0
      %v1104 = vadd.f32 %v1040, %v1103
      %v1105 = vpop.f32.mrb[0].mxu0
      %1106 = vdwg.mxu0
      %v1107 = vpack.c.bf16 %v944, %v943
      %v1108 = vpack.c.bf16 %v946, %v945
      %v1109 = vpack.c.bf16 %v948, %v947
      %v1110 = vpack.c.bf16 %v950, %v949
      %v1111 = vpack.c.bf16 %v1002, %v999
      %v1112 = vpack.c.bf16 %v1010, %v1007
      %v1113 = vpack.c.bf16 %v1018, %v1015
      %v1114 = vpack.c.bf16 %v1026, %v1023
      %vm1115 = vcmask 64512
      %v1117 = vsel %vm1115, %v1107, 0
      %v1120 = vsel %vm1115, %v1108, 0
      %v1123 = vsel %vm1115, %v1109, 0
      %v1126 = vsel %vm1115, %v1110, 0
      %v1129 = vsel %vm1115, %v1111, 0
      %v1132 = vsel %vm1115, %v1112, 0
      %v1135 = vsel %vm1115, %v1113, 0
      %v1138 = vsel %vm1115, %v1114, 0
      %1140 = vmatprep.subr.bf16.mxu0 0
      %1141 = vmatpush1.bf16.xpose.msra.mxu0 %v1129
      %1142 = vmatprep.subr.bf16.mxu0 0
      %1143 = vmatpush1.bf16.xpose.msra.mxu0 %v1132
      %1144 = vmatprep.subr.bf16.mxu0 0
      %1145 = vmatpush1.bf16.xpose.msra.mxu0 %v1135
      %1146 = vmatprep.subr.bf16.mxu0 0
      %1147 = vmatpush1.bf16.xpose.msra.mxu0 %v1138
      %1148 = vmatprep.subr.bf16.mxu0 0
      %1149 = vmatpush1.bf16.xpose.msra.mxu0 0
      %1150 = vmatprep.subr.bf16.mxu0 0
      %1151 = vmatpush1.bf16.xpose.msra.mxu0 0
      %1152 = vmatprep.subr.bf16.mxu0 0
      %1153 = vmatpush1.bf16.xpose.msra.mxu0 0
      %1154 = vmatprep.subr.bf16.mxu0 0
      %1155 = vmatpush1.bf16.xpose.msra.mxu0 0
      %1156 = vmatprep.subr.bf16.mxu0 0
      %1157 = vmatpush1.bf16.xpose.msra.mxu0 0
      %1158 = vmatprep.subr.bf16.mxu0 0
      %1159 = vmatpush1.bf16.xpose.msra.mxu0 0
      %1160 = vmatprep.subr.bf16.mxu0 0
      %1161 = vmatpush1.bf16.xpose.msra.mxu0 0
      %1162 = vmatprep.subr.bf16.mxu0 0
      %1163 = vmatpush1.bf16.xpose.msra.mxu0 0
      %1164 = vmatprep.subr.bf16.mxu0 0
      %1165 = vmatpush1.bf16.xpose.msra.mxu0 0
      %1166 = vmatprep.subr.bf16.mxu0 0
      %1167 = vmatpush1.bf16.xpose.msra.mxu0 0
      %1168 = vmatprep.subr.bf16.mxu0 0
      %1169 = vmatpush1.bf16.xpose.msra.mxu0 0
      %1170 = vmatprep.subr.bf16.mxu0 0
      %1171 = vmatpush1.bf16.xpose.msra.mxu0 0
      %1172 = vmatprep.mubr.bf16.mxu0 0
      %1173 = vmatmul.mubr.bf16.gmra.mrb[0].mxu0 %v1117
      %v1174 = vpop.f32.mrb[0].mxu0
      %v1175 = vadd.f32 %v840, %v1174
      %v1176 = vpop.f32.mrb[0].mxu0
      %v1177 = vpop.f32.mrb[0].mxu0
      %v1178 = vadd.f32 %v841, %v1177
      %v1179 = vpop.f32.mrb[0].mxu0
      %1180 = vmatprep.mubr.bf16.mxu0 0
      %1181 = vmatmul.mubr.bf16.gmra.mrb[0].mxu0 %v1120
      %v1182 = vpop.f32.mrb[0].mxu0
      %v1183 = vadd.f32 %v842, %v1182
      %v1184 = vpop.f32.mrb[0].mxu0
      %v1185 = vpop.f32.mrb[0].mxu0
      %v1186 = vadd.f32 %v843, %v1185
      %v1187 = vpop.f32.mrb[0].mxu0
      %1188 = vmatprep.mubr.bf16.mxu0 0
      %1189 = vmatmul.mubr.bf16.gmra.mrb[0].mxu0 %v1123
      %v1190 = vpop.f32.mrb[0].mxu0
      %v1191 = vadd.f32 %v844, %v1190
      %v1192 = vpop.f32.mrb[0].mxu0
      %v1193 = vpop.f32.mrb[0].mxu0
      %v1194 = vadd.f32 %v845, %v1193
      %v1195 = vpop.f32.mrb[0].mxu0
      %1196 = vmatprep.mubr.bf16.mxu0 0
      %1197 = vmatmul.mubr.bf16.gmra.mrb[0].mxu0 %v1126
      %v1198 = vpop.f32.mrb[0].mxu0
      %v1199 = vadd.f32 %v846, %v1198
      %v1200 = vpop.f32.mrb[0].mxu0
      %v1201 = vpop.f32.mrb[0].mxu0
      %v1202 = vadd.f32 %v847, %v1201
      %v1203 = vpop.f32.mrb[0].mxu0
      %1204 = vdwg.mxu0
      %vm1205 = vcmask 506880
      %v1206 = vsel %vm1205, %v1175, -inf
      %1207 = vmax.xlane.f32.xlu0 %v1206
      %v1208 = vpop.xlane.xlu0 %1207
      %v1209 = vsel %vm1205, %v1178, -inf
      %1210 = vmax.xlane.f32.xlu0 %v1209
      %v1211 = vpop.xlane.xlu0 %1210
      %v1212 = vsel %vm1205, %v1183, -inf
      %1213 = vmax.xlane.f32.xlu0 %v1212
      %v1214 = vpop.xlane.xlu0 %1213
      %v1215 = vsel %vm1205, %v1186, -inf
      %1216 = vmax.xlane.f32.xlu0 %v1215
      %v1217 = vpop.xlane.xlu0 %1216
      %v1218 = vsel %vm1205, %v1191, -inf
      %1219 = vmax.xlane.f32.xlu0 %v1218
      %v1220 = vpop.xlane.xlu0 %1219
      %v1221 = vsel %vm1205, %v1194, -inf
      %1222 = vmax.xlane.f32.xlu0 %v1221
      %v1223 = vpop.xlane.xlu0 %1222
      %v1224 = vsel %vm1205, %v1199, -inf
      %1225 = vmax.xlane.f32.xlu0 %v1224
      %v1226 = vpop.xlane.xlu0 %1225
      %vm1227 = vcmask 504832
      %v1228 = vsel %vm1227, %v1202, -inf
      %1229 = vmax.xlane.f32.xlu0 %v1228
      %v1230 = vpop.xlane.xlu0 %1229
      %v1231 = vsub.f32 %v1175, %v1208
      %v1232 = vsub.f32 %v1178, %v1211
      %v1233 = vsub.f32 %v1183, %v1214
      %v1234 = vsub.f32 %v1186, %v1217
      %v1235 = vsub.f32 %v1191, %v1220
      %v1236 = vsub.f32 %v1194, %v1223
      %v1237 = vsub.f32 %v1199, %v1226
      %v1238 = vsub.f32 %v1202, %v1230
      %v1239 = vmul.f32 %v1231, 1.442695
      %v1240 = vpow.pop %v1239
      %v1241 = vmul.f32 %v1232, 1.442695
      %v1242 = vpow.pop %v1241
      %v1243 = vmul.f32 %v1233, 1.442695
      %v1244 = vpow.pop %v1243
      %v1245 = vmul.f32 %v1234, 1.442695
      %v1246 = vpow.pop %v1245
      %v1247 = vmul.f32 %v1235, 1.442695
      %v1248 = vpow.pop %v1247
      %v1249 = vmul.f32 %v1236, 1.442695
      %v1250 = vpow.pop %v1249
      %v1251 = vmul.f32 %v1237, 1.442695
      %v1252 = vpow.pop %v1251
      %v1253 = vmul.f32 %v1238, 1.442695
      %v1254 = vpow.pop %v1253
      %v1255 = vsel %vm1205, %v1240, 0.0
      %1256 = vadd.xlane.f32.xlu0 %v1255
      %v1257 = vpop.xlane.xlu0 %1256
      %v1258 = vsel %vm1205, %v1242, 0.0
      %1259 = vadd.xlane.f32.xlu0 %v1258
      %v1260 = vpop.xlane.xlu0 %1259
      %v1261 = vsel %vm1205, %v1244, 0.0
      %1262 = vadd.xlane.f32.xlu0 %v1261
      %v1263 = vpop.xlane.xlu0 %1262
      %v1264 = vsel %vm1205, %v1246, 0.0
      %1265 = vadd.xlane.f32.xlu0 %v1264
      %v1266 = vpop.xlane.xlu0 %1265
      %v1267 = vsel %vm1205, %v1248, 0.0
      %1268 = vadd.xlane.f32.xlu0 %v1267
      %v1269 = vpop.xlane.xlu0 %1268
      %v1270 = vsel %vm1205, %v1250, 0.0
      %1271 = vadd.xlane.f32.xlu0 %v1270
      %v1272 = vpop.xlane.xlu0 %1271
      %v1273 = vsel %vm1205, %v1252, 0.0
      %1274 = vadd.xlane.f32.xlu0 %v1273
      %v1275 = vpop.xlane.xlu0 %1274
      %v1276 = vsel %vm1227, %v1254, 0.0
      %1277 = vadd.xlane.f32.xlu0 %v1276
      %v1278 = vpop.xlane.xlu0 %1277
      %v1279 = vrcp.pop %v1257
      %v1280 = vrcp.pop %v1260
      %v1281 = vrcp.pop %v1263
      %v1282 = vrcp.pop %v1266
      %v1283 = vrcp.pop %v1269
      %v1284 = vrcp.pop %v1272
      %v1285 = vrcp.pop %v1275
      %v1286 = vrcp.pop %v1278
      %v1287 = vmul.f32 %v1240, %v1279
      %v1288 = vmul.f32 %v1242, %v1280
      %v1289 = vmul.f32 %v1244, %v1281
      %v1290 = vmul.f32 %v1246, %v1282
      %v1291 = vmul.f32 %v1248, %v1283
      %v1292 = vmul.f32 %v1250, %v1284
      %v1293 = vmul.f32 %v1252, %v1285
      %v1294 = vmul.f32 %v1254, %v1286
      %v1295 = vpack.c.bf16 %v1288, %v1287
      %v1296 = vpack.c.bf16 %v1290, %v1289
      %v1297 = vpack.c.bf16 %v1292, %v1291
      %v1298 = vpack.c.bf16 %v1294, %v1293
      %v1299 = vpack.c.bf16 %v1080, %v1077
      %v1300 = vpack.c.bf16 %v1088, %v1085
      %v1301 = vpack.c.bf16 %v1096, %v1093
      %v1302 = vpack.c.bf16 %v1104, %v1101
      %v1304 = vsel %vm1205, %v1295, 0
      %v1307 = vsel %vm1205, %v1296, 0
      %v1310 = vsel %vm1205, %v1297, 0
      %v1313 = vsel %vm1205, %v1298, 0
      %vm1315 = vcmask 1046528
      %v1317 = vsel %vm1315, %v1302, 0
      %1319 = vmatprep.subr.bf16.mxu0 0
      %1320 = vmatpush1.bf16.msra.mxu0 %v1299
      %1321 = vmatprep.subr.bf16.mxu0 0
      %1322 = vmatpush1.bf16.msra.mxu0 %v1300
      %1323 = vmatprep.subr.bf16.mxu0 0
      %1324 = vmatpush1.bf16.msra.mxu0 %v1301
      %1325 = vmatprep.subr.bf16.mxu0 0
      %1326 = vmatpush1.bf16.msra.mxu0 %v1317
      %1327 = vmatprep.subr.bf16.mxu0 0
      %1328 = vmatpush1.bf16.msra.mxu0 0
      %1329 = vmatprep.subr.bf16.mxu0 0
      %1330 = vmatpush1.bf16.msra.mxu0 0
      %1331 = vmatprep.subr.bf16.mxu0 0
      %1332 = vmatpush1.bf16.msra.mxu0 0
      %1333 = vmatprep.subr.bf16.mxu0 0
      %1334 = vmatpush1.bf16.msra.mxu0 0
      %1335 = vmatprep.subr.bf16.mxu0 0
      %1336 = vmatpush1.bf16.msra.mxu0 0
      %1337 = vmatprep.subr.bf16.mxu0 0
      %1338 = vmatpush1.bf16.msra.mxu0 0
      %1339 = vmatprep.subr.bf16.mxu0 0
      %1340 = vmatpush1.bf16.msra.mxu0 0
      %1341 = vmatprep.subr.bf16.mxu0 0
      %1342 = vmatpush1.bf16.msra.mxu0 0
      %1343 = vmatprep.subr.bf16.mxu0 0
      %1344 = vmatpush1.bf16.msra.mxu0 0
      %1345 = vmatprep.subr.bf16.mxu0 0
      %1346 = vmatpush1.bf16.msra.mxu0 0
      %1347 = vmatprep.subr.bf16.mxu0 0
      %1348 = vmatpush1.bf16.msra.mxu0 0
      %1349 = vmatprep.subr.bf16.mxu0 0
      %1350 = vmatpush1.bf16.msra.mxu0 0
      %1351 = vmatprep.mubr.bf16.mxu0 0
      %1352 = vmatmul.mubr.bf16.gmra.mrb[0].mxu0 %v1304
      %v1353 = vpop.f32.mrb[0].mxu0
      %v1354 = vadd.f32 0.0, %v1353
      %v1355 = vpop.f32.mrb[0].mxu0
      %v1356 = vpop.f32.mrb[0].mxu0
      %v1357 = vadd.f32 0.0, %v1356
      %v1358 = vpop.f32.mrb[0].mxu0
      %1359 = vmatprep.mubr.bf16.mxu0 0
      %1360 = vmatmul.mubr.bf16.gmra.mrb[0].mxu0 %v1307
      %v1361 = vpop.f32.mrb[0].mxu0
      %v1362 = vadd.f32 0.0, %v1361
      %v1363 = vpop.f32.mrb[0].mxu0
      %v1364 = vpop.f32.mrb[0].mxu0
      %v1365 = vadd.f32 0.0, %v1364
      %v1366 = vpop.f32.mrb[0].mxu0
      %1367 = vmatprep.mubr.bf16.mxu0 0
      %1368 = vmatmul.mubr.bf16.gmra.mrb[0].mxu0 %v1310
      %v1369 = vpop.f32.mrb[0].mxu0
      %v1370 = vadd.f32 0.0, %v1369
      %v1371 = vpop.f32.mrb[0].mxu0
      %v1372 = vpop.f32.mrb[0].mxu0
      %v1373 = vadd.f32 0.0, %v1372
      %v1374 = vpop.f32.mrb[0].mxu0
      %1375 = vmatprep.mubr.bf16.mxu0 0
      %1376 = vmatmul.mubr.bf16.gmra.mrb[0].mxu0 %v1313
      %v1377 = vpop.f32.mrb[0].mxu0
      %v1378 = vadd.f32 0.0, %v1377
      %v1379 = vpop.f32.mrb[0].mxu0
      %v1380 = vpop.f32.mrb[0].mxu0
      %v1381 = vadd.f32 0.0, %v1380
      %v1382 = vpop.f32.mrb[0].mxu0
      %1383 = vdwg.mxu0
      %1388 = vrot.lane.b32.xlu0 %v1107, 120
      %v1389 = vpop.permute.xlu0 %1388
      %1390 = vrot.lane.b32.xlu0 %v1108, 120
      %v1391 = vpop.permute.xlu0 %1390
      %1392 = vrot.lane.b32.xlu0 %v1109, 120
      %v1393 = vpop.permute.xlu0 %1392
      %1394 = vrot.lane.b32.xlu0 %v1110, 120
      %v1395 = vpop.permute.xlu0 %1394
      %1400 = vrot.lane.b32.xlu0 %v1111, 120
      %v1401 = vpop.permute.xlu0 %1400
      %1402 = vrot.lane.b32.xlu0 %v1112, 120
      %v1403 = vpop.permute.xlu0 %1402
      %1404 = vrot.lane.b32.xlu0 %v1113, 120
      %v1405 = vpop.permute.xlu0 %1404
      %1406 = vrot.lane.b32.xlu0 %v1114, 120
      %v1407 = vpop.permute.xlu0 %1406
      %v1409 = vsel %vm1115, %v1389, 0
      %v1412 = vsel %vm1115, %v1391, 0
      %v1415 = vsel %vm1115, %v1393, 0
      %v1418 = vsel %vm1115, %v1395, 0
      %v1421 = vsel %vm1115, %v1401, 0
      %v1424 = vsel %vm1115, %v1403, 0
      %v1427 = vsel %vm1115, %v1405, 0
      %v1430 = vsel %vm1115, %v1407, 0
      %1432 = vmatprep.subr.bf16.mxu0 0
      %1433 = vmatpush1.bf16.xpose.msra.mxu0 %v1421
      %1434 = vmatprep.subr.bf16.mxu0 0
      %1435 = vmatpush1.bf16.xpose.msra.mxu0 %v1424
      %1436 = vmatprep.subr.bf16.mxu0 0
      %1437 = vmatpush1.bf16.xpose.msra.mxu0 %v1427
      %1438 = vmatprep.subr.bf16.mxu0 0
      %1439 = vmatpush1.bf16.xpose.msra.mxu0 %v1430
      %1440 = vmatprep.subr.bf16.mxu0 0
      %1441 = vmatpush1.bf16.xpose.msra.mxu0 0
      %1442 = vmatprep.subr.bf16.mxu0 0
      %1443 = vmatpush1.bf16.xpose.msra.mxu0 0
      %1444 = vmatprep.subr.bf16.mxu0 0
      %1445 = vmatpush1.bf16.xpose.msra.mxu0 0
      %1446 = vmatprep.subr.bf16.mxu0 0
      %1447 = vmatpush1.bf16.xpose.msra.mxu0 0
      %1448 = vmatprep.subr.bf16.mxu0 0
      %1449 = vmatpush1.bf16.xpose.msra.mxu0 0
      %1450 = vmatprep.subr.bf16.mxu0 0
      %1451 = vmatpush1.bf16.xpose.msra.mxu0 0
      %1452 = vmatprep.subr.bf16.mxu0 0
      %1453 = vmatpush1.bf16.xpose.msra.mxu0 0
      %1454 = vmatprep.subr.bf16.mxu0 0
      %1455 = vmatpush1.bf16.xpose.msra.mxu0 0
      %1456 = vmatprep.subr.bf16.mxu0 0
      %1457 = vmatpush1.bf16.xpose.msra.mxu0 0
      %1458 = vmatprep.subr.bf16.mxu0 0
      %1459 = vmatpush1.bf16.xpose.msra.mxu0 0
      %1460 = vmatprep.subr.bf16.mxu0 0
      %1461 = vmatpush1.bf16.xpose.msra.mxu0 0
      %1462 = vmatprep.subr.bf16.mxu0 0
      %1463 = vmatpush1.bf16.xpose.msra.mxu0 0
      %1464 = vmatprep.mubr.bf16.mxu0 0
      %1465 = vmatmul.mubr.bf16.gmra.mrb[0].mxu0 %v1409
      %v1466 = vpop.f32.mrb[0].mxu0
      %v1467 = vadd.f32 %v840, %v1466
      %v1468 = vpop.f32.mrb[0].mxu0
      %v1469 = vpop.f32.mrb[0].mxu0
      %v1470 = vadd.f32 %v841, %v1469
      %v1471 = vpop.f32.mrb[0].mxu0
      %1472 = vmatprep.mubr.bf16.mxu0 0
      %1473 = vmatmul.mubr.bf16.gmra.mrb[0].mxu0 %v1412
      %v1474 = vpop.f32.mrb[0].mxu0
      %v1475 = vadd.f32 %v842, %v1474
      %v1476 = vpop.f32.mrb[0].mxu0
      %v1477 = vpop.f32.mrb[0].mxu0
      %v1478 = vadd.f32 %v843, %v1477
      %v1479 = vpop.f32.mrb[0].mxu0
      %1480 = vmatprep.mubr.bf16.mxu0 0
      %1481 = vmatmul.mubr.bf16.gmra.mrb[0].mxu0 %v1415
      %v1482 = vpop.f32.mrb[0].mxu0
      %v1483 = vadd.f32 %v844, %v1482
      %v1484 = vpop.f32.mrb[0].mxu0
      %v1485 = vpop.f32.mrb[0].mxu0
      %v1486 = vadd.f32 %v845, %v1485
      %v1487 = vpop.f32.mrb[0].mxu0
      %1488 = vmatprep.mubr.bf16.mxu0 0
      %1489 = vmatmul.mubr.bf16.gmra.mrb[0].mxu0 %v1418
      %v1490 = vpop.f32.mrb[0].mxu0
      %v1491 = vadd.f32 %v846, %v1490
      %v1492 = vpop.f32.mrb[0].mxu0
      %v1493 = vpop.f32.mrb[0].mxu0
      %v1494 = vadd.f32 %v847, %v1493
      %v1495 = vpop.f32.mrb[0].mxu0
      %1496 = vdwg.mxu0
      %v1497 = vsel %vm1205, %v1467, -inf
      %1498 = vmax.xlane.f32.xlu0 %v1497
      %v1499 = vpop.xlane.xlu0 %1498
      %v1500 = vsel %vm1205, %v1470, -inf
      %1501 = vmax.xlane.f32.xlu0 %v1500
      %v1502 = vpop.xlane.xlu0 %1501
      %v1503 = vsel %vm1205, %v1475, -inf
      %1504 = vmax.xlane.f32.xlu0 %v1503
      %v1505 = vpop.xlane.xlu0 %1504
      %v1506 = vsel %vm1205, %v1478, -inf
      %1507 = vmax.xlane.f32.xlu0 %v1506
      %v1508 = vpop.xlane.xlu0 %1507
      %v1509 = vsel %vm1205, %v1483, -inf
      %1510 = vmax.xlane.f32.xlu0 %v1509
      %v1511 = vpop.xlane.xlu0 %1510
      %v1512 = vsel %vm1205, %v1486, -inf
      %1513 = vmax.xlane.f32.xlu0 %v1512
      %v1514 = vpop.xlane.xlu0 %1513
      %v1515 = vsel %vm1205, %v1491, -inf
      %1516 = vmax.xlane.f32.xlu0 %v1515
      %v1517 = vpop.xlane.xlu0 %1516
      %v1518 = vsel %vm1227, %v1494, -inf
      %1519 = vmax.xlane.f32.xlu0 %v1518
      %v1520 = vpop.xlane.xlu0 %1519
      %v1521 = vsub.f32 %v1467, %v1499
      %v1522 = vsub.f32 %v1470, %v1502
      %v1523 = vsub.f32 %v1475, %v1505
      %v1524 = vsub.f32 %v1478, %v1508
      %v1525 = vsub.f32 %v1483, %v1511
      %v1526 = vsub.f32 %v1486, %v1514
      %v1527 = vsub.f32 %v1491, %v1517
      %v1528 = vsub.f32 %v1494, %v1520
      %v1529 = vmul.f32 %v1521, 1.442695
      %v1530 = vpow.pop %v1529
      %v1531 = vmul.f32 %v1522, 1.442695
      %v1532 = vpow.pop %v1531
      %v1533 = vmul.f32 %v1523, 1.442695
      %v1534 = vpow.pop %v1533
      %v1535 = vmul.f32 %v1524, 1.442695
      %v1536 = vpow.pop %v1535
      %v1537 = vmul.f32 %v1525, 1.442695
      %v1538 = vpow.pop %v1537
      %v1539 = vmul.f32 %v1526, 1.442695
      %v1540 = vpow.pop %v1539
      %v1541 = vmul.f32 %v1527, 1.442695
      %v1542 = vpow.pop %v1541
      %v1543 = vmul.f32 %v1528, 1.442695
      %v1544 = vpow.pop %v1543
      %v1545 = vsel %vm1205, %v1530, 0.0
      %1546 = vadd.xlane.f32.xlu0 %v1545
      %v1547 = vpop.xlane.xlu0 %1546
      %v1548 = vsel %vm1205, %v1532, 0.0
      %1549 = vadd.xlane.f32.xlu0 %v1548
      %v1550 = vpop.xlane.xlu0 %1549
      %v1551 = vsel %vm1205, %v1534, 0.0
      %1552 = vadd.xlane.f32.xlu0 %v1551
      %v1553 = vpop.xlane.xlu0 %1552
      %v1554 = vsel %vm1205, %v1536, 0.0
      %1555 = vadd.xlane.f32.xlu0 %v1554
      %v1556 = vpop.xlane.xlu0 %1555
      %v1557 = vsel %vm1205, %v1538, 0.0
      %1558 = vadd.xlane.f32.xlu0 %v1557
      %v1559 = vpop.xlane.xlu0 %1558
      %v1560 = vsel %vm1205, %v1540, 0.0
      %1561 = vadd.xlane.f32.xlu0 %v1560
      %v1562 = vpop.xlane.xlu0 %1561
      %v1563 = vsel %vm1205, %v1542, 0.0
      %1564 = vadd.xlane.f32.xlu0 %v1563
      %v1565 = vpop.xlane.xlu0 %1564
      %v1566 = vsel %vm1227, %v1544, 0.0
      %1567 = vadd.xlane.f32.xlu0 %v1566
      %v1568 = vpop.xlane.xlu0 %1567
      %v1569 = vrcp.pop %v1547
      %v1570 = vrcp.pop %v1550
      %v1571 = vrcp.pop %v1553
      %v1572 = vrcp.pop %v1556
      %v1573 = vrcp.pop %v1559
      %v1574 = vrcp.pop %v1562
      %v1575 = vrcp.pop %v1565
      %v1576 = vrcp.pop %v1568
      %v1577 = vmul.f32 %v1530, %v1569
      %v1578 = vmul.f32 %v1532, %v1570
      %v1579 = vmul.f32 %v1534, %v1571
      %v1580 = vmul.f32 %v1536, %v1572
      %v1581 = vmul.f32 %v1538, %v1573
      %v1582 = vmul.f32 %v1540, %v1574
      %v1583 = vmul.f32 %v1542, %v1575
      %v1584 = vmul.f32 %v1544, %v1576
      %v1585 = vpack.c.bf16 %v1578, %v1577
      %v1586 = vpack.c.bf16 %v1580, %v1579
      %v1587 = vpack.c.bf16 %v1582, %v1581
      %v1588 = vpack.c.bf16 %v1584, %v1583
      %1593 = vrot.lane.b32.xlu0 %v1299, 120
      %v1594 = vpop.permute.xlu0 %1593
      %1595 = vrot.lane.b32.xlu0 %v1300, 120
      %v1596 = vpop.permute.xlu0 %1595
      %1597 = vrot.lane.b32.xlu0 %v1301, 120
      %v1598 = vpop.permute.xlu0 %1597
      %1599 = vrot.lane.b32.xlu0 %v1302, 120
      %v1600 = vpop.permute.xlu0 %1599
      %v1605 = vsel %vm1205, %v1585, 0
      %v1608 = vsel %vm1205, %v1586, 0
      %v1611 = vsel %vm1205, %v1587, 0
      %v1614 = vsel %vm1205, %v1588, 0
      %v1617 = vsel %vm1315, %v1600, 0
      %1619 = vmatprep.subr.bf16.mxu0 0
      %1620 = vmatpush1.bf16.msra.mxu0 %v1594
      %1621 = vmatprep.subr.bf16.mxu0 0
      %1622 = vmatpush1.bf16.msra.mxu0 %v1596
      %1623 = vmatprep.subr.bf16.mxu0 0
      %1624 = vmatpush1.bf16.msra.mxu0 %v1598
      %1625 = vmatprep.subr.bf16.mxu0 0
      %1626 = vmatpush1.bf16.msra.mxu0 %v1617
      %1627 = vmatprep.subr.bf16.mxu0 0
      %1628 = vmatpush1.bf16.msra.mxu0 0
      %1629 = vmatprep.subr.bf16.mxu0 0
      %1630 = vmatpush1.bf16.msra.mxu0 0
      %1631 = vmatprep.subr.bf16.mxu0 0
      %1632 = vmatpush1.bf16.msra.mxu0 0
      %1633 = vmatprep.subr.bf16.mxu0 0
      %1634 = vmatpush1.bf16.msra.mxu0 0
      %1635 = vmatprep.subr.bf16.mxu0 0
      %1636 = vmatpush1.bf16.msra.mxu0 0
      %1637 = vmatprep.subr.bf16.mxu0 0
      %1638 = vmatpush1.bf16.msra.mxu0 0
      %1639 = vmatprep.subr.bf16.mxu0 0
      %1640 = vmatpush1.bf16.msra.mxu0 0
      %1641 = vmatprep.subr.bf16.mxu0 0
      %1642 = vmatpush1.bf16.msra.mxu0 0
      %1643 = vmatprep.subr.bf16.mxu0 0
      %1644 = vmatpush1.bf16.msra.mxu0 0
      %1645 = vmatprep.subr.bf16.mxu0 0
      %1646 = vmatpush1.bf16.msra.mxu0 0
      %1647 = vmatprep.subr.bf16.mxu0 0
      %1648 = vmatpush1.bf16.msra.mxu0 0
      %1649 = vmatprep.subr.bf16.mxu0 0
      %1650 = vmatpush1.bf16.msra.mxu0 0
      %1651 = vmatprep.mubr.bf16.mxu0 0
      %1652 = vmatmul.mubr.bf16.gmra.mrb[0].mxu0 %v1605
      %v1653 = vpop.f32.mrb[0].mxu0
      %v1654 = vadd.f32 0.0, %v1653
      %v1655 = vpop.f32.mrb[0].mxu0
      %v1656 = vpop.f32.mrb[0].mxu0
      %v1657 = vadd.f32 0.0, %v1656
      %v1658 = vpop.f32.mrb[0].mxu0
      %1659 = vmatprep.mubr.bf16.mxu0 0
      %1660 = vmatmul.mubr.bf16.gmra.mrb[0].mxu0 %v1608
      %v1661 = vpop.f32.mrb[0].mxu0
      %v1662 = vadd.f32 0.0, %v1661
      %v1663 = vpop.f32.mrb[0].mxu0
      %v1664 = vpop.f32.mrb[0].mxu0
      %v1665 = vadd.f32 0.0, %v1664
      %v1666 = vpop.f32.mrb[0].mxu0
      %1667 = vmatprep.mubr.bf16.mxu0 0
      %1668 = vmatmul.mubr.bf16.gmra.mrb[0].mxu0 %v1611
      %v1669 = vpop.f32.mrb[0].mxu0
      %v1670 = vadd.f32 0.0, %v1669
      %v1671 = vpop.f32.mrb[0].mxu0
      %v1672 = vpop.f32.mrb[0].mxu0
      %v1673 = vadd.f32 0.0, %v1672
      %v1674 = vpop.f32.mrb[0].mxu0
      %1675 = vmatprep.mubr.bf16.mxu0 0
      %1676 = vmatmul.mubr.bf16.gmra.mrb[0].mxu0 %v1614
      %v1677 = vpop.f32.mrb[0].mxu0
      %v1678 = vadd.f32 0.0, %v1677
      %v1679 = vpop.f32.mrb[0].mxu0
      %v1680 = vpop.f32.mrb[0].mxu0
      %v1681 = vadd.f32 0.0, %v1680
      %v1682 = vpop.f32.mrb[0].mxu0
      %1683 = vdwg.mxu0
      %1684 = vrot.lane.b32.xlu0 %v1107, 112
      %v1685 = vpop.permute.xlu0 %1684
      %1686 = vrot.lane.b32.xlu0 %v1108, 112
      %v1687 = vpop.permute.xlu0 %1686
      %1688 = vrot.lane.b32.xlu0 %v1109, 112
      %v1689 = vpop.permute.xlu0 %1688
      %1690 = vrot.lane.b32.xlu0 %v1110, 112
      %v1691 = vpop.permute.xlu0 %1690
      %1692 = vrot.lane.b32.xlu0 %v1111, 112
      %v1693 = vpop.permute.xlu0 %1692
      %1694 = vrot.lane.b32.xlu0 %v1112, 112
      %v1695 = vpop.permute.xlu0 %1694
      %1696 = vrot.lane.b32.xlu0 %v1113, 112
      %v1697 = vpop.permute.xlu0 %1696
      %1698 = vrot.lane.b32.xlu0 %v1114, 112
      %v1699 = vpop.permute.xlu0 %1698
      %v1701 = vsel %vm1115, %v1685, 0
      %v1704 = vsel %vm1115, %v1687, 0
      %v1707 = vsel %vm1115, %v1689, 0
      %v1710 = vsel %vm1115, %v1691, 0
      %v1713 = vsel %vm1115, %v1693, 0
      %v1716 = vsel %vm1115, %v1695, 0
      %v1719 = vsel %vm1115, %v1697, 0
      %v1722 = vsel %vm1115, %v1699, 0
      %1724 = vmatprep.subr.bf16.mxu0 0
      %1725 = vmatpush1.bf16.xpose.msra.mxu0 %v1713
      %1726 = vmatprep.subr.bf16.mxu0 0
      %1727 = vmatpush1.bf16.xpose.msra.mxu0 %v1716
      %1728 = vmatprep.subr.bf16.mxu0 0
      %1729 = vmatpush1.bf16.xpose.msra.mxu0 %v1719
      %1730 = vmatprep.subr.bf16.mxu0 0
      %1731 = vmatpush1.bf16.xpose.msra.mxu0 %v1722
      %1732 = vmatprep.subr.bf16.mxu0 0
      %1733 = vmatpush1.bf16.xpose.msra.mxu0 0
      %1734 = vmatprep.subr.bf16.mxu0 0
      %1735 = vmatpush1.bf16.xpose.msra.mxu0 0
      %1736 = vmatprep.subr.bf16.mxu0 0
      %1737 = vmatpush1.bf16.xpose.msra.mxu0 0
      %1738 = vmatprep.subr.bf16.mxu0 0
      %1739 = vmatpush1.bf16.xpose.msra.mxu0 0
      %1740 = vmatprep.subr.bf16.mxu0 0
      %1741 = vmatpush1.bf16.xpose.msra.mxu0 0
      %1742 = vmatprep.subr.bf16.mxu0 0
      %1743 = vmatpush1.bf16.xpose.msra.mxu0 0
      %1744 = vmatprep.subr.bf16.mxu0 0
      %1745 = vmatpush1.bf16.xpose.msra.mxu0 0
      %1746 = vmatprep.subr.bf16.mxu0 0
      %1747 = vmatpush1.bf16.xpose.msra.mxu0 0
      %1748 = vmatprep.subr.bf16.mxu0 0
      %1749 = vmatpush1.bf16.xpose.msra.mxu0 0
      %1750 = vmatprep.subr.bf16.mxu0 0
      %1751 = vmatpush1.bf16.xpose.msra.mxu0 0
      %1752 = vmatprep.subr.bf16.mxu0 0
      %1753 = vmatpush1.bf16.xpose.msra.mxu0 0
      %1754 = vmatprep.subr.bf16.mxu0 0
      %1755 = vmatpush1.bf16.xpose.msra.mxu0 0
      %1756 = vmatprep.mubr.bf16.mxu0 0
      %1757 = vmatmul.mubr.bf16.gmra.mrb[0].mxu0 %v1701
      %v1758 = vpop.f32.mrb[0].mxu0
      %v1759 = vadd.f32 %v840, %v1758
      %v1760 = vpop.f32.mrb[0].mxu0
      %v1761 = vpop.f32.mrb[0].mxu0
      %v1762 = vadd.f32 %v841, %v1761
      %v1763 = vpop.f32.mrb[0].mxu0
      %1764 = vmatprep.mubr.bf16.mxu0 0
      %1765 = vmatmul.mubr.bf16.gmra.mrb[0].mxu0 %v1704
      %v1766 = vpop.f32.mrb[0].mxu0
      %v1767 = vadd.f32 %v842, %v1766
      %v1768 = vpop.f32.mrb[0].mxu0
      %v1769 = vpop.f32.mrb[0].mxu0
      %v1770 = vadd.f32 %v843, %v1769
      %v1771 = vpop.f32.mrb[0].mxu0
      %1772 = vmatprep.mubr.bf16.mxu0 0
      %1773 = vmatmul.mubr.bf16.gmra.mrb[0].mxu0 %v1707
      %v1774 = vpop.f32.mrb[0].mxu0
      %v1775 = vadd.f32 %v844, %v1774
      %v1776 = vpop.f32.mrb[0].mxu0
      %v1777 = vpop.f32.mrb[0].mxu0
      %v1778 = vadd.f32 %v845, %v1777
      %v1779 = vpop.f32.mrb[0].mxu0
      %1780 = vmatprep.mubr.bf16.mxu0 0
      %1781 = vmatmul.mubr.bf16.gmra.mrb[0].mxu0 %v1710
      %v1782 = vpop.f32.mrb[0].mxu0
      %v1783 = vadd.f32 %v846, %v1782
      %v1784 = vpop.f32.mrb[0].mxu0
      %v1785 = vpop.f32.mrb[0].mxu0
      %v1786 = vadd.f32 %v847, %v1785
      %v1787 = vpop.f32.mrb[0].mxu0
      %1788 = vdwg.mxu0
      %v1789 = vsel %vm1205, %v1759, -inf
      %1790 = vmax.xlane.f32.xlu0 %v1789
      %v1791 = vpop.xlane.xlu0 %1790
      %v1792 = vsel %vm1205, %v1762, -inf
      %1793 = vmax.xlane.f32.xlu0 %v1792
      %v1794 = vpop.xlane.xlu0 %1793
      %v1795 = vsel %vm1205, %v1767, -inf
      %1796 = vmax.xlane.f32.xlu0 %v1795
      %v1797 = vpop.xlane.xlu0 %1796
      %v1798 = vsel %vm1205, %v1770, -inf
      %1799 = vmax.xlane.f32.xlu0 %v1798
      %v1800 = vpop.xlane.xlu0 %1799
      %v1801 = vsel %vm1205, %v1775, -inf
      %1802 = vmax.xlane.f32.xlu0 %v1801
      %v1803 = vpop.xlane.xlu0 %1802
      %v1804 = vsel %vm1205, %v1778, -inf
      %1805 = vmax.xlane.f32.xlu0 %v1804
      %v1806 = vpop.xlane.xlu0 %1805
      %v1807 = vsel %vm1205, %v1783, -inf
      %1808 = vmax.xlane.f32.xlu0 %v1807
      %v1809 = vpop.xlane.xlu0 %1808
      %v1810 = vsel %vm1227, %v1786, -inf
      %1811 = vmax.xlane.f32.xlu0 %v1810
      %v1812 = vpop.xlane.xlu0 %1811
      %v1813 = vsub.f32 %v1759, %v1791
      %v1814 = vsub.f32 %v1762, %v1794
      %v1815 = vsub.f32 %v1767, %v1797
      %v1816 = vsub.f32 %v1770, %v1800
      %v1817 = vsub.f32 %v1775, %v1803
      %v1818 = vsub.f32 %v1778, %v1806
      %v1819 = vsub.f32 %v1783, %v1809
      %v1820 = vsub.f32 %v1786, %v1812
      %v1821 = vmul.f32 %v1813, 1.442695
      %v1822 = vpow.pop %v1821
      %v1823 = vmul.f32 %v1814, 1.442695
      %v1824 = vpow.pop %v1823
      %v1825 = vmul.f32 %v1815, 1.442695
      %v1826 = vpow.pop %v1825
      %v1827 = vmul.f32 %v1816, 1.442695
      %v1828 = vpow.pop %v1827
      %v1829 = vmul.f32 %v1817, 1.442695
      %v1830 = vpow.pop %v1829
      %v1831 = vmul.f32 %v1818, 1.442695
      %v1832 = vpow.pop %v1831
      %v1833 = vmul.f32 %v1819, 1.442695
      %v1834 = vpow.pop %v1833
      %v1835 = vmul.f32 %v1820, 1.442695
      %v1836 = vpow.pop %v1835
      %v1837 = vsel %vm1205, %v1822, 0.0
      %1838 = vadd.xlane.f32.xlu0 %v1837
      %v1839 = vpop.xlane.xlu0 %1838
      %v1840 = vsel %vm1205, %v1824, 0.0
      %1841 = vadd.xlane.f32.xlu0 %v1840
      %v1842 = vpop.xlane.xlu0 %1841
      %v1843 = vsel %vm1205, %v1826, 0.0
      %1844 = vadd.xlane.f32.xlu0 %v1843
      %v1845 = vpop.xlane.xlu0 %1844
      %v1846 = vsel %vm1205, %v1828, 0.0
      %1847 = vadd.xlane.f32.xlu0 %v1846
      %v1848 = vpop.xlane.xlu0 %1847
      %v1849 = vsel %vm1205, %v1830, 0.0
      %1850 = vadd.xlane.f32.xlu0 %v1849
      %v1851 = vpop.xlane.xlu0 %1850
      %v1852 = vsel %vm1205, %v1832, 0.0
      %1853 = vadd.xlane.f32.xlu0 %v1852
      %v1854 = vpop.xlane.xlu0 %1853
      %v1855 = vsel %vm1205, %v1834, 0.0
      %1856 = vadd.xlane.f32.xlu0 %v1855
      %v1857 = vpop.xlane.xlu0 %1856
      %v1858 = vsel %vm1227, %v1836, 0.0
      %1859 = vadd.xlane.f32.xlu0 %v1858
      %v1860 = vpop.xlane.xlu0 %1859
      %v1861 = vrcp.pop %v1839
      %v1862 = vrcp.pop %v1842
      %v1863 = vrcp.pop %v1845
      %v1864 = vrcp.pop %v1848
      %v1865 = vrcp.pop %v1851
      %v1866 = vrcp.pop %v1854
      %v1867 = vrcp.pop %v1857
      %v1868 = vrcp.pop %v1860
      %v1869 = vmul.f32 %v1822, %v1861
      %v1870 = vmul.f32 %v1824, %v1862
      %v1871 = vmul.f32 %v1826, %v1863
      %v1872 = vmul.f32 %v1828, %v1864
      %v1873 = vmul.f32 %v1830, %v1865
      %v1874 = vmul.f32 %v1832, %v1866
      %v1875 = vmul.f32 %v1834, %v1867
      %v1876 = vmul.f32 %v1836, %v1868
      %v1877 = vpack.c.bf16 %v1870, %v1869
      %v1878 = vpack.c.bf16 %v1872, %v1871
      %v1879 = vpack.c.bf16 %v1874, %v1873
      %v1880 = vpack.c.bf16 %v1876, %v1875
      %1881 = vrot.lane.b32.xlu0 %v1299, 112
      %v1882 = vpop.permute.xlu0 %1881
      %1883 = vrot.lane.b32.xlu0 %v1300, 112
      %v1884 = vpop.permute.xlu0 %1883
      %1885 = vrot.lane.b32.xlu0 %v1301, 112
      %v1886 = vpop.permute.xlu0 %1885
      %1887 = vrot.lane.b32.xlu0 %v1302, 112
      %v1888 = vpop.permute.xlu0 %1887
      %v1893 = vsel %vm1205, %v1877, 0
      %v1896 = vsel %vm1205, %v1878, 0
      %v1899 = vsel %vm1205, %v1879, 0
      %v1902 = vsel %vm1205, %v1880, 0
      %v1905 = vsel %vm1315, %v1888, 0
      %1907 = vmatprep.subr.bf16.mxu0 0
      %1908 = vmatpush1.bf16.msra.mxu0 %v1882
      %1909 = vmatprep.subr.bf16.mxu0 0
      %1910 = vmatpush1.bf16.msra.mxu0 %v1884
      %1911 = vmatprep.subr.bf16.mxu0 0
      %1912 = vmatpush1.bf16.msra.mxu0 %v1886
      %1913 = vmatprep.subr.bf16.mxu0 0
      %1914 = vmatpush1.bf16.msra.mxu0 %v1905
      %1915 = vmatprep.subr.bf16.mxu0 0
      %1916 = vmatpush1.bf16.msra.mxu0 0
      %1917 = vmatprep.subr.bf16.mxu0 0
      %1918 = vmatpush1.bf16.msra.mxu0 0
      %1919 = vmatprep.subr.bf16.mxu0 0
      %1920 = vmatpush1.bf16.msra.mxu0 0
      %1921 = vmatprep.subr.bf16.mxu0 0
      %1922 = vmatpush1.bf16.msra.mxu0 0
      %1923 = vmatprep.subr.bf16.mxu0 0
      %1924 = vmatpush1.bf16.msra.mxu0 0
      %1925 = vmatprep.subr.bf16.mxu0 0
      %1926 = vmatpush1.bf16.msra.mxu0 0
      %1927 = vmatprep.subr.bf16.mxu0 0
      %1928 = vmatpush1.bf16.msra.mxu0 0
      %1929 = vmatprep.subr.bf16.mxu0 0
      %1930 = vmatpush1.bf16.msra.mxu0 0
      %1931 = vmatprep.subr.bf16.mxu0 0
      %1932 = vmatpush1.bf16.msra.mxu0 0
      %1933 = vmatprep.subr.bf16.mxu0 0
      %1934 = vmatpush1.bf16.msra.mxu0 0
      %1935 = vmatprep.subr.bf16.mxu0 0
      %1936 = vmatpush1.bf16.msra.mxu0 0
      %1937 = vmatprep.subr.bf16.mxu0 0
      %1938 = vmatpush1.bf16.msra.mxu0 0
      %1939 = vmatprep.mubr.bf16.mxu0 0
      %1940 = vmatmul.mubr.bf16.gmra.mrb[0].mxu0 %v1893
      %v1941 = vpop.f32.mrb[0].mxu0
      %v1942 = vadd.f32 0.0, %v1941
      %v1943 = vpop.f32.mrb[0].mxu0
      %v1944 = vpop.f32.mrb[0].mxu0
      %v1945 = vadd.f32 0.0, %v1944
      %v1946 = vpop.f32.mrb[0].mxu0
      %1947 = vmatprep.mubr.bf16.mxu0 0
      %1948 = vmatmul.mubr.bf16.gmra.mrb[0].mxu0 %v1896
      %v1949 = vpop.f32.mrb[0].mxu0
      %v1950 = vadd.f32 0.0, %v1949
      %v1951 = vpop.f32.mrb[0].mxu0
      %v1952 = vpop.f32.mrb[0].mxu0
      %v1953 = vadd.f32 0.0, %v1952
      %v1954 = vpop.f32.mrb[0].mxu0
      %1955 = vmatprep.mubr.bf16.mxu0 0
      %1956 = vmatmul.mubr.bf16.gmra.mrb[0].mxu0 %v1899
      %v1957 = vpop.f32.mrb[0].mxu0
      %v1958 = vadd.f32 0.0, %v1957
      %v1959 = vpop.f32.mrb[0].mxu0
      %v1960 = vpop.f32.mrb[0].mxu0
      %v1961 = vadd.f32 0.0, %v1960
      %v1962 = vpop.f32.mrb[0].mxu0
      %1963 = vmatprep.mubr.bf16.mxu0 0
      %1964 = vmatmul.mubr.bf16.gmra.mrb[0].mxu0 %v1902
      %v1965 = vpop.f32.mrb[0].mxu0
      %v1966 = vadd.f32 0.0, %v1965
      %v1967 = vpop.f32.mrb[0].mxu0
      %v1968 = vpop.f32.mrb[0].mxu0
      %v1969 = vadd.f32 0.0, %v1968
      %v1970 = vpop.f32.mrb[0].mxu0
      %1971 = vdwg.mxu0
      %1972 = vrot.lane.b32.xlu0 %v1107, 104
      %v1973 = vpop.permute.xlu0 %1972
      %1974 = vrot.lane.b32.xlu0 %v1108, 104
      %v1975 = vpop.permute.xlu0 %1974
      %1976 = vrot.lane.b32.xlu0 %v1109, 104
      %v1977 = vpop.permute.xlu0 %1976
      %1978 = vrot.lane.b32.xlu0 %v1110, 104
      %v1979 = vpop.permute.xlu0 %1978
      %1980 = vrot.lane.b32.xlu0 %v1111, 104
      %v1981 = vpop.permute.xlu0 %1980
      %1982 = vrot.lane.b32.xlu0 %v1112, 104
      %v1983 = vpop.permute.xlu0 %1982
      %1984 = vrot.lane.b32.xlu0 %v1113, 104
      %v1985 = vpop.permute.xlu0 %1984
      %1986 = vrot.lane.b32.xlu0 %v1114, 104
      %v1987 = vpop.permute.xlu0 %1986
      %v1989 = vsel %vm1115, %v1973, 0
      %v1992 = vsel %vm1115, %v1975, 0
      %v1995 = vsel %vm1115, %v1977, 0
      %v1998 = vsel %vm1115, %v1979, 0
      %v2001 = vsel %vm1115, %v1981, 0
      %v2004 = vsel %vm1115, %v1983, 0
      %v2007 = vsel %vm1115, %v1985, 0
      %v2010 = vsel %vm1115, %v1987, 0
      %2012 = vmatprep.subr.bf16.mxu0 0
      %2013 = vmatpush1.bf16.xpose.msra.mxu0 %v2001
      %2014 = vmatprep.subr.bf16.mxu0 0
      %2015 = vmatpush1.bf16.xpose.msra.mxu0 %v2004
      %2016 = vmatprep.subr.bf16.mxu0 0
      %2017 = vmatpush1.bf16.xpose.msra.mxu0 %v2007
      %2018 = vmatprep.subr.bf16.mxu0 0
      %2019 = vmatpush1.bf16.xpose.msra.mxu0 %v2010
      %2020 = vmatprep.subr.bf16.mxu0 0
      %2021 = vmatpush1.bf16.xpose.msra.mxu0 0
      %2022 = vmatprep.subr.bf16.mxu0 0
      %2023 = vmatpush1.bf16.xpose.msra.mxu0 0
      %2024 = vmatprep.subr.bf16.mxu0 0
      %2025 = vmatpush1.bf16.xpose.msra.mxu0 0
      %2026 = vmatprep.subr.bf16.mxu0 0
      %2027 = vmatpush1.bf16.xpose.msra.mxu0 0
      %2028 = vmatprep.subr.bf16.mxu0 0
      %2029 = vmatpush1.bf16.xpose.msra.mxu0 0
      %2030 = vmatprep.subr.bf16.mxu0 0
      %2031 = vmatpush1.bf16.xpose.msra.mxu0 0
      %2032 = vmatprep.subr.bf16.mxu0 0
      %2033 = vmatpush1.bf16.xpose.msra.mxu0 0
      %2034 = vmatprep.subr.bf16.mxu0 0
      %2035 = vmatpush1.bf16.xpose.msra.mxu0 0
      %2036 = vmatprep.subr.bf16.mxu0 0
      %2037 = vmatpush1.bf16.xpose.msra.mxu0 0
      %2038 = vmatprep.subr.bf16.mxu0 0
      %2039 = vmatpush1.bf16.xpose.msra.mxu0 0
      %2040 = vmatprep.subr.bf16.mxu0 0
      %2041 = vmatpush1.bf16.xpose.msra.mxu0 0
      %2042 = vmatprep.subr.bf16.mxu0 0
      %2043 = vmatpush1.bf16.xpose.msra.mxu0 0
      %2044 = vmatprep.mubr.bf16.mxu0 0
      %2045 = vmatmul.mubr.bf16.gmra.mrb[0].mxu0 %v1989
      %v2046 = vpop.f32.mrb[0].mxu0
      %v2047 = vadd.f32 %v840, %v2046
      %v2048 = vpop.f32.mrb[0].mxu0
      %v2049 = vpop.f32.mrb[0].mxu0
      %v2050 = vadd.f32 %v841, %v2049
      %v2051 = vpop.f32.mrb[0].mxu0
      %2052 = vmatprep.mubr.bf16.mxu0 0
      %2053 = vmatmul.mubr.bf16.gmra.mrb[0].mxu0 %v1992
      %v2054 = vpop.f32.mrb[0].mxu0
      %v2055 = vadd.f32 %v842, %v2054
      %v2056 = vpop.f32.mrb[0].mxu0
      %v2057 = vpop.f32.mrb[0].mxu0
      %v2058 = vadd.f32 %v843, %v2057
      %v2059 = vpop.f32.mrb[0].mxu0
      %2060 = vmatprep.mubr.bf16.mxu0 0
      %2061 = vmatmul.mubr.bf16.gmra.mrb[0].mxu0 %v1995
      %v2062 = vpop.f32.mrb[0].mxu0
      %v2063 = vadd.f32 %v844, %v2062
      %v2064 = vpop.f32.mrb[0].mxu0
      %v2065 = vpop.f32.mrb[0].mxu0
      %v2066 = vadd.f32 %v845, %v2065
      %v2067 = vpop.f32.mrb[0].mxu0
      %2068 = vmatprep.mubr.bf16.mxu0 0
      %2069 = vmatmul.mubr.bf16.gmra.mrb[0].mxu0 %v1998
      %v2070 = vpop.f32.mrb[0].mxu0
      %v2071 = vadd.f32 %v846, %v2070
      %v2072 = vpop.f32.mrb[0].mxu0
      %v2073 = vpop.f32.mrb[0].mxu0
      %v2074 = vadd.f32 %v847, %v2073
      %v2075 = vpop.f32.mrb[0].mxu0
      %2076 = vdwg.mxu0
      %v2077 = vsel %vm1205, %v2047, -inf
      %2078 = vmax.xlane.f32.xlu0 %v2077
      %v2079 = vpop.xlane.xlu0 %2078
      %v2080 = vsel %vm1205, %v2050, -inf
      %2081 = vmax.xlane.f32.xlu0 %v2080
      %v2082 = vpop.xlane.xlu0 %2081
      %v2083 = vsel %vm1205, %v2055, -inf
      %2084 = vmax.xlane.f32.xlu0 %v2083
      %v2085 = vpop.xlane.xlu0 %2084
      %v2086 = vsel %vm1205, %v2058, -inf
      %2087 = vmax.xlane.f32.xlu0 %v2086
      %v2088 = vpop.xlane.xlu0 %2087
      %v2089 = vsel %vm1205, %v2063, -inf
      %2090 = vmax.xlane.f32.xlu0 %v2089
      %v2091 = vpop.xlane.xlu0 %2090
      %v2092 = vsel %vm1205, %v2066, -inf
      %2093 = vmax.xlane.f32.xlu0 %v2092
      %v2094 = vpop.xlane.xlu0 %2093
      %v2095 = vsel %vm1205, %v2071, -inf
      %2096 = vmax.xlane.f32.xlu0 %v2095
      %v2097 = vpop.xlane.xlu0 %2096
      %v2098 = vsel %vm1227, %v2074, -inf
      %2099 = vmax.xlane.f32.xlu0 %v2098
      %v2100 = vpop.xlane.xlu0 %2099
      %v2101 = vsub.f32 %v2047, %v2079
      %v2102 = vsub.f32 %v2050, %v2082
      %v2103 = vsub.f32 %v2055, %v2085
      %v2104 = vsub.f32 %v2058, %v2088
      %v2105 = vsub.f32 %v2063, %v2091
      %v2106 = vsub.f32 %v2066, %v2094
      %v2107 = vsub.f32 %v2071, %v2097
      %v2108 = vsub.f32 %v2074, %v2100
      %v2109 = vmul.f32 %v2101, 1.442695
      %v2110 = vpow.pop %v2109
      %v2111 = vmul.f32 %v2102, 1.442695
      %v2112 = vpow.pop %v2111
      %v2113 = vmul.f32 %v2103, 1.442695
      %v2114 = vpow.pop %v2113
      %v2115 = vmul.f32 %v2104, 1.442695
      %v2116 = vpow.pop %v2115
      %v2117 = vmul.f32 %v2105, 1.442695
      %v2118 = vpow.pop %v2117
      %v2119 = vmul.f32 %v2106, 1.442695
      %v2120 = vpow.pop %v2119
      %v2121 = vmul.f32 %v2107, 1.442695
      %v2122 = vpow.pop %v2121
      %v2123 = vmul.f32 %v2108, 1.442695
      %v2124 = vpow.pop %v2123
      %v2125 = vsel %vm1205, %v2110, 0.0
      %2126 = vadd.xlane.f32.xlu0 %v2125
      %v2127 = vpop.xlane.xlu0 %2126
      %v2128 = vsel %vm1205, %v2112, 0.0
      %2129 = vadd.xlane.f32.xlu0 %v2128
      %v2130 = vpop.xlane.xlu0 %2129
      %v2131 = vsel %vm1205, %v2114, 0.0
      %2132 = vadd.xlane.f32.xlu0 %v2131
      %v2133 = vpop.xlane.xlu0 %2132
      %v2134 = vsel %vm1205, %v2116, 0.0
      %2135 = vadd.xlane.f32.xlu0 %v2134
      %v2136 = vpop.xlane.xlu0 %2135
      %v2137 = vsel %vm1205, %v2118, 0.0
      %2138 = vadd.xlane.f32.xlu0 %v2137
      %v2139 = vpop.xlane.xlu0 %2138
      %v2140 = vsel %vm1205, %v2120, 0.0
      %2141 = vadd.xlane.f32.xlu0 %v2140
      %v2142 = vpop.xlane.xlu0 %2141
      %v2143 = vsel %vm1205, %v2122, 0.0
      %2144 = vadd.xlane.f32.xlu0 %v2143
      %v2145 = vpop.xlane.xlu0 %2144
      %v2146 = vsel %vm1227, %v2124, 0.0
      %2147 = vadd.xlane.f32.xlu0 %v2146
      %v2148 = vpop.xlane.xlu0 %2147
      %v2149 = vrcp.pop %v2127
      %v2150 = vrcp.pop %v2130
      %v2151 = vrcp.pop %v2133
      %v2152 = vrcp.pop %v2136
      %v2153 = vrcp.pop %v2139
      %v2154 = vrcp.pop %v2142
      %v2155 = vrcp.pop %v2145
      %v2156 = vrcp.pop %v2148
      %v2157 = vmul.f32 %v2110, %v2149
      %v2158 = vmul.f32 %v2112, %v2150
      %v2159 = vmul.f32 %v2114, %v2151
      %v2160 = vmul.f32 %v2116, %v2152
      %v2161 = vmul.f32 %v2118, %v2153
      %v2162 = vmul.f32 %v2120, %v2154
      %v2163 = vmul.f32 %v2122, %v2155
      %v2164 = vmul.f32 %v2124, %v2156
      %v2165 = vpack.c.bf16 %v2158, %v2157
      %v2166 = vpack.c.bf16 %v2160, %v2159
      %v2167 = vpack.c.bf16 %v2162, %v2161
      %v2168 = vpack.c.bf16 %v2164, %v2163
      %2169 = vrot.lane.b32.xlu0 %v1299, 104
      %v2170 = vpop.permute.xlu0 %2169
      %2171 = vrot.lane.b32.xlu0 %v1300, 104
      %v2172 = vpop.permute.xlu0 %2171
      %2173 = vrot.lane.b32.xlu0 %v1301, 104
      %v2174 = vpop.permute.xlu0 %2173
      %2175 = vrot.lane.b32.xlu0 %v1302, 104
      %v2176 = vpop.permute.xlu0 %2175
      %v2181 = vsel %vm1205, %v2165, 0
      %v2184 = vsel %vm1205, %v2166, 0
      %v2187 = vsel %vm1205, %v2167, 0
      %v2190 = vsel %vm1205, %v2168, 0
      %v2193 = vsel %vm1315, %v2176, 0
      %2195 = vmatprep.subr.bf16.mxu0 0
      %2196 = vmatpush1.bf16.msra.mxu0 %v2170
      %2197 = vmatprep.subr.bf16.mxu0 0
      %2198 = vmatpush1.bf16.msra.mxu0 %v2172
      %2199 = vmatprep.subr.bf16.mxu0 0
      %2200 = vmatpush1.bf16.msra.mxu0 %v2174
      %2201 = vmatprep.subr.bf16.mxu0 0
      %2202 = vmatpush1.bf16.msra.mxu0 %v2193
      %2203 = vmatprep.subr.bf16.mxu0 0
      %2204 = vmatpush1.bf16.msra.mxu0 0
      %2205 = vmatprep.subr.bf16.mxu0 0
      %2206 = vmatpush1.bf16.msra.mxu0 0
      %2207 = vmatprep.subr.bf16.mxu0 0
      %2208 = vmatpush1.bf16.msra.mxu0 0
      %2209 = vmatprep.subr.bf16.mxu0 0
      %2210 = vmatpush1.bf16.msra.mxu0 0
      %2211 = vmatprep.subr.bf16.mxu0 0
      %2212 = vmatpush1.bf16.msra.mxu0 0
      %2213 = vmatprep.subr.bf16.mxu0 0
      %2214 = vmatpush1.bf16.msra.mxu0 0
      %2215 = vmatprep.subr.bf16.mxu0 0
      %2216 = vmatpush1.bf16.msra.mxu0 0
      %2217 = vmatprep.subr.bf16.mxu0 0
      %2218 = vmatpush1.bf16.msra.mxu0 0
      %2219 = vmatprep.subr.bf16.mxu0 0
      %2220 = vmatpush1.bf16.msra.mxu0 0
      %2221 = vmatprep.subr.bf16.mxu0 0
      %2222 = vmatpush1.bf16.msra.mxu0 0
      %2223 = vmatprep.subr.bf16.mxu0 0
      %2224 = vmatpush1.bf16.msra.mxu0 0
      %2225 = vmatprep.subr.bf16.mxu0 0
      %2226 = vmatpush1.bf16.msra.mxu0 0
      %2227 = vmatprep.mubr.bf16.mxu0 0
      %2228 = vmatmul.mubr.bf16.gmra.mrb[0].mxu0 %v2181
      %v2229 = vpop.f32.mrb[0].mxu0
      %v2230 = vadd.f32 0.0, %v2229
      %v2231 = vpop.f32.mrb[0].mxu0
      %v2232 = vpop.f32.mrb[0].mxu0
      %v2233 = vadd.f32 0.0, %v2232
      %v2234 = vpop.f32.mrb[0].mxu0
      %2235 = vmatprep.mubr.bf16.mxu0 0
      %2236 = vmatmul.mubr.bf16.gmra.mrb[0].mxu0 %v2184
      %v2237 = vpop.f32.mrb[0].mxu0
      %v2238 = vadd.f32 0.0, %v2237
      %v2239 = vpop.f32.mrb[0].mxu0
      %v2240 = vpop.f32.mrb[0].mxu0
      %v2241 = vadd.f32 0.0, %v2240
      %v2242 = vpop.f32.mrb[0].mxu0
      %2243 = vmatprep.mubr.bf16.mxu0 0
      %2244 = vmatmul.mubr.bf16.gmra.mrb[0].mxu0 %v2187
      %v2245 = vpop.f32.mrb[0].mxu0
      %v2246 = vadd.f32 0.0, %v2245
      %v2247 = vpop.f32.mrb[0].mxu0
      %v2248 = vpop.f32.mrb[0].mxu0
      %v2249 = vadd.f32 0.0, %v2248
      %v2250 = vpop.f32.mrb[0].mxu0
      %2251 = vmatprep.mubr.bf16.mxu0 0
      %2252 = vmatmul.mubr.bf16.gmra.mrb[0].mxu0 %v2190
      %v2253 = vpop.f32.mrb[0].mxu0
      %v2254 = vadd.f32 0.0, %v2253
      %v2255 = vpop.f32.mrb[0].mxu0
      %v2256 = vpop.f32.mrb[0].mxu0
      %v2257 = vadd.f32 0.0, %v2256
      %v2258 = vpop.f32.mrb[0].mxu0
      %2259 = vdwg.mxu0
      %2268 = vrot.lane.b32.xlu0 %v1654, 8
      %v2269 = vpop.permute.xlu0 %2268
      %2270 = vrot.lane.b32.xlu0 %v1657, 8
      %v2271 = vpop.permute.xlu0 %2270
      %2272 = vrot.lane.b32.xlu0 %v1662, 8
      %v2273 = vpop.permute.xlu0 %2272
      %2274 = vrot.lane.b32.xlu0 %v1665, 8
      %v2275 = vpop.permute.xlu0 %2274
      %2276 = vrot.lane.b32.xlu0 %v1670, 8
      %v2277 = vpop.permute.xlu0 %2276
      %2278 = vrot.lane.b32.xlu0 %v1673, 8
      %v2279 = vpop.permute.xlu0 %2278
      %2280 = vrot.lane.b32.xlu0 %v1678, 8
      %v2281 = vpop.permute.xlu0 %2280
      %2282 = vrot.lane.b32.xlu0 %v1681, 8
      %v2283 = vpop.permute.xlu0 %2282
      %2300 = vrot.lane.b32.xlu0 %v1942, 16
      %v2301 = vpop.permute.xlu0 %2300
      %2302 = vrot.lane.b32.xlu0 %v1945, 16
      %v2303 = vpop.permute.xlu0 %2302
      %2304 = vrot.lane.b32.xlu0 %v1950, 16
      %v2305 = vpop.permute.xlu0 %2304
      %2306 = vrot.lane.b32.xlu0 %v1953, 16
      %v2307 = vpop.permute.xlu0 %2306
      %2308 = vrot.lane.b32.xlu0 %v1958, 16
      %v2309 = vpop.permute.xlu0 %2308
      %2310 = vrot.lane.b32.xlu0 %v1961, 16
      %v2311 = vpop.permute.xlu0 %2310
      %2312 = vrot.lane.b32.xlu0 %v1966, 16
      %v2313 = vpop.permute.xlu0 %2312
      %2314 = vrot.lane.b32.xlu0 %v1969, 16
      %v2315 = vpop.permute.xlu0 %2314
      %2332 = vrot.lane.b32.xlu0 %v2230, 24
      %v2333 = vpop.permute.xlu0 %2332
      %2334 = vrot.lane.b32.xlu0 %v2233, 24
      %v2335 = vpop.permute.xlu0 %2334
      %2336 = vrot.lane.b32.xlu0 %v2238, 24
      %v2337 = vpop.permute.xlu0 %2336
      %2338 = vrot.lane.b32.xlu0 %v2241, 24
      %v2339 = vpop.permute.xlu0 %2338
      %2340 = vrot.lane.b32.xlu0 %v2246, 24
      %v2341 = vpop.permute.xlu0 %2340
      %2342 = vrot.lane.b32.xlu0 %v2249, 24
      %v2343 = vpop.permute.xlu0 %2342
      %2344 = vrot.lane.b32.xlu0 %v2254, 24
      %v2345 = vpop.permute.xlu0 %2344
      %2346 = vrot.lane.b32.xlu0 %v2257, 24
      %v2347 = vpop.permute.xlu0 %2346
      %v2356 = vsel %vm1115, %v1354, %v2269
      %v2357 = vsel %vm1115, %v1357, %v2271
      %v2358 = vsel %vm1115, %v1362, %v2273
      %v2359 = vsel %vm1115, %v1365, %v2275
      %v2360 = vsel %vm1115, %v1370, %v2277
      %v2361 = vsel %vm1115, %v1373, %v2279
      %v2362 = vsel %vm1115, %v1378, %v2281
      %v2363 = vsel %vm1115, %v1381, %v2283
      %vm2364 = vcmask 130048
      %v2365 = vsel %vm2364, %v2356, %v2301
      %v2366 = vsel %vm2364, %v2357, %v2303
      %v2367 = vsel %vm2364, %v2358, %v2305
      %v2368 = vsel %vm2364, %v2359, %v2307
      %v2369 = vsel %vm2364, %v2360, %v2309
      %v2370 = vsel %vm2364, %v2361, %v2311
      %v2371 = vsel %vm2364, %v2362, %v2313
      %v2372 = vsel %vm2364, %v2363, %v2315
      %vm2373 = vcmask 195584
      %v2374 = vsel %vm2373, %v2365, %v2333
      %v2375 = vsel %vm2373, %v2366, %v2335
      %v2376 = vsel %vm2373, %v2367, %v2337
      %v2377 = vsel %vm2373, %v2368, %v2339
      %v2378 = vsel %vm2373, %v2369, %v2341
      %v2379 = vsel %vm2373, %v2370, %v2343
      %v2380 = vsel %vm2373, %v2371, %v2345
      %v2381 = vsel %vm2373, %v2372, %v2347
      %v2382 = vld [vmem:[%s769] sm:$0xff]
      %v2383 = vld [vmem:[%s769 + $0x8] sm:$0xff]
      %v2384 = vld [vmem:[%s769 + $0x10] sm:$0xff]
      %v2385 = vld [vmem:[%s769 + $0x18] sm:$0xff]
      %v2386 = vpack.c.bf16 %v2375, %v2374
      %v2387 = vpack.c.bf16 %v2377, %v2376
      %v2388 = vpack.c.bf16 %v2379, %v2378
      %v2389 = vpack.c.bf16 %v2381, %v2380
      %v2390 = vpack.c.bf16 %v2383, %v2382
      %v2391 = vpack.c.bf16 %v2385, %v2384
      %v2392 = vld [vmem:[%s772] sm:$0x1]
      %v2394 = vlaneseq
      %v2395 = vshrl.u32 %v2394, 7
      %v2396 = vsub.s32 0, %v2395
      %v2397 = vrot.slane %v2392, %v2396
      %v2400 = vsel %vm865, %v2386, 0
      %v2403 = vsel %vm865, %v2387, 0
      %v2406 = vsel %vm865, %v2388, 0
      %v2409 = vsel %vm865, %v2389, 0
      %2411 = vmatprep.subr.bf16.mxu0 0
      %2412 = vmatpush1.bf16.msra.mxu0 %v2390
      %2413 = vmatprep.subr.bf16.mxu0 0
      %2414 = vmatpush1.bf16.msra.mxu0 %v2391
      %2415 = vmatprep.subr.bf16.mxu0 0
      %2416 = vmatpush1.bf16.msra.mxu0 0
      %2417 = vmatprep.subr.bf16.mxu0 0
      %2418 = vmatpush1.bf16.msra.mxu0 0
      %2419 = vmatprep.subr.bf16.mxu0 0
      %2420 = vmatpush1.bf16.msra.mxu0 0
      %2421 = vmatprep.subr.bf16.mxu0 0
      %2422 = vmatpush1.bf16.msra.mxu0 0
      %2423 = vmatprep.subr.bf16.mxu0 0
      %2424 = vmatpush1.bf16.msra.mxu0 0
      %2425 = vmatprep.subr.bf16.mxu0 0
      %2426 = vmatpush1.bf16.msra.mxu0 0
      %2427 = vmatprep.subr.bf16.mxu0 0
      %2428 = vmatpush1.bf16.msra.mxu0 0
      %2429 = vmatprep.subr.bf16.mxu0 0
      %2430 = vmatpush1.bf16.msra.mxu0 0
      %2431 = vmatprep.subr.bf16.mxu0 0
      %2432 = vmatpush1.bf16.msra.mxu0 0
      %2433 = vmatprep.subr.bf16.mxu0 0
      %2434 = vmatpush1.bf16.msra.mxu0 0
      %2435 = vmatprep.subr.bf16.mxu0 0
      %2436 = vmatpush1.bf16.msra.mxu0 0
      %2437 = vmatprep.subr.bf16.mxu0 0
      %2438 = vmatpush1.bf16.msra.mxu0 0
      %2439 = vmatprep.subr.bf16.mxu0 0
      %2440 = vmatpush1.bf16.msra.mxu0 0
      %2441 = vmatprep.subr.bf16.mxu0 0
      %2442 = vmatpush1.bf16.msra.mxu0 0
      %2443 = vmatprep.mubr.bf16.mxu0 0
      %2444 = vmatmul.mubr.bf16.gmra.mrb[0].mxu0 %v2400
      %v2445 = vpop.f32.mrb[0].mxu0
      %v2446 = vadd.f32 %v2397, %v2445
      %v2447 = vpop.f32.mrb[0].mxu0
      %v2448 = vpop.f32.mrb[0].mxu0
      %v2449 = vadd.f32 %v2397, %v2448
      %v2450 = vpop.f32.mrb[0].mxu0
      %2451 = vmatprep.mubr.bf16.mxu0 0
      %2452 = vmatmul.mubr.bf16.gmra.mrb[0].mxu0 %v2403
      %v2453 = vpop.f32.mrb[0].mxu0
      %v2454 = vadd.f32 %v2397, %v2453
      %v2455 = vpop.f32.mrb[0].mxu0
      %v2456 = vpop.f32.mrb[0].mxu0
      %v2457 = vadd.f32 %v2397, %v2456
      %v2458 = vpop.f32.mrb[0].mxu0
      %2459 = vmatprep.mubr.bf16.mxu0 0
      %2460 = vmatmul.mubr.bf16.gmra.mrb[0].mxu0 %v2406
      %v2461 = vpop.f32.mrb[0].mxu0
      %v2462 = vadd.f32 %v2397, %v2461
      %v2463 = vpop.f32.mrb[0].mxu0
      %v2464 = vpop.f32.mrb[0].mxu0
      %v2465 = vadd.f32 %v2397, %v2464
      %v2466 = vpop.f32.mrb[0].mxu0
      %2467 = vmatprep.mubr.bf16.mxu0 0
      %2468 = vmatmul.mubr.bf16.gmra.mrb[0].mxu0 %v2409
      %v2469 = vpop.f32.mrb[0].mxu0
      %v2470 = vadd.f32 %v2397, %v2469
      %v2471 = vpop.f32.mrb[0].mxu0
      %v2472 = vpop.f32.mrb[0].mxu0
      %v2473 = vadd.f32 %v2397, %v2472
      %v2474 = vpop.f32.mrb[0].mxu0
      %2475 = vdwg.mxu0
      %v2476 = vadd.f32 %v832, %v2446
      %v2477 = vadd.f32 %v833, %v2449
      %v2478 = vadd.f32 %v834, %v2454
      %v2479 = vadd.f32 %v835, %v2457
      %v2480 = vadd.f32 %v836, %v2462
      %v2481 = vadd.f32 %v837, %v2465
      %v2482 = vadd.f32 %v838, %v2470
      %v2483 = vadd.f32 %v839, %v2473
      %v2484 = vld [vmem:[%s775] sm:$0x1]
      %v2485 = vld [vmem:[%s778] sm:$0x1]
      %v2486 = vsel %vm865, %v2476, 0.0
      %2487 = vadd.xlane.f32.xlu0 %v2486
      %v2488 = vpop.xlane.xlu0 %2487
      %v2489 = vsel %vm865, %v2477, 0.0
      %2490 = vadd.xlane.f32.xlu0 %v2489
      %v2491 = vpop.xlane.xlu0 %2490
      %v2492 = vsel %vm865, %v2478, 0.0
      %2493 = vadd.xlane.f32.xlu0 %v2492
      %v2494 = vpop.xlane.xlu0 %2493
      %v2495 = vsel %vm865, %v2479, 0.0
      %2496 = vadd.xlane.f32.xlu0 %v2495
      %v2497 = vpop.xlane.xlu0 %2496
      %v2498 = vsel %vm865, %v2480, 0.0
      %2499 = vadd.xlane.f32.xlu0 %v2498
      %v2500 = vpop.xlane.xlu0 %2499
      %v2501 = vsel %vm865, %v2481, 0.0
      %2502 = vadd.xlane.f32.xlu0 %v2501
      %v2503 = vpop.xlane.xlu0 %2502
      %v2504 = vsel %vm865, %v2482, 0.0
      %2505 = vadd.xlane.f32.xlu0 %v2504
      %v2506 = vpop.xlane.xlu0 %2505
      %vm2507 = vcmask 259072
      %v2508 = vsel %vm2507, %v2483, 0.0
      %2509 = vadd.xlane.f32.xlu0 %v2508
      %v2510 = vpop.xlane.xlu0 %2509
      %v2511 = vrcp.pop 32.0
      %v2512 = vmul.f32 %v2488, %v2511
      %v2513 = vmul.f32 %v2491, %v2511
      %v2514 = vmul.f32 %v2494, %v2511
      %v2515 = vmul.f32 %v2497, %v2511
      %v2516 = vmul.f32 %v2500, %v2511
      %v2517 = vmul.f32 %v2503, %v2511
      %v2518 = vmul.f32 %v2506, %v2511
      %v2519 = vmul.f32 %v2510, %v2511
      %v2520 = vsub.f32 %v2476, %v2512
      %v2521 = vsub.f32 %v2477, %v2513
      %v2522 = vsub.f32 %v2478, %v2514
      %v2523 = vsub.f32 %v2479, %v2515
      %v2524 = vsub.f32 %v2480, %v2516
      %v2525 = vsub.f32 %v2481, %v2517
      %v2526 = vsub.f32 %v2482, %v2518
      %v2527 = vsub.f32 %v2483, %v2519
      %v2528 = vmul.f32 %v2520, %v2520
      %v2529 = vmul.f32 %v2521, %v2521
      %v2530 = vmul.f32 %v2522, %v2522
      %v2531 = vmul.f32 %v2523, %v2523
      %v2532 = vmul.f32 %v2524, %v2524
      %v2533 = vmul.f32 %v2525, %v2525
      %v2534 = vmul.f32 %v2526, %v2526
      %v2535 = vmul.f32 %v2527, %v2527
      %v2536 = vsel %vm865, %v2528, 0.0
      %2537 = vadd.xlane.f32.xlu0 %v2536
      %v2538 = vpop.xlane.xlu0 %2537
      %v2539 = vsel %vm865, %v2529, 0.0
      %2540 = vadd.xlane.f32.xlu0 %v2539
      %v2541 = vpop.xlane.xlu0 %2540
      %v2542 = vsel %vm865, %v2530, 0.0
      %2543 = vadd.xlane.f32.xlu0 %v2542
      %v2544 = vpop.xlane.xlu0 %2543
      %v2545 = vsel %vm865, %v2531, 0.0
      %2546 = vadd.xlane.f32.xlu0 %v2545
      %v2547 = vpop.xlane.xlu0 %2546
      %v2548 = vsel %vm865, %v2532, 0.0
      %2549 = vadd.xlane.f32.xlu0 %v2548
      %v2550 = vpop.xlane.xlu0 %2549
      %v2551 = vsel %vm865, %v2533, 0.0
      %2552 = vadd.xlane.f32.xlu0 %v2551
      %v2553 = vpop.xlane.xlu0 %2552
      %v2554 = vsel %vm865, %v2534, 0.0
      %2555 = vadd.xlane.f32.xlu0 %v2554
      %v2556 = vpop.xlane.xlu0 %2555
      %v2557 = vsel %vm2507, %v2535, 0.0
      %2558 = vadd.xlane.f32.xlu0 %v2557
      %v2559 = vpop.xlane.xlu0 %2558
      %v2560 = vmul.f32 %v2538, %v2511
      %v2561 = vmul.f32 %v2541, %v2511
      %v2562 = vmul.f32 %v2544, %v2511
      %v2563 = vmul.f32 %v2547, %v2511
      %v2564 = vmul.f32 %v2550, %v2511
      %v2565 = vmul.f32 %v2553, %v2511
      %v2566 = vmul.f32 %v2556, %v2511
      %v2567 = vmul.f32 %v2559, %v2511
      %v2568 = vadd.f32 %v2560, 1e-05
      %v2569 = vadd.f32 %v2561, 1e-05
      %v2570 = vadd.f32 %v2562, 1e-05
      %v2571 = vadd.f32 %v2563, 1e-05
      %v2572 = vadd.f32 %v2564, 1e-05
      %v2573 = vadd.f32 %v2565, 1e-05
      %v2574 = vadd.f32 %v2566, 1e-05
      %v2575 = vadd.f32 %v2567, 1e-05
      %v2576 = vrsqrt.pop %v2568
      %v2577 = vrsqrt.pop %v2569
      %v2578 = vrsqrt.pop %v2570
      %v2579 = vrsqrt.pop %v2571
      %v2580 = vrsqrt.pop %v2572
      %v2581 = vrsqrt.pop %v2573
      %v2582 = vrsqrt.pop %v2574
      %v2583 = vrsqrt.pop %v2575
      %v2584 = vmul.f32 %v2520, %v2576
      %v2585 = vmul.f32 %v2521, %v2577
      %v2586 = vmul.f32 %v2522, %v2578
      %v2587 = vmul.f32 %v2523, %v2579
      %v2588 = vmul.f32 %v2524, %v2580
      %v2589 = vmul.f32 %v2525, %v2581
      %v2590 = vmul.f32 %v2526, %v2582
      %v2591 = vmul.f32 %v2527, %v2583
      %v2593 = vlaneseq
      %v2594 = vshrl.u32 %v2593, 7
      %v2595 = vsub.s32 0, %v2594
      %v2596 = vrot.slane %v2484, %v2595
      %v2598 = vmul.f32 %v2584, %v2596
      %v2599 = vmul.f32 %v2585, %v2596
      %v2600 = vmul.f32 %v2586, %v2596
      %v2601 = vmul.f32 %v2587, %v2596
      %v2602 = vmul.f32 %v2588, %v2596
      %v2603 = vmul.f32 %v2589, %v2596
      %v2604 = vmul.f32 %v2590, %v2596
      %v2605 = vmul.f32 %v2591, %v2596
      %v2607 = vlaneseq
      %v2608 = vshrl.u32 %v2607, 7
      %v2609 = vsub.s32 0, %v2608
      %v2610 = vrot.slane %v2485, %v2609
      %v2612 = vadd.f32 %v2598, %v2610
      %v2613 = vadd.f32 %v2599, %v2610
      %v2614 = vadd.f32 %v2600, %v2610
      %v2615 = vadd.f32 %v2601, %v2610
      %v2616 = vadd.f32 %v2602, %v2610
      %v2617 = vadd.f32 %v2603, %v2610
      %v2618 = vadd.f32 %v2604, %v2610
      %v2619 = vadd.f32 %v2605, %v2610
      %v2620 = vld [vmem:[%s783] sm:$0xff]
      %v2621 = vld [vmem:[%s783 + $0x8] sm:$0xff]
      %v2622 = vld [vmem:[%s783 + $0x10] sm:$0xff]
      %v2623 = vld [vmem:[%s783 + $0x18] sm:$0xff]
      %v2624 = vpack.c.bf16 %v2613, %v2612
      %v2625 = vpack.c.bf16 %v2615, %v2614
      %v2626 = vpack.c.bf16 %v2617, %v2616
      %v2627 = vpack.c.bf16 %v2619, %v2618
      %v2628 = vpack.c.bf16 %v2621, %v2620
      %v2629 = vpack.c.bf16 %v2623, %v2622
      %v2630 = vld [vmem:[%s786] sm:$0x1]
      %v2632 = vlaneseq
      %v2633 = vshrl.u32 %v2632, 7
      %v2634 = vsub.s32 0, %v2633
      %v2635 = vrot.slane %v2630, %v2634
      %v2638 = vsel %vm865, %v2624, 0
      %v2641 = vsel %vm865, %v2625, 0
      %v2644 = vsel %vm865, %v2626, 0
      %v2647 = vsel %vm865, %v2627, 0
      %2649 = vmatprep.subr.bf16.mxu0 0
      %2650 = vmatpush1.bf16.msra.mxu0 %v2628
      %2651 = vmatprep.subr.bf16.mxu0 0
      %2652 = vmatpush1.bf16.msra.mxu0 %v2629
      %2653 = vmatprep.subr.bf16.mxu0 0
      %2654 = vmatpush1.bf16.msra.mxu0 0
      %2655 = vmatprep.subr.bf16.mxu0 0
      %2656 = vmatpush1.bf16.msra.mxu0 0
      %2657 = vmatprep.subr.bf16.mxu0 0
      %2658 = vmatpush1.bf16.msra.mxu0 0
      %2659 = vmatprep.subr.bf16.mxu0 0
      %2660 = vmatpush1.bf16.msra.mxu0 0
      %2661 = vmatprep.subr.bf16.mxu0 0
      %2662 = vmatpush1.bf16.msra.mxu0 0
      %2663 = vmatprep.subr.bf16.mxu0 0
      %2664 = vmatpush1.bf16.msra.mxu0 0
      %2665 = vmatprep.subr.bf16.mxu0 0
      %2666 = vmatpush1.bf16.msra.mxu0 0
      %2667 = vmatprep.subr.bf16.mxu0 0
      %2668 = vmatpush1.bf16.msra.mxu0 0
      %2669 = vmatprep.subr.bf16.mxu0 0
      %2670 = vmatpush1.bf16.msra.mxu0 0
      %2671 = vmatprep.subr.bf16.mxu0 0
      %2672 = vmatpush1.bf16.msra.mxu0 0
      %2673 = vmatprep.subr.bf16.mxu0 0
      %2674 = vmatpush1.bf16.msra.mxu0 0
      %2675 = vmatprep.subr.bf16.mxu0 0
      %2676 = vmatpush1.bf16.msra.mxu0 0
      %2677 = vmatprep.subr.bf16.mxu0 0
      %2678 = vmatpush1.bf16.msra.mxu0 0
      %2679 = vmatprep.subr.bf16.mxu0 0
      %2680 = vmatpush1.bf16.msra.mxu0 0
      %2681 = vmatprep.mubr.bf16.mxu0 0
      %2682 = vmatmul.mubr.bf16.gmra.mrb[0].mxu0 %v2638
      %v2683 = vpop.f32.mrb[0].mxu0
      %v2684 = vadd.f32 %v2635, %v2683
      %v2685 = vpop.f32.mrb[0].mxu0
      %v2686 = vpop.f32.mrb[0].mxu0
      %v2687 = vadd.f32 %v2635, %v2686
      %v2688 = vpop.f32.mrb[0].mxu0
      %2689 = vmatprep.mubr.bf16.mxu0 0
      %2690 = vmatmul.mubr.bf16.gmra.mrb[0].mxu0 %v2641
      %v2691 = vpop.f32.mrb[0].mxu0
      %v2692 = vadd.f32 %v2635, %v2691
      %v2693 = vpop.f32.mrb[0].mxu0
      %v2694 = vpop.f32.mrb[0].mxu0
      %v2695 = vadd.f32 %v2635, %v2694
      %v2696 = vpop.f32.mrb[0].mxu0
      %2697 = vmatprep.mubr.bf16.mxu0 0
      %2698 = vmatmul.mubr.bf16.gmra.mrb[0].mxu0 %v2644
      %v2699 = vpop.f32.mrb[0].mxu0
      %v2700 = vadd.f32 %v2635, %v2699
      %v2701 = vpop.f32.mrb[0].mxu0
      %v2702 = vpop.f32.mrb[0].mxu0
      %v2703 = vadd.f32 %v2635, %v2702
      %v2704 = vpop.f32.mrb[0].mxu0
      %2705 = vmatprep.mubr.bf16.mxu0 0
      %2706 = vmatmul.mubr.bf16.gmra.mrb[0].mxu0 %v2647
      %v2707 = vpop.f32.mrb[0].mxu0
      %v2708 = vadd.f32 %v2635, %v2707
      %v2709 = vpop.f32.mrb[0].mxu0
      %v2710 = vpop.f32.mrb[0].mxu0
      %v2711 = vadd.f32 %v2635, %v2710
      %v2712 = vpop.f32.mrb[0].mxu0
      %2713 = vdwg.mxu0
      %v2714 = vmul.f32 %v2684, %v2684
      %v2715 = vmul.f32 %v2687, %v2687
      %v2716 = vmul.f32 %v2692, %v2692
      %v2717 = vmul.f32 %v2695, %v2695
      %v2718 = vmul.f32 %v2700, %v2700
      %v2719 = vmul.f32 %v2703, %v2703
      %v2720 = vmul.f32 %v2708, %v2708
      %v2721 = vmul.f32 %v2711, %v2711
      %v2722 = vmul.f32 %v2684, %v2714
      %v2723 = vmul.f32 %v2687, %v2715
      %v2724 = vmul.f32 %v2692, %v2716
      %v2725 = vmul.f32 %v2695, %v2717
      %v2726 = vmul.f32 %v2700, %v2718
      %v2727 = vmul.f32 %v2703, %v2719
      %v2728 = vmul.f32 %v2708, %v2720
      %v2729 = vmul.f32 %v2711, %v2721
      %v2730 = vmul.f32 %v2722, 0.044715
      %v2731 = vmul.f32 %v2723, 0.044715
      %v2732 = vmul.f32 %v2724, 0.044715
      %v2733 = vmul.f32 %v2725, 0.044715
      %v2734 = vmul.f32 %v2726, 0.044715
      %v2735 = vmul.f32 %v2727, 0.044715
      %v2736 = vmul.f32 %v2728, 0.044715
      %v2737 = vmul.f32 %v2729, 0.044715
      %v2738 = vadd.f32 %v2684, %v2730
      %v2739 = vadd.f32 %v2687, %v2731
      %v2740 = vadd.f32 %v2692, %v2732
      %v2741 = vadd.f32 %v2695, %v2733
      %v2742 = vadd.f32 %v2700, %v2734
      %v2743 = vadd.f32 %v2703, %v2735
      %v2744 = vadd.f32 %v2708, %v2736
      %v2745 = vadd.f32 %v2711, %v2737
      %v2746 = vmul.f32 %v2738, 0.7978846
      %v2747 = vmul.f32 %v2739, 0.7978846
      %v2748 = vmul.f32 %v2740, 0.7978846
      %v2749 = vmul.f32 %v2741, 0.7978846
      %v2750 = vmul.f32 %v2742, 0.7978846
      %v2751 = vmul.f32 %v2743, 0.7978846
      %v2752 = vmul.f32 %v2744, 0.7978846
      %v2753 = vmul.f32 %v2745, 0.7978846
      %v2754 = vtanh.pop %v2746
      %v2755 = vtanh.pop %v2747
      %v2756 = vtanh.pop %v2748
      %v2757 = vtanh.pop %v2749
      %v2758 = vtanh.pop %v2750
      %v2759 = vtanh.pop %v2751
      %v2760 = vtanh.pop %v2752
      %v2761 = vtanh.pop %v2753
      %v2762 = vadd.f32 %v2754, 1.0
      %v2763 = vadd.f32 %v2755, 1.0
      %v2764 = vadd.f32 %v2756, 1.0
      %v2765 = vadd.f32 %v2757, 1.0
      %v2766 = vadd.f32 %v2758, 1.0
      %v2767 = vadd.f32 %v2759, 1.0
      %v2768 = vadd.f32 %v2760, 1.0
      %v2769 = vadd.f32 %v2761, 1.0
      %v2770 = vmul.f32 %v2762, 0.5
      %v2771 = vmul.f32 %v2763, 0.5
      %v2772 = vmul.f32 %v2764, 0.5
      %v2773 = vmul.f32 %v2765, 0.5
      %v2774 = vmul.f32 %v2766, 0.5
      %v2775 = vmul.f32 %v2767, 0.5
      %v2776 = vmul.f32 %v2768, 0.5
      %v2777 = vmul.f32 %v2769, 0.5
      %v2778 = vmul.f32 %v2684, %v2770
      %v2779 = vmul.f32 %v2687, %v2771
      %v2780 = vmul.f32 %v2692, %v2772
      %v2781 = vmul.f32 %v2695, %v2773
      %v2782 = vmul.f32 %v2700, %v2774
      %v2783 = vmul.f32 %v2703, %v2775
      %v2784 = vmul.f32 %v2708, %v2776
      %v2785 = vmul.f32 %v2711, %v2777
      %v2786 = vld [vmem:[%s791] sm:$0xff]
      %v2787 = vld [vmem:[%s791 + $0x8] sm:$0xff]
      %v2788 = vld [vmem:[%s791 + $0x10] sm:$0xff]
      %v2789 = vld [vmem:[%s791 + $0x18] sm:$0xff]
      %v2790 = vld [vmem:[%s791 + $0x20] sm:$0xff]
      %v2791 = vld [vmem:[%s791 + $0x28] sm:$0xff]
      %v2792 = vld [vmem:[%s791 + $0x30] sm:$0xff]
      %v2793 = vld [vmem:[%s791 + $0x38] sm:$0xff]
      %v2794 = vpack.c.bf16 %v2779, %v2778
      %v2795 = vpack.c.bf16 %v2781, %v2780
      %v2796 = vpack.c.bf16 %v2783, %v2782
      %v2797 = vpack.c.bf16 %v2785, %v2784
      %v2798 = vpack.c.bf16 %v2787, %v2786
      %v2799 = vpack.c.bf16 %v2789, %v2788
      %v2800 = vpack.c.bf16 %v2791, %v2790
      %v2801 = vpack.c.bf16 %v2793, %v2792
      %vm2802 = vcmask 523264
      %v2804 = vsel %vm2802, %v2794, 0
      %v2807 = vsel %vm2802, %v2795, 0
      %v2810 = vsel %vm2802, %v2796, 0
      %v2813 = vsel %vm2802, %v2797, 0
      %2815 = vmatprep.subr.bf16.mxu0 0
      %2816 = vmatpush1.bf16.msra.mxu0 %v2798
      %2817 = vmatprep.subr.bf16.mxu0 0
      %2818 = vmatpush1.bf16.msra.mxu0 %v2799
      %2819 = vmatprep.subr.bf16.mxu0 0
      %2820 = vmatpush1.bf16.msra.mxu0 %v2800
      %2821 = vmatprep.subr.bf16.mxu0 0
      %2822 = vmatpush1.bf16.msra.mxu0 %v2801
      %2823 = vmatprep.subr.bf16.mxu0 0
      %2824 = vmatpush1.bf16.msra.mxu0 0
      %2825 = vmatprep.subr.bf16.mxu0 0
      %2826 = vmatpush1.bf16.msra.mxu0 0
      %2827 = vmatprep.subr.bf16.mxu0 0
      %2828 = vmatpush1.bf16.msra.mxu0 0
      %2829 = vmatprep.subr.bf16.mxu0 0
      %2830 = vmatpush1.bf16.msra.mxu0 0
      %2831 = vmatprep.subr.bf16.mxu0 0
      %2832 = vmatpush1.bf16.msra.mxu0 0
      %2833 = vmatprep.subr.bf16.mxu0 0
      %2834 = vmatpush1.bf16.msra.mxu0 0
      %2835 = vmatprep.subr.bf16.mxu0 0
      %2836 = vmatpush1.bf16.msra.mxu0 0
      %2837 = vmatprep.subr.bf16.mxu0 0
      %2838 = vmatpush1.bf16.msra.mxu0 0
      %2839 = vmatprep.subr.bf16.mxu0 0
      %2840 = vmatpush1.bf16.msra.mxu0 0
      %2841 = vmatprep.subr.bf16.mxu0 0
      %2842 = vmatpush1.bf16.msra.mxu0 0
      %2843 = vmatprep.subr.bf16.mxu0 0
      %2844 = vmatpush1.bf16.msra.mxu0 0
      %2845 = vmatprep.subr.bf16.mxu0 0
      %2846 = vmatpush1.bf16.msra.mxu0 0
      %2847 = vmatprep.mubr.bf16.mxu0 0
      %2848 = vmatmul.mubr.bf16.gmra.mrb[0].mxu0 %v2804
      %v2849 = vpop.f32.mrb[0].mxu0
      %v2850 = vadd.f32 0.0, %v2849
      %v2851 = vpop.f32.mrb[0].mxu0
      %v2852 = vpop.f32.mrb[0].mxu0
      %v2853 = vadd.f32 0.0, %v2852
      %v2854 = vpop.f32.mrb[0].mxu0
      %2855 = vmatprep.mubr.bf16.mxu0 0
      %2856 = vmatmul.mubr.bf16.gmra.mrb[0].mxu0 %v2807
      %v2857 = vpop.f32.mrb[0].mxu0
      %v2858 = vadd.f32 0.0, %v2857
      %v2859 = vpop.f32.mrb[0].mxu0
      %v2860 = vpop.f32.mrb[0].mxu0
      %v2861 = vadd.f32 0.0, %v2860
      %v2862 = vpop.f32.mrb[0].mxu0
      %2863 = vmatprep.mubr.bf16.mxu0 0
      %2864 = vmatmul.mubr.bf16.gmra.mrb[0].mxu0 %v2810
      %v2865 = vpop.f32.mrb[0].mxu0
      %v2866 = vadd.f32 0.0, %v2865
      %v2867 = vpop.f32.mrb[0].mxu0
      %v2868 = vpop.f32.mrb[0].mxu0
      %v2869 = vadd.f32 0.0, %v2868
      %v2870 = vpop.f32.mrb[0].mxu0
      %2871 = vmatprep.mubr.bf16.mxu0 0
      %2872 = vmatmul.mubr.bf16.gmra.mrb[0].mxu0 %v2813
      %v2873 = vpop.f32.mrb[0].mxu0
      %v2874 = vadd.f32 0.0, %v2873
      %v2875 = vpop.f32.mrb[0].mxu0
      %v2876 = vpop.f32.mrb[0].mxu0
      %v2877 = vadd.f32 0.0, %v2876
      %v2878 = vpop.f32.mrb[0].mxu0
      %2879 = vdwg.mxu0
      %v2880 = vadd.f32 %v2612, %v2850
      %v2881 = vadd.f32 %v2613, %v2853
      %v2882 = vadd.f32 %v2614, %v2858
      %v2883 = vadd.f32 %v2615, %v2861
      %v2884 = vadd.f32 %v2616, %v2866
      %v2885 = vadd.f32 %v2617, %v2869
      %v2886 = vadd.f32 %v2618, %v2874
      %v2887 = vadd.f32 %v2619, %v2877
      %v2888 = vld [vmem:[%s794] sm:$0x1]
      %v2890 = vlaneseq
      %v2891 = vshrl.u32 %v2890, 7
      %v2892 = vsub.s32 0, %v2891
      %v2893 = vrot.slane %v2888, %v2892
      %v2895 = vadd.f32 %v2880, %v2893
      %v2896 = vadd.f32 %v2881, %v2893
      %v2897 = vadd.f32 %v2882, %v2893
      %v2898 = vadd.f32 %v2883, %v2893
      %v2899 = vadd.f32 %v2884, %v2893
      %v2900 = vadd.f32 %v2885, %v2893
      %v2901 = vadd.f32 %v2886, %v2893
      %v2902 = vadd.f32 %v2887, %v2893
      %v2903 = vld [vmem:[%s797] sm:$0x1]
      %v2904 = vld [vmem:[%s800] sm:$0x1]
      %v2905 = vsel %vm865, %v2895, 0.0
      %2906 = vadd.xlane.f32.xlu0 %v2905
      %v2907 = vpop.xlane.xlu0 %2906
      %v2908 = vsel %vm865, %v2896, 0.0
      %2909 = vadd.xlane.f32.xlu0 %v2908
      %v2910 = vpop.xlane.xlu0 %2909
      %v2911 = vsel %vm865, %v2897, 0.0
      %2912 = vadd.xlane.f32.xlu0 %v2911
      %v2913 = vpop.xlane.xlu0 %2912
      %v2914 = vsel %vm865, %v2898, 0.0
      %2915 = vadd.xlane.f32.xlu0 %v2914
      %v2916 = vpop.xlane.xlu0 %2915
      %v2917 = vsel %vm865, %v2899, 0.0
      %2918 = vadd.xlane.f32.xlu0 %v2917
      %v2919 = vpop.xlane.xlu0 %2918
      %v2920 = vsel %vm865, %v2900, 0.0
      %2921 = vadd.xlane.f32.xlu0 %v2920
      %v2922 = vpop.xlane.xlu0 %2921
      %v2923 = vsel %vm865, %v2901, 0.0
      %2924 = vadd.xlane.f32.xlu0 %v2923
      %v2925 = vpop.xlane.xlu0 %2924
      %v2926 = vsel %vm2507, %v2902, 0.0
      %2927 = vadd.xlane.f32.xlu0 %v2926
      %v2928 = vpop.xlane.xlu0 %2927
      %v2929 = vmul.f32 %v2907, %v2511
      %v2930 = vmul.f32 %v2910, %v2511
      %v2931 = vmul.f32 %v2913, %v2511
      %v2932 = vmul.f32 %v2916, %v2511
      %v2933 = vmul.f32 %v2919, %v2511
      %v2934 = vmul.f32 %v2922, %v2511
      %v2935 = vmul.f32 %v2925, %v2511
      %v2936 = vmul.f32 %v2928, %v2511
      %v2937 = vsub.f32 %v2895, %v2929
      %v2938 = vsub.f32 %v2896, %v2930
      %v2939 = vsub.f32 %v2897, %v2931
      %v2940 = vsub.f32 %v2898, %v2932
      %v2941 = vsub.f32 %v2899, %v2933
      %v2942 = vsub.f32 %v2900, %v2934
      %v2943 = vsub.f32 %v2901, %v2935
      %v2944 = vsub.f32 %v2902, %v2936
      %v2945 = vmul.f32 %v2937, %v2937
      %v2946 = vmul.f32 %v2938, %v2938
      %v2947 = vmul.f32 %v2939, %v2939
      %v2948 = vmul.f32 %v2940, %v2940
      %v2949 = vmul.f32 %v2941, %v2941
      %v2950 = vmul.f32 %v2942, %v2942
      %v2951 = vmul.f32 %v2943, %v2943
      %v2952 = vmul.f32 %v2944, %v2944
      %v2953 = vsel %vm865, %v2945, 0.0
      %2954 = vadd.xlane.f32.xlu0 %v2953
      %v2955 = vpop.xlane.xlu0 %2954
      %v2956 = vsel %vm865, %v2946, 0.0
      %2957 = vadd.xlane.f32.xlu0 %v2956
      %v2958 = vpop.xlane.xlu0 %2957
      %v2959 = vsel %vm865, %v2947, 0.0
      %2960 = vadd.xlane.f32.xlu0 %v2959
      %v2961 = vpop.xlane.xlu0 %2960
      %v2962 = vsel %vm865, %v2948, 0.0
      %2963 = vadd.xlane.f32.xlu0 %v2962
      %v2964 = vpop.xlane.xlu0 %2963
      %v2965 = vsel %vm865, %v2949, 0.0
      %2966 = vadd.xlane.f32.xlu0 %v2965
      %v2967 = vpop.xlane.xlu0 %2966
      %v2968 = vsel %vm865, %v2950, 0.0
      %2969 = vadd.xlane.f32.xlu0 %v2968
      %v2970 = vpop.xlane.xlu0 %2969
      %v2971 = vsel %vm865, %v2951, 0.0
      %2972 = vadd.xlane.f32.xlu0 %v2971
      %v2973 = vpop.xlane.xlu0 %2972
      %v2974 = vsel %vm2507, %v2952, 0.0
      %2975 = vadd.xlane.f32.xlu0 %v2974
      %v2976 = vpop.xlane.xlu0 %2975
      %v2977 = vmul.f32 %v2955, %v2511
      %v2978 = vmul.f32 %v2958, %v2511
      %v2979 = vmul.f32 %v2961, %v2511
      %v2980 = vmul.f32 %v2964, %v2511
      %v2981 = vmul.f32 %v2967, %v2511
      %v2982 = vmul.f32 %v2970, %v2511
      %v2983 = vmul.f32 %v2973, %v2511
      %v2984 = vmul.f32 %v2976, %v2511
      %v2985 = vadd.f32 %v2977, 1e-05
      %v2986 = vadd.f32 %v2978, 1e-05
      %v2987 = vadd.f32 %v2979, 1e-05
      %v2988 = vadd.f32 %v2980, 1e-05
      %v2989 = vadd.f32 %v2981, 1e-05
      %v2990 = vadd.f32 %v2982, 1e-05
      %v2991 = vadd.f32 %v2983, 1e-05
      %v2992 = vadd.f32 %v2984, 1e-05
      %v2993 = vrsqrt.pop %v2985
      %v2994 = vrsqrt.pop %v2986
      %v2995 = vrsqrt.pop %v2987
      %v2996 = vrsqrt.pop %v2988
      %v2997 = vrsqrt.pop %v2989
      %v2998 = vrsqrt.pop %v2990
      %v2999 = vrsqrt.pop %v2991
      %v3000 = vrsqrt.pop %v2992
      %v3001 = vmul.f32 %v2937, %v2993
      %v3002 = vmul.f32 %v2938, %v2994
      %v3003 = vmul.f32 %v2939, %v2995
      %v3004 = vmul.f32 %v2940, %v2996
      %v3005 = vmul.f32 %v2941, %v2997
      %v3006 = vmul.f32 %v2942, %v2998
      %v3007 = vmul.f32 %v2943, %v2999
      %v3008 = vmul.f32 %v2944, %v3000
      %v3010 = vlaneseq
      %v3011 = vshrl.u32 %v3010, 7
      %v3012 = vsub.s32 0, %v3011
      %v3013 = vrot.slane %v2903, %v3012
      %v3015 = vmul.f32 %v3001, %v3013
      %v3016 = vmul.f32 %v3002, %v3013
      %v3017 = vmul.f32 %v3003, %v3013
      %v3018 = vmul.f32 %v3004, %v3013
      %v3019 = vmul.f32 %v3005, %v3013
      %v3020 = vmul.f32 %v3006, %v3013
      %v3021 = vmul.f32 %v3007, %v3013
      %v3022 = vmul.f32 %v3008, %v3013
      %v3024 = vlaneseq
      %v3025 = vshrl.u32 %v3024, 7
      %v3026 = vsub.s32 0, %v3025
      %v3027 = vrot.slane %v2904, %v3026
      %v3029 = vadd.f32 %v3015, %v3027
      %v3030 = vadd.f32 %v3016, %v3027
      %v3031 = vadd.f32 %v3017, %v3027
      %v3032 = vadd.f32 %v3018, %v3027
      %v3033 = vadd.f32 %v3019, %v3027
      %v3034 = vadd.f32 %v3020, %v3027
      %v3035 = vadd.f32 %v3021, %v3027
      %v3036 = vadd.f32 %v3022, %v3027
      %3037 = vst.msk [vmem:[#allocation2] sm:$0xff] %vm865, %v3029
      %3038 = vst.msk [vmem:[#allocation2 + $0x8] sm:$0xff] %vm865, %v3030
      %3039 = vst.msk [vmem:[#allocation2 + $0x10] sm:$0xff] %vm865, %v3031
      %3040 = vst.msk [vmem:[#allocation2 + $0x18] sm:$0xff] %vm865, %v3032
      %3041 = vst.msk [vmem:[#allocation2 + $0x20] sm:$0xff] %vm865, %v3033
      %3042 = vst.msk [vmem:[#allocation2 + $0x28] sm:$0xff] %vm865, %v3034
      %3043 = vst.msk [vmem:[#allocation2 + $0x30] sm:$0xff] %vm865, %v3035
      %3044 = vst.msk [vmem:[#allocation2 + $0x38] sm:$0x3f] %vm2507, %v3036
      %v3045 = vld [vmem:[#allocation3] sm:$0xff]
      %v3046 = vld [vmem:[#allocation3 + $0x8] sm:$0xff]
      %v3047 = vld [vmem:[#allocation3 + $0x10] sm:$0xff]
      %v3048 = vld [vmem:[#allocation3 + $0x18] sm:$0xff]
      %v3049 = vld [vmem:[#allocation3 + $0x20] sm:$0xff]
      %v3050 = vld [vmem:[#allocation3 + $0x28] sm:$0xff]
      %v3051 = vld [vmem:[#allocation3 + $0x30] sm:$0xff]
      %v3052 = vld [vmem:[#allocation3 + $0x38] sm:$0x3f]
      %v3053 = vadd.f32 %v3045, %v3029
      %v3054 = vadd.f32 %v3046, %v3030
      %v3055 = vadd.f32 %v3047, %v3031
      %v3056 = vadd.f32 %v3048, %v3032
      %v3057 = vadd.f32 %v3049, %v3033
      %v3058 = vadd.f32 %v3050, %v3034
      %v3059 = vadd.f32 %v3051, %v3035
      %v3060 = vadd.f32 %v3052, %v3036
      %3061 = vst.msk [vmem:[#allocation3] sm:$0xff] %vm865, %v3053
      %3062 = vst.msk [vmem:[#allocation3 + $0x8] sm:$0xff] %vm865, %v3054
      %3063 = vst.msk [vmem:[#allocation3 + $0x10] sm:$0xff] %vm865, %v3055
      %3064 = vst.msk [vmem:[#allocation3 + $0x18] sm:$0xff] %vm865, %v3056
      %3065 = vst.msk [vmem:[#allocation3 + $0x20] sm:$0xff] %vm865, %v3057
      %3066 = vst.msk [vmem:[#allocation3 + $0x28] sm:$0xff] %vm865, %v3058
      %3067 = vst.msk [vmem:[#allocation3 + $0x30] sm:$0xff] %vm865, %v3059
      %3068 = vst.msk [vmem:[#allocation3 + $0x38] sm:$0x3f] %vm2507, %v3060
      %p3069 = scmp.eq.s32.totalorder %s29, 1
      // Predicated region
      $region97: #{custom_wav2vec2_forward.7} parent=91 // pred_check
        %p3070 = pneg %p3069
      $region98: #{custom_wav2vec2_forward.7} parent=91 // pred_check_branch
        %3072 = sbr.rel (%p3070) target = $region100
      $region99: #{custom_wav2vec2_forward.7} parent=91 // pred_region
        %v3073 = vld [vmem:[#allocation3] sm:$0xff]
        %v3074 = vld [vmem:[#allocation3 + $0x8] sm:$0xff]
        %v3075 = vld [vmem:[#allocation3 + $0x10] sm:$0xff]
        %v3076 = vld [vmem:[#allocation3 + $0x18] sm:$0xff]
        %v3077 = vld [vmem:[#allocation3 + $0x20] sm:$0xff]
        %v3078 = vld [vmem:[#allocation3 + $0x28] sm:$0xff]
        %v3079 = vld [vmem:[#allocation3 + $0x30] sm:$0xff]
        %v3080 = vld [vmem:[#allocation3 + $0x38] sm:$0x3f]
        %v3081 = vmul.f32 %v3073, 0.33333334
        %v3082 = vmul.f32 %v3074, 0.33333334
        %v3083 = vmul.f32 %v3075, 0.33333334
        %v3084 = vmul.f32 %v3076, 0.33333334
        %v3085 = vmul.f32 %v3077, 0.33333334
        %v3086 = vmul.f32 %v3078, 0.33333334
        %v3087 = vmul.f32 %v3079, 0.33333334
        %v3088 = vmul.f32 %v3080, 0.33333334
        %3089 = vst.msk [vmem:[%s18] sm:$0xff] %vm865, %v3081
        %3090 = vst.msk [vmem:[%s18 + $0x8] sm:$0xff] %vm865, %v3082
        %3091 = vst.msk [vmem:[%s18 + $0x10] sm:$0xff] %vm865, %v3083
        %3092 = vst.msk [vmem:[%s18 + $0x18] sm:$0xff] %vm865, %v3084
        %3093 = vst.msk [vmem:[%s18 + $0x20] sm:$0xff] %vm865, %v3085
        %3094 = vst.msk [vmem:[%s18 + $0x28] sm:$0xff] %vm865, %v3086
        %3095 = vst.msk [vmem:[%s18 + $0x30] sm:$0xff] %vm865, %v3087
        %3096 = vst.msk [vmem:[%s18 + $0x38] sm:$0x3f] %vm2507, %v3088
      $region100: #{custom_wav2vec2_forward.7} parent=91 // pred_fallthru
        _
      // Predicated region
      $region101: #{custom_wav2vec2_forward.7} parent=91 // pred_check
        %p3097 = pneg %p500
      $region102: #{custom_wav2vec2_forward.7} parent=91 // pred_check_branch
        %3099 = sbr.rel (%p3097) target = $region104
      $region103: #{custom_wav2vec2_forward.7} parent=91 // pred_region
        _
      $region104: #{custom_wav2vec2_forward.7} parent=91 // pred_fallthru
        _
      // Predicated region
      $region105: #{custom_wav2vec2_forward.7} parent=91 // pred_check
        %p3100 = pneg %p500
      $region106: #{custom_wav2vec2_forward.7} parent=91 // pred_check_branch
        %3102 = sbr.rel (%p3100) target = $region108
      $region107: #{custom_wav2vec2_forward.7} parent=91 // pred_region
        _
      $region108: #{custom_wav2vec2_forward.7} parent=91 // pred_fallthru
        _
    $region92: #{custom_wav2vec2_forward.7} parent=5 // pred_fallthru
      _
    %p3103 = scmp.le.s32.totalorder 2, %s24
    // Predicated region
    $region109: #{custom_wav2vec2_forward.7} parent=5 // pred_check
      %p3104 = pneg %p3103
    $region110: #{custom_wav2vec2_forward.7} parent=5 // pred_check_branch
      %3106 = sbr.rel (%p3104) target = $region112
    $region111: #{custom_wav2vec2_forward.7} parent=5 // pred_region
      %s3107 = ssub.s32 %s24, 2
    $region112: #{custom_wav2vec2_forward.7} parent=5 // pred_fallthru
      _
  $region6: #{custom_wav2vec2_forward.7} parent=0 // loop_footer
    %s28 = sadd.s32 1, %s24
  $region7: #{custom_wav2vec2_forward.7} parent=0 // loop_footer_branch
    %23 = sbr.rel target = $region3
  $region8: #{custom_wav2vec2_forward.7} parent=0 // loop_exit
    _

</llo_original>
